<compile_context>
chip_gen: v6e
topology: v6e:2x2x1
jax: 0.10.0
libtpu: 0.0.40
codegen_flags: <defaults>
</compile_context>

<pallas_src>
import functools

import jax
import jax.numpy as jnp
from jax.experimental import pallas as pl
from jax.experimental.pallas import tpu as pltpu


def _round_up(x, m):
    return ((x + m - 1) // m) * m


# ---------------------------------------------------------------------------
# Kernel A:  out = a @ b + bias      a:[M,K]  b:[K,N]  bias:[1,N]  out: f32
# ---------------------------------------------------------------------------
def _matmul_bias_kernel(a_ref, b_ref, bias_ref, o_ref):
    k = pl.program_id(2)

    @pl.when(k == 0)
    def _():
        # Initialize the resident f32 output tile with the broadcast bias row;
        # accumulating directly into o_ref avoids a separate VMEM scratch + copy.
        o_ref[...] = jnp.broadcast_to(bias_ref[...], o_ref.shape)

    o_ref[...] += jnp.dot(a_ref[...], b_ref[...],
                          preferred_element_type=jnp.float32)


def _matmul_bias(a, b, bias):
    """f32 GEMM-with-bias with capped, (8,128)-aligned tiles and zero padding."""
    M, K = a.shape
    K2, N = b.shape
    assert K == K2 and bias.shape == (N,)

    a = a.astype(jnp.float32)
    b = b.astype(jnp.float32)
    bias2 = bias.reshape(1, N).astype(jnp.float32)

    # Capped tiles: double-buffered blocks stay well under the scoped VMEM budget
    # of every TPU generation (v7x 64 MiB physical included).
    tm = min(_round_up(M, 8), 256)
    tn = min(_round_up(N, 128), 512)
    tk = K if K <= 1024 else 512

    Mp, Np, Kp = _round_up(M, tm), _round_up(N, tn), _round_up(K, tk)
    # Zero-padding keeps the K-reduction exact; padded M/N rows/cols are sliced off.
    if (Mp, Kp) != (M, K):
        a = jnp.pad(a, ((0, Mp - M), (0, Kp - K)))
    if (Kp, Np) != (K, N):
        b = jnp.pad(b, ((0, Kp - K), (0, Np - N)))
    if Np != N:
        bias2 = jnp.pad(bias2, ((0, 0), (0, Np - N)))

    grid = (Mp // tm, Np // tn, Kp // tk)

    out = pl.pallas_call(
        _matmul_bias_kernel,
        out_shape=jax.ShapeDtypeStruct((Mp, Np), jnp.float32),
        grid_spec=pltpu.PrefetchScalarGridSpec(
            num_scalar_prefetch=0,
            grid=grid,
            in_specs=[
                pl.BlockSpec((tm, tk), lambda i, j, k: (i, k)),   # a tile
                pl.BlockSpec((tk, tn), lambda i, j, k: (k, j)),   # b tile (no transpose)
                pl.BlockSpec((1, tn), lambda i, j, k: (0, j)),    # bias tile
            ],
            out_specs=pl.BlockSpec((tm, tn), lambda i, j, k: (i, j)),
        ),
        compiler_params=pltpu.CompilerParams(
            dimension_semantics=("parallel", "parallel", "arbitrary"),
            vmem_limit_bytes=48 * 1024 * 1024,
        ),
        cost_estimate=pl.CostEstimate(
            flops=2 * M * N * K,
            transcendentals=0,
            bytes_accessed=4 * (M * K + K * N + M * N + N),
        ),
    )(a, b, bias2)

    if (Mp, Np) != (M, N):
        out = out[:M, :N]
    return out


# ---------------------------------------------------------------------------
# Kernel B:  out[s, q] = sum_p x[s, p] * W[s, p, q] + (z @ w2 + b2)[s, q]
# ---------------------------------------------------------------------------
def _hyper_apply_kernel(x_ref, w_ref, z_ref, w2_ref, b2_ref, o_ref):
    # x_ref : (ts, P, 1)   per-sample input vector (P on sublanes, matches w_ref)
    # w_ref : (ts, P, Q)   per-sample generated weight
    # z_ref : (ts, Z), w2_ref : (Z, Q), b2_ref : (1, Q)
    prod = x_ref[...] * w_ref[...]                    # lane-broadcast multiply (VPU)
    mat = jnp.sum(prod, axis=1)                       # sublane reduce -> (ts, Q)
    bias = jnp.dot(z_ref[...], w2_ref[...],
                   preferred_element_type=jnp.float32) + b2_ref[...]
    o_ref[...] = (mat + bias).astype(o_ref.dtype)


def _hyper_apply(x, w3, z, w2, b2):
    S, P, Q = w3.shape
    Z = z.shape[1]
    assert x.shape == (S, P) and w2.shape == (Z, Q) and b2.shape == (Q,)

    x3 = x.astype(jnp.float32).reshape(S, P, 1)
    w3 = w3.astype(jnp.float32)
    z = z.astype(jnp.float32)
    w2 = w2.astype(jnp.float32)
    b2r = b2.reshape(1, Q).astype(jnp.float32)

    # Sample-block size: cap so the double-buffered generated-weight stream fits VMEM.
    budget = 6 * 1024 * 1024
    max_ts = max(8, (budget // (2 * 4 * P * Q)) // 8 * 8)
    ts = min(_round_up(S, 8), 256, max_ts)
    Sp = _round_up(S, ts)
    if Sp != S:
        x3 = jnp.pad(x3, ((0, Sp - S), (0, 0), (0, 0)))
        w3 = jnp.pad(w3, ((0, Sp - S), (0, 0), (0, 0)))
        z = jnp.pad(z, ((0, Sp - S), (0, 0)))

    grid = (Sp // ts,)

    out = pl.pallas_call(
        _hyper_apply_kernel,
        out_shape=jax.ShapeDtypeStruct((Sp, Q), jnp.float32),
        grid_spec=pltpu.PrefetchScalarGridSpec(
            num_scalar_prefetch=0,
            grid=grid,
            in_specs=[
                pl.BlockSpec((ts, P, 1), lambda i: (i, 0, 0)),   # x (per-sample vector)
                pl.BlockSpec((ts, P, Q), lambda i: (i, 0, 0)),   # generated weight
                pl.BlockSpec((ts, Z), lambda i: (i, 0)),         # z block
                pl.BlockSpec((Z, Q), lambda i: (0, 0)),          # w2 (whole)
                pl.BlockSpec((1, Q), lambda i: (0, 0)),          # b2
            ],
            out_specs=pl.BlockSpec((ts, Q), lambda i: (i, 0)),
        ),
        compiler_params=pltpu.CompilerParams(
            dimension_semantics=("parallel",),
            vmem_limit_bytes=48 * 1024 * 1024,
        ),
        cost_estimate=pl.CostEstimate(
            flops=2 * S * P * Q + 2 * S * Z * Q,
            transcendentals=0,
            bytes_accessed=4 * (S * P + S * P * Q + S * Z + Z * Q + Q + S * Q),
        ),
    )(x3, w3, z, w2, b2r)

    if Sp != S:
        out = out[:S]
    return out


# ---------------------------------------------------------------------------
# Module-level forward + parameter init
# ---------------------------------------------------------------------------
def init_hyper_network_fc_params(key, in_dimension, units, trigger_sequence_len=10):
    """Mimics HyperNetwork_FC.__init__: per-layer (w1, b1, w2, b2), fmod(randn, 2) init."""
    units_all = [in_dimension] + list(units)
    z_dim = in_dimension * trigger_sequence_len
    params = []
    for i in range(1, len(units_all)):
        input_size = units_all[i - 1] * 2 if i == 1 else units_all[i - 1]
        output_size = units_all[i]
        key, k1, k2, k3, k4 = jax.random.split(key, 5)
        w1 = jnp.fmod(jax.random.normal(k1, (z_dim, input_size * output_size),
                                        jnp.float32), 2.0)
        b1 = jnp.fmod(jax.random.normal(k2, (input_size * output_size,),
                                        jnp.float32), 2.0)
        w2 = jnp.fmod(jax.random.normal(k3, (z_dim, output_size), jnp.float32), 2.0)
        b2 = jnp.fmod(jax.random.normal(k4, (output_size,), jnp.float32), 2.0)
        params.append((w1, b1, w2, b2))
    return tuple(params)


@functools.partial(jax.jit, static_argnames=("units", "sample_num"))
def hyper_network_fc_forward(x, z, params, *, units, sample_num=32):
    """Pallas forward for HyperNetwork_FC.

    x: (sample_num, in_dimension * 2); z: reshapeable to (sample_num, in_dim * trigger_len)
    units: the module's self.units, i.e. (in_dimension, *constructor_units)
    """
    # TODO(synk): activation_fns are instantiated in __init__ but never applied in the
    # reference forward(), so they are intentionally omitted here.
    # TODO(synk): only the batch=True path (per-sample generated weights) is implemented.
    z = z.reshape(sample_num, -1).astype(jnp.float32)
    x = x.astype(jnp.float32)
    for i in range(1, len(units)):
        idx = i - 1
        input_size = units[i - 1] * 2 if i == 1 else units[i - 1]
        output_size = units[i]
        w1, b1, w2, b2 = params[idx]
        gen_w = _matmul_bias(z, w1, b1)                               # (S, P*Q)
        gen_w = gen_w.reshape(sample_num, input_size, output_size)    # (S, P, Q)
        x = _hyper_apply(x, gen_w, z, w2, b2)                         # (S, Q)
    return x


def hyper_network_fc_reference(x, z, params, units, sample_num=32):
    """Plain-JAX reference mirroring the PyTorch forward."""
    z = z.reshape(sample_num, -1)
    for i in range(1, len(units)):
        idx = i - 1
        input_size = units[i - 1] * 2 if i == 1 else units[i - 1]
        output_size = units[i]
        w1, b1, w2, b2 = params[idx]
        weight = (z @ w1 + b1).reshape(sample_num, input_size, output_size)
        bias = z @ w2 + b2
        x = jnp.einsum("sp,spq->sq", x, weight) + bias
    return x


if __name__ == "__main__":
    key = jax.random.PRNGKey(0)
    k_x, k_z, k_p = jax.random.split(key, 3)

    in_dimension = 16
    units = (32, 16)              # hidden sizes passed to the constructor
    trigger_sequence_len = 10
    sample_num = 32

    units_all = (in_dimension,) + units              # == module's self.units
    x = jax.random.normal(k_x, (sample_num, in_dimension * 2), jnp.float32)
    z = jax.random.normal(k_z, (sample_num, trigger_sequence_len, in_dimension),
                          jnp.float32)
    params = init_hyper_network_fc_params(k_p, in_dimension, units,
                                          trigger_sequence_len)

    y = hyper_network_fc_forward(x, z, params, units=units_all,
                                 sample_num=sample_num)
    y = jax.block_until_ready(y)

    y_ref = hyper_network_fc_reference(x, z, params, units_all, sample_num)
    assert y.shape == (sample_num, units_all[-1])
    err = jnp.max(jnp.abs(y - y_ref)) / (jnp.max(jnp.abs(y_ref)) + 1e-6)
    assert float(err) < 1e-4, f"max relative error {float(err)}"

    print("KERNEL_OK")
</pallas_src>

<mosaic_0001>
module attributes {stable_mosaic.version = 11 : i64} {
  func.func @_matmul_bias_kernel(%arg0: i32, %arg1: i32, %arg2: i32, %arg3: memref<32x160xf32, #tpu.memory_space<vmem>>, %arg4: memref<160x512xf32, #tpu.memory_space<vmem>>, %arg5: memref<1x512xf32, #tpu.memory_space<vmem>>, %arg6: memref<32x512xf32, #tpu.memory_space<vmem>>) attributes {dimension_semantics = [#tpu.dimension_semantics<parallel>, #tpu.dimension_semantics<parallel>, #tpu.dimension_semantics<arbitrary>], iteration_bounds = array<i64: 1, 2, 1>, scalar_prefetch = 0 : i64, scratch_operands = 0 : i64, tpu.core_type = #tpu.core_type<tc>, window_params = [{transform_indices = @transform_0, window_bounds = array<i64: 32, 160>}, {transform_indices = @transform_1, window_bounds = array<i64: 160, 512>}, {transform_indices = @transform_2, window_bounds = array<i64: 1, 512>}, {transform_indices = @transform_3, window_bounds = array<i64: 32, 512>}]} {
    %c0_i32 = arith.constant 0 : i32
    %0 = arith.cmpi eq, %arg2, %c0_i32 : i32
    %1 = arith.extui %0 : i1 to i32
    %c0_i32_0 = arith.constant 0 : i32
    %2 = arith.cmpi ne, %1, %c0_i32_0 : i32
    scf.if %2 {
      %c0_8 = arith.constant 0 : index
      %c0_9 = arith.constant 0 : index
      %9 = vector.load %arg5[%c0_8, %c0_9] : memref<1x512xf32, #tpu.memory_space<vmem>>, vector<1x512xf32>
      %10 = vector.shape_cast %9 : vector<1x512xf32> to vector<1x512xf32>
      %11 = vector.broadcast %10 : vector<1x512xf32> to vector<32x512xf32>
      %c0_10 = arith.constant 0 : index
      %c0_11 = arith.constant 0 : index
      %12 = vector.load %arg6[%c0_10, %c0_11] : memref<32x512xf32, #tpu.memory_space<vmem>>, vector<32x512xf32>
      tpu.vector_store %arg6[%c0_10, %c0_11], %11 {strides = array<i32>} : memref<32x512xf32, #tpu.memory_space<vmem>>, vector<32x512xf32>,
    } else {
    }
    %c0 = arith.constant 0 : index
    %c0_1 = arith.constant 0 : index
    %3 = vector.load %arg6[%c0, %c0_1] : memref<32x512xf32, #tpu.memory_space<vmem>>, vector<32x512xf32>
    %c0_2 = arith.constant 0 : index
    %c0_3 = arith.constant 0 : index
    %4 = vector.load %arg3[%c0_2, %c0_3] : memref<32x160xf32, #tpu.memory_space<vmem>>, vector<32x160xf32>
    %c0_4 = arith.constant 0 : index
    %c0_5 = arith.constant 0 : index
    %5 = vector.load %arg4[%c0_4, %c0_5] : memref<160x512xf32, #tpu.memory_space<vmem>>, vector<160x512xf32>
    %cst = arith.constant dense<0.000000e+00> : vector<32x512xf32>
    %6 = tpu.matmul %4, %5, %cst {dimension_numbers = #tpu.dot_dimension_numbers<[1], [0], [0], [1], [0, 0, 1, 1], [], []>} : vector<32x160xf32>, vector<160x512xf32>, vector<32x512xf32> -> vector<32x512xf32>
    %7 = arith.addf %3, %6 : vector<32x512xf32>
    %c0_6 = arith.constant 0 : index
    %c0_7 = arith.constant 0 : index
    %8 = vector.load %arg6[%c0_6, %c0_7] : memref<32x512xf32, #tpu.memory_space<vmem>>, vector<32x512xf32>
    tpu.vector_store %arg6[%c0_6, %c0_7], %7 {strides = array<i32>} : memref<32x512xf32, #tpu.memory_space<vmem>>, vector<32x512xf32>,
    return
  }
  func.func @transform_0(%arg0: i32, %arg1: i32, %arg2: i32) -> (i32, i32) {
    %c0_i32 = arith.constant 0 : i32
    return %arg0, %arg2 : i32, i32
  }
  func.func @transform_1(%arg0: i32, %arg1: i32, %arg2: i32) -> (i32, i32) {
    %c0_i32 = arith.constant 0 : i32
    return %arg2, %arg1 : i32, i32
  }
  func.func @transform_2(%arg0: i32, %arg1: i32, %arg2: i32) -> (i32, i32) {
    %c0_i32 = arith.constant 0 : i32
    %c0_i32_0 = arith.constant 0 : i32
    return %c0_i32, %arg1 : i32, i32
  }
  func.func @transform_3(%arg0: i32, %arg1: i32, %arg2: i32) -> (i32, i32) {
    %c0_i32 = arith.constant 0 : i32
    return %arg0, %arg1 : i32, i32
  }
}

module attributes {stable_mosaic.version = 11 : i64} {
  func.func @_matmul_bias_kernel(%arg0: i32, %arg1: i32, %arg2: i32, %arg3: memref<32x160xf32, #tpu.memory_space<vmem>>, %arg4: memref<160x512xf32, #tpu.memory_space<vmem>>, %arg5: memref<1x512xf32, #tpu.memory_space<vmem>>, %arg6: memref<32x512xf32, #tpu.memory_space<vmem>>) attributes {dimension_semantics = [#tpu.dimension_semantics<parallel>, #tpu.dimension_semantics<parallel>, #tpu.dimension_semantics<arbitrary>], iteration_bounds = array<i64: 1, 1, 1>, scalar_prefetch = 0 : i64, scratch_operands = 0 : i64, tpu.core_type = #tpu.core_type<tc>, window_params = [{transform_indices = @transform_0, window_bounds = array<i64: 32, 160>}, {transform_indices = @transform_1, window_bounds = array<i64: 160, 512>}, {transform_indices = @transform_2, window_bounds = array<i64: 1, 512>}, {transform_indices = @transform_3, window_bounds = array<i64: 32, 512>}]} {
    %c0_i32 = arith.constant 0 : i32
    %0 = arith.cmpi eq, %arg2, %c0_i32 : i32
    %1 = arith.extui %0 : i1 to i32
    %c0_i32_0 = arith.constant 0 : i32
    %2 = arith.cmpi ne, %1, %c0_i32_0 : i32
    scf.if %2 {
      %c0_8 = arith.constant 0 : index
      %c0_9 = arith.constant 0 : index
      %9 = vector.load %arg5[%c0_8, %c0_9] : memref<1x512xf32, #tpu.memory_space<vmem>>, vector<1x512xf32>
      %10 = vector.shape_cast %9 : vector<1x512xf32> to vector<1x512xf32>
      %11 = vector.broadcast %10 : vector<1x512xf32> to vector<32x512xf32>
      %c0_10 = arith.constant 0 : index
      %c0_11 = arith.constant 0 : index
      %12 = vector.load %arg6[%c0_10, %c0_11] : memref<32x512xf32, #tpu.memory_space<vmem>>, vector<32x512xf32>
      tpu.vector_store %arg6[%c0_10, %c0_11], %11 {strides = array<i32>} : memref<32x512xf32, #tpu.memory_space<vmem>>, vector<32x512xf32>,
    } else {
    }
    %c0 = arith.constant 0 : index
    %c0_1 = arith.constant 0 : index
    %3 = vector.load %arg6[%c0, %c0_1] : memref<32x512xf32, #tpu.memory_space<vmem>>, vector<32x512xf32>
    %c0_2 = arith.constant 0 : index
    %c0_3 = arith.constant 0 : index
    %4 = vector.load %arg3[%c0_2, %c0_3] : memref<32x160xf32, #tpu.memory_space<vmem>>, vector<32x160xf32>
    %c0_4 = arith.constant 0 : index
    %c0_5 = arith.constant 0 : index
    %5 = vector.load %arg4[%c0_4, %c0_5] : memref<160x512xf32, #tpu.memory_space<vmem>>, vector<160x512xf32>
    %cst = arith.constant dense<0.000000e+00> : vector<32x512xf32>
    %6 = tpu.matmul %4, %5, %cst {dimension_numbers = #tpu.dot_dimension_numbers<[1], [0], [0], [1], [0, 0, 1, 1], [], []>} : vector<32x160xf32>, vector<160x512xf32>, vector<32x512xf32> -> vector<32x512xf32>
    %7 = arith.addf %3, %6 : vector<32x512xf32>
    %c0_6 = arith.constant 0 : index
    %c0_7 = arith.constant 0 : index
    %8 = vector.load %arg6[%c0_6, %c0_7] : memref<32x512xf32, #tpu.memory_space<vmem>>, vector<32x512xf32>
    tpu.vector_store %arg6[%c0_6, %c0_7], %7 {strides = array<i32>} : memref<32x512xf32, #tpu.memory_space<vmem>>, vector<32x512xf32>,
    return
  }
  func.func @transform_0(%arg0: i32, %arg1: i32, %arg2: i32) -> (i32, i32) {
    %c0_i32 = arith.constant 0 : i32
    return %arg0, %arg2 : i32, i32
  }
  func.func @transform_1(%arg0: i32, %arg1: i32, %arg2: i32) -> (i32, i32) {
    %c0_i32 = arith.constant 0 : i32
    return %arg2, %arg1 : i32, i32
  }
  func.func @transform_2(%arg0: i32, %arg1: i32, %arg2: i32) -> (i32, i32) {
    %c0_i32 = arith.constant 0 : i32
    %c0_i32_0 = arith.constant 0 : i32
    return %c0_i32, %arg1 : i32, i32
  }
  func.func @transform_3(%arg0: i32, %arg1: i32, %arg2: i32) -> (i32, i32) {
    %c0_i32 = arith.constant 0 : i32
    return %arg0, %arg1 : i32, i32
  }
}

module attributes {stable_mosaic.version = 11 : i64} {
  func.func @_hyper_apply_kernel(%arg0: i32, %arg1: memref<32x32x1xf32, #tpu.memory_space<vmem>>, %arg2: memref<32x32x32xf32, #tpu.memory_space<vmem>>, %arg3: memref<32x160xf32, #tpu.memory_space<vmem>>, %arg4: memref<160x32xf32, #tpu.memory_space<vmem>>, %arg5: memref<1x32xf32, #tpu.memory_space<vmem>>, %arg6: memref<32x32xf32, #tpu.memory_space<vmem>>) attributes {dimension_semantics = [#tpu.dimension_semantics<parallel>], iteration_bounds = array<i64: 1>, scalar_prefetch = 0 : i64, scratch_operands = 0 : i64, tpu.core_type = #tpu.core_type<tc>, window_params = [{transform_indices = @transform_0, window_bounds = array<i64: 32, 32, 1>}, {transform_indices = @transform_1, window_bounds = array<i64: 32, 32, 32>}, {transform_indices = @transform_2, window_bounds = array<i64: 32, 160>}, {pipeline_mode = #tpu.pipeline_mode<synchronous>, transform_indices = @transform_3, window_bounds = array<i64: 160, 32>}, {pipeline_mode = #tpu.pipeline_mode<synchronous>, transform_indices = @transform_4, window_bounds = array<i64: 1, 32>}, {transform_indices = @transform_5, window_bounds = array<i64: 32, 32>}]} {
    %c0 = arith.constant 0 : index
    %c0_0 = arith.constant 0 : index
    %c0_1 = arith.constant 0 : index
    %0 = vector.load %arg1[%c0, %c0_0, %c0_1] : memref<32x32x1xf32, #tpu.memory_space<vmem>>, vector<32x32x1xf32>
    %c0_2 = arith.constant 0 : index
    %c0_3 = arith.constant 0 : index
    %c0_4 = arith.constant 0 : index
    %1 = vector.load %arg2[%c0_2, %c0_3, %c0_4] : memref<32x32x32xf32, #tpu.memory_space<vmem>>, vector<32x32x32xf32>
    %2 = vector.broadcast %0 : vector<32x32x1xf32> to vector<32x32x32xf32>
    %3 = arith.mulf %2, %1 : vector<32x32x32xf32>
    %cst = arith.constant dense<0.000000e+00> : vector<32x32xf32>
    %4 = vector.multi_reduction <add>, %3, %cst [1] : vector<32x32x32xf32> to vector<32x32xf32>
    %c0_5 = arith.constant 0 : index
    %c0_6 = arith.constant 0 : index
    %5 = vector.load %arg3[%c0_5, %c0_6] : memref<32x160xf32, #tpu.memory_space<vmem>>, vector<32x160xf32>
    %c0_7 = arith.constant 0 : index
    %c0_8 = arith.constant 0 : index
    %6 = vector.load %arg4[%c0_7, %c0_8] : memref<160x32xf32, #tpu.memory_space<vmem>>, vector<160x32xf32>
    %cst_9 = arith.constant dense<0.000000e+00> : vector<32x32xf32>
    %7 = tpu.matmul %5, %6, %cst_9 {dimension_numbers = #tpu.dot_dimension_numbers<[1], [0], [0], [1], [0, 0, 1, 1], [], []>} : vector<32x160xf32>, vector<160x32xf32>, vector<32x32xf32> -> vector<32x32xf32>
    %c0_10 = arith.constant 0 : index
    %c0_11 = arith.constant 0 : index
    %8 = vector.load %arg5[%c0_10, %c0_11] : memref<1x32xf32, #tpu.memory_space<vmem>>, vector<1x32xf32>
    %9 = vector.broadcast %8 : vector<1x32xf32> to vector<32x32xf32>
    %10 = arith.addf %7, %9 : vector<32x32xf32>
    %11 = arith.addf %4, %10 : vector<32x32xf32>
    %c0_12 = arith.constant 0 : index
    %c0_13 = arith.constant 0 : index
    %12 = vector.load %arg6[%c0_12, %c0_13] : memref<32x32xf32, #tpu.memory_space<vmem>>, vector<32x32xf32>
    tpu.vector_store %arg6[%c0_12, %c0_13], %11 {strides = array<i32>} : memref<32x32xf32, #tpu.memory_space<vmem>>, vector<32x32xf32>,
    return
  }
  func.func @transform_0(%arg0: i32) -> (i32, i32, i32) {
    %c0_i32 = arith.constant 0 : i32
    %c0_i32_0 = arith.constant 0 : i32
    %c0_i32_1 = arith.constant 0 : i32
    return %arg0, %c0_i32, %c0_i32_0 : i32, i32, i32
  }
  func.func @transform_1(%arg0: i32) -> (i32, i32, i32) {
    %c0_i32 = arith.constant 0 : i32
    %c0_i32_0 = arith.constant 0 : i32
    %c0_i32_1 = arith.constant 0 : i32
    return %arg0, %c0_i32, %c0_i32_0 : i32, i32, i32
  }
  func.func @transform_2(%arg0: i32) -> (i32, i32) {
    %c0_i32 = arith.constant 0 : i32
    %c0_i32_0 = arith.constant 0 : i32
    return %arg0, %c0_i32 : i32, i32
  }
  func.func @transform_3(%arg0: i32) -> (i32, i32) {
    %c0_i32 = arith.constant 0 : i32
    %c0_i32_0 = arith.constant 0 : i32
    %c0_i32_1 = arith.constant 0 : i32
    return %c0_i32, %c0_i32_0 : i32, i32
  }
  func.func @transform_4(%arg0: i32) -> (i32, i32) {
    %c0_i32 = arith.constant 0 : i32
    %c0_i32_0 = arith.constant 0 : i32
    %c0_i32_1 = arith.constant 0 : i32
    return %c0_i32, %c0_i32_0 : i32, i32
  }
  func.func @transform_5(%arg0: i32) -> (i32, i32) {
    %c0_i32 = arith.constant 0 : i32
    %c0_i32_0 = arith.constant 0 : i32
    return %arg0, %c0_i32 : i32, i32
  }
}

module attributes {stable_mosaic.version = 11 : i64} {
  func.func @_hyper_apply_kernel(%arg0: i32, %arg1: memref<32x32x1xf32, #tpu.memory_space<vmem>>, %arg2: memref<32x32x16xf32, #tpu.memory_space<vmem>>, %arg3: memref<32x160xf32, #tpu.memory_space<vmem>>, %arg4: memref<160x16xf32, #tpu.memory_space<vmem>>, %arg5: memref<1x16xf32, #tpu.memory_space<vmem>>, %arg6: memref<32x16xf32, #tpu.memory_space<vmem>>) attributes {dimension_semantics = [#tpu.dimension_semantics<parallel>], iteration_bounds = array<i64: 1>, scalar_prefetch = 0 : i64, scratch_operands = 0 : i64, tpu.core_type = #tpu.core_type<tc>, window_params = [{transform_indices = @transform_0, window_bounds = array<i64: 32, 32, 1>}, {transform_indices = @transform_1, window_bounds = array<i64: 32, 32, 16>}, {transform_indices = @transform_2, window_bounds = array<i64: 32, 160>}, {pipeline_mode = #tpu.pipeline_mode<synchronous>, transform_indices = @transform_3, window_bounds = array<i64: 160, 16>}, {pipeline_mode = #tpu.pipeline_mode<synchronous>, transform_indices = @transform_4, window_bounds = array<i64: 1, 16>}, {transform_indices = @transform_5, window_bounds = array<i64: 32, 16>}]} {
    %c0 = arith.constant 0 : index
    %c0_0 = arith.constant 0 : index
    %c0_1 = arith.constant 0 : index
    %0 = vector.load %arg1[%c0, %c0_0, %c0_1] : memref<32x32x1xf32, #tpu.memory_space<vmem>>, vector<32x32x1xf32>
    %c0_2 = arith.constant 0 : index
    %c0_3 = arith.constant 0 : index
    %c0_4 = arith.constant 0 : index
    %1 = vector.load %arg2[%c0_2, %c0_3, %c0_4] : memref<32x32x16xf32, #tpu.memory_space<vmem>>, vector<32x32x16xf32>
    %2 = vector.broadcast %0 : vector<32x32x1xf32> to vector<32x32x16xf32>
    %3 = arith.mulf %2, %1 : vector<32x32x16xf32>
    %cst = arith.constant dense<0.000000e+00> : vector<32x16xf32>
    %4 = vector.multi_reduction <add>, %3, %cst [1] : vector<32x32x16xf32> to vector<32x16xf32>
    %c0_5 = arith.constant 0 : index
    %c0_6 = arith.constant 0 : index
    %5 = vector.load %arg3[%c0_5, %c0_6] : memref<32x160xf32, #tpu.memory_space<vmem>>, vector<32x160xf32>
    %c0_7 = arith.constant 0 : index
    %c0_8 = arith.constant 0 : index
    %6 = vector.load %arg4[%c0_7, %c0_8] : memref<160x16xf32, #tpu.memory_space<vmem>>, vector<160x16xf32>
    %cst_9 = arith.constant dense<0.000000e+00> : vector<32x16xf32>
    %7 = tpu.matmul %5, %6, %cst_9 {dimension_numbers = #tpu.dot_dimension_numbers<[1], [0], [0], [1], [0, 0, 1, 1], [], []>} : vector<32x160xf32>, vector<160x16xf32>, vector<32x16xf32> -> vector<32x16xf32>
    %c0_10 = arith.constant 0 : index
    %c0_11 = arith.constant 0 : index
    %8 = vector.load %arg5[%c0_10, %c0_11] : memref<1x16xf32, #tpu.memory_space<vmem>>, vector<1x16xf32>
    %9 = vector.broadcast %8 : vector<1x16xf32> to vector<32x16xf32>
    %10 = arith.addf %7, %9 : vector<32x16xf32>
    %11 = arith.addf %4, %10 : vector<32x16xf32>
    %c0_12 = arith.constant 0 : index
    %c0_13 = arith.constant 0 : index
    %12 = vector.load %arg6[%c0_12, %c0_13] : memref<32x16xf32, #tpu.memory_space<vmem>>, vector<32x16xf32>
    tpu.vector_store %arg6[%c0_12, %c0_13], %11 {strides = array<i32>} : memref<32x16xf32, #tpu.memory_space<vmem>>, vector<32x16xf32>,
    return
  }
  func.func @transform_0(%arg0: i32) -> (i32, i32, i32) {
    %c0_i32 = arith.constant 0 : i32
    %c0_i32_0 = arith.constant 0 : i32
    %c0_i32_1 = arith.constant 0 : i32
    return %arg0, %c0_i32, %c0_i32_0 : i32, i32, i32
  }
  func.func @transform_1(%arg0: i32) -> (i32, i32, i32) {
    %c0_i32 = arith.constant 0 : i32
    %c0_i32_0 = arith.constant 0 : i32
    %c0_i32_1 = arith.constant 0 : i32
    return %arg0, %c0_i32, %c0_i32_0 : i32, i32, i32
  }
  func.func @transform_2(%arg0: i32) -> (i32, i32) {
    %c0_i32 = arith.constant 0 : i32
    %c0_i32_0 = arith.constant 0 : i32
    return %arg0, %c0_i32 : i32, i32
  }
  func.func @transform_3(%arg0: i32) -> (i32, i32) {
    %c0_i32 = arith.constant 0 : i32
    %c0_i32_0 = arith.constant 0 : i32
    %c0_i32_1 = arith.constant 0 : i32
    return %c0_i32, %c0_i32_0 : i32, i32
  }
  func.func @transform_4(%arg0: i32) -> (i32, i32) {
    %c0_i32 = arith.constant 0 : i32
    %c0_i32_0 = arith.constant 0 : i32
    %c0_i32_1 = arith.constant 0 : i32
    return %c0_i32, %c0_i32_0 : i32, i32
  }
  func.func @transform_5(%arg0: i32) -> (i32, i32) {
    %c0_i32 = arith.constant 0 : i32
    %c0_i32_0 = arith.constant 0 : i32
    return %arg0, %c0_i32 : i32, i32
  }
}

</mosaic_0001>

<llo_original>
// kernel: hyper_network_fc_forward.4
$region0: #{hyper_network_fc_forward.4}
  #allocation0 [shape = 'u32[]', space=smem, size = 0x4, offset = 0x4, fixed_abs, tag = 'smem constant byte address 0x4 - core index']
  #allocation1 [shape = 'u32[144,128]{1,0:T(1,128)}', space=vmem, size = 0x12000, scoped, tag = 'internal scratch']
  %s0 = inlined_call_operand.vmem [shape: f32[32,160], index: 0, kind: input, shape index: {}]
  %s1 = inlined_call_operand.hbm [shape: f32[160,1024], index: 1, kind: input, shape index: {}]
  %s2 = inlined_call_operand.vmem [shape: f32[1,1024], index: 2, kind: input, shape index: {}]
  %s3 = inlined_call_operand.vmem [shape: f32[32,1024], index: 3, kind: output, shape index: {}]
  %s4 = sld [smem:[#allocation0]]
  $region72: #{hyper_network_fc_forward.4} parent=0
    _
  %s6 = ssub.s32 1, %s4
  %s7 = scalar_select 0, %s6, %s4
  $region1: #{hyper_network_fc_forward.4} parent=0
    #allocation2 [shape = 'u8[655360]{0}', space=vmem, size = 0xa0000, scoped, tag = 'input window, operand 1']
    #allocation3 [shape = 's32[2]{0}', space=sflag, size = 0x8, scoped, tag = 'scoped memory for hyper_network_fc_forward.4']
    #allocation4 [shape = 'u8[131072]{0}', space=vmem, size = 0x20000, scoped, tag = 'output window, operand 0']
    %8 = vsyncpa [#allocation3], 0
    %s9 = scalar_lea.sflag [#allocation3], 1
    %10 = vsyncpa %s9, 0
    loop: start=0, step=1, limit=4
    $region2: #{hyper_network_fc_forward.4} parent=1 // loop_pre_header
      _
    $region3: #{hyper_network_fc_forward.4} parent=1 // loop_header
      %s12 = sphi 0, %s16
      %p13 = scmp.ge.s32.totalorder %s12, 4
      %s19 = sphi 0, %s38
      %s20 = sphi 0, %s34
      %s21 = sphi 0, %s30
      %s22 = sphi 0, %s19
      %s23 = sphi 0, %s20
      %s24 = sphi 0, %s21
      %s25 = sphi 0, %s22
      %s26 = sphi 0, %s23
      %s27 = sphi 0, %s24
      %s43 = sphi 0, %s45
      %s46 = sphi 0, %s43
      %s47 = sphi 0, %s46
      %s63 = sphi 0, %s47
      %s71 = sphi 0, %s73
      %s74 = sphi 0, %s71
      %s75 = sphi 0, %s74
      %s91 = sphi 0, %s75
      %s97 = sphi 0, %s99
      %s100 = sphi 0, %s97
      %s101 = sphi 0, %s100
      %s117 = sphi 0, %s101
      %s125 = sphi 0, %s127
      %s128 = sphi 0, %s125
      %s129 = sphi 0, %s128
      %s145 = sphi 0, %s129
    $region4: #{hyper_network_fc_forward.4} parent=1 // loop_header_branch
      %15 = sbr.rel (%p13) target = $region8
    $region5: #{hyper_network_fc_forward.4} parent=1 // loop_body
      %s17 = ssub.s32 %s12, 1
      %s18 = ssub.s32 %s12, 2
      %s28 = sadd.s32 1, %s21
      %p29 = scmp.ge.s32.totalorder %s28, 1
      %s30 = scalar_select %p29, 0, %s28
      %s31 = sadd.s32 1, %s20
      %s32 = scalar_select %p29, %s31, %s20
      %p33 = scmp.ge.s32.totalorder %s32, 2
      %s34 = scalar_select %p33, 0, %s32
      %s35 = sadd.s32 1, %s19
      %s36 = scalar_select %p33, %s35, %s19
      %p37 = scmp.ge.s32.totalorder %s36, 1
      %s38 = scalar_select %p37, 0, %s36
      %s39 = ssub.s32 %s19, %s38
      %s40 = ssub.s32 %s21, %s30
      %s41 = sor.u32 %s39, %s40
      %p42 = scmp.eq.s32.totalorder %s41, 0
      %s44 = sadd.s32 %s43, 1
      %s45 = scalar_select %p42, %s43, %s44
      %p48 = pneg %p42
      %p49 = scmp.eq.s32.totalorder %s12, 1
      %p50 = por %p48, %p49
      %p51 = scmp.ne.s32.totalorder %s43, %s46
      %p52 = scmp.eq.s32.totalorder %s12, 0
      %p53 = por %p51, %p52
      %p54 = scmp.ne.s32.totalorder %s43, %s46
      %p55 = scmp.eq.s32.totalorder %s17, 1
      %p56 = por %p54, %p55
      %p57 = scmp.ne.s32.totalorder %s46, %s47
      %p58 = scmp.eq.s32.totalorder %s17, 0
      %p59 = por %p57, %p58
      %p60 = scmp.ne.s32.totalorder %s46, %s47
      %p61 = scmp.eq.s32.totalorder %s18, 1
      %p62 = por %p60, %p61
      %p64 = scmp.ne.s32.totalorder %s47, %s63
      %p65 = scmp.eq.s32.totalorder %s18, 0
      %p66 = por %p64, %p65
      %s67 = ssub.s32 %s21, %s30
      %s68 = ssub.s32 %s20, %s34
      %s69 = sor.u32 %s67, %s68
      %p70 = scmp.eq.s32.totalorder %s69, 0
      %s72 = sadd.s32 %s71, 1
      %s73 = scalar_select %p70, %s71, %s72
      %p76 = pneg %p70
      %p77 = scmp.eq.s32.totalorder %s12, 1
      %p78 = por %p76, %p77
      %p79 = scmp.ne.s32.totalorder %s71, %s74
      %p80 = scmp.eq.s32.totalorder %s12, 0
      %p81 = por %p79, %p80
      %p82 = scmp.ne.s32.totalorder %s71, %s74
      %p83 = scmp.eq.s32.totalorder %s17, 1
      %p84 = por %p82, %p83
      %p85 = scmp.ne.s32.totalorder %s74, %s75
      %p86 = scmp.eq.s32.totalorder %s17, 0
      %p87 = por %p85, %p86
      %p88 = scmp.ne.s32.totalorder %s74, %s75
      %p89 = scmp.eq.s32.totalorder %s18, 1
      %p90 = por %p88, %p89
      %p92 = scmp.ne.s32.totalorder %s75, %s91
      %p93 = scmp.eq.s32.totalorder %s18, 0
      %p94 = por %p92, %p93
      %s95 = ssub.s32 %s20, %s34
      %p96 = scmp.eq.s32.totalorder %s95, 0
      %s98 = sadd.s32 %s97, 1
      %s99 = scalar_select %p96, %s97, %s98
      %p102 = pneg %p96
      %p103 = scmp.eq.s32.totalorder %s12, 1
      %p104 = por %p102, %p103
      %p105 = scmp.ne.s32.totalorder %s97, %s100
      %p106 = scmp.eq.s32.totalorder %s12, 0
      %p107 = por %p105, %p106
      %p108 = scmp.ne.s32.totalorder %s97, %s100
      %p109 = scmp.eq.s32.totalorder %s17, 1
      %p110 = por %p108, %p109
      %p111 = scmp.ne.s32.totalorder %s100, %s101
      %p112 = scmp.eq.s32.totalorder %s17, 0
      %p113 = por %p111, %p112
      %p114 = scmp.ne.s32.totalorder %s100, %s101
      %p115 = scmp.eq.s32.totalorder %s18, 1
      %p116 = por %p114, %p115
      %p118 = scmp.ne.s32.totalorder %s101, %s117
      %p119 = scmp.eq.s32.totalorder %s18, 0
      %p120 = por %p118, %p119
      %s121 = ssub.s32 %s19, %s38
      %s122 = ssub.s32 %s20, %s34
      %s123 = sor.u32 %s121, %s122
      %p124 = scmp.eq.s32.totalorder %s123, 0
      %s126 = sadd.s32 %s125, 1
      %s127 = scalar_select %p124, %s125, %s126
      %p130 = pneg %p124
      %p131 = scmp.eq.s32.totalorder %s12, 1
      %p132 = por %p130, %p131
      %p133 = scmp.ne.s32.totalorder %s125, %s128
      %p134 = scmp.eq.s32.totalorder %s12, 0
      %p135 = por %p133, %p134
      %p136 = scmp.ne.s32.totalorder %s125, %s128
      %p137 = scmp.eq.s32.totalorder %s17, 1
      %p138 = por %p136, %p137
      %p139 = scmp.ne.s32.totalorder %s128, %s129
      %p140 = scmp.eq.s32.totalorder %s17, 0
      %p141 = por %p139, %p140
      %p142 = scmp.ne.s32.totalorder %s128, %s129
      %p143 = scmp.eq.s32.totalorder %s18, 1
      %p144 = por %p142, %p143
      %p146 = scmp.ne.s32.totalorder %s129, %s145
      %p147 = scmp.eq.s32.totalorder %s18, 0
      %p148 = por %p146, %p147
      %p149 = scmp.le.s32.totalorder 1, %s12
      %p150 = scmp.lt.s32.totalorder %s12, 3
      %p151 = pnand %p149, %p150
      %p152 = pneg %p151
      // Predicated region
      $region9: #{hyper_network_fc_forward.4} parent=5 // pred_check
        _
      $region10: #{hyper_network_fc_forward.4} parent=5 // pred_check_branch
        %154 = sbr.rel (%p151) target = $region12
      $region11: #{hyper_network_fc_forward.4} parent=5 // pred_region
        %s155 = ssub.s32 %s12, 1
        // Predicated region
        $region13: #{hyper_network_fc_forward.4} parent=11 // pred_check
          %p156 = pneg %p59
        $region14: #{hyper_network_fc_forward.4} parent=11 // pred_check_branch
          %158 = sbr.rel (%p156) target = $region16
        $region15: #{hyper_network_fc_forward.4} parent=11 // pred_region
          %s159 = smul.u32 4, %s22
          %s160 = smul.u32 2, %s24
          %p161 = scmp.lt.s32.totalorder %s159, 3
          %s162 = scalar_select %p161, %s159, 3
          %p163 = scmp.lt.s32.totalorder %s160, 1
          %s164 = scalar_select %p163, %s160, 1
          %s165 = smul.addr %s162, 2
          %s166 = sadd.s32 %s164, %s165
          %s167 = smul.addr %s166, 8
          %s168 = scalar_lea.vmem %s0, %s167
          %s169 = smul.u32 4, %s22
          %s170 = smul.u32 2, %s24
        $region16: #{hyper_network_fc_forward.4} parent=11 // pred_fallthru
          _
      $region12: #{hyper_network_fc_forward.4} parent=5 // pred_fallthru
        _
      %p171 = scmp.lt.s32.totalorder %s12, 2
      // Predicated region
      $region17: #{hyper_network_fc_forward.4} parent=5 // pred_check
        %p172 = pneg %p171
      $region18: #{hyper_network_fc_forward.4} parent=5 // pred_check_branch
        %174 = sbr.rel (%p172) target = $region20
      $region19: #{hyper_network_fc_forward.4} parent=5 // pred_region
        // Predicated region
        $region21: #{hyper_network_fc_forward.4} parent=19 // pred_check
          %p175 = pneg %p81
        $region22: #{hyper_network_fc_forward.4} parent=19 // pred_check_branch
          %177 = sbr.rel (%p175) target = $region24
        $region23: #{hyper_network_fc_forward.4} parent=19 // pred_region
          %s178 = sand.u32 %s71, 1
          %s179 = scalar_lea.sflag [#allocation3], %s178
          %s180 = sand.u32 %s71, 1
          %s181 = smul.addr %s180, 640
          %s182 = scalar_lea.vmem [#allocation2], %s181
          %s183 = smul.u32 20, %s21
          %s184 = smul.u32 4, %s20
          %s186 = ssub.s32 10240, 10240
          %187 = vsyncadd %s179, %s186
          %s188 = smul.addr %s183, 8
          %s189 = sadd.s32 %s184, %s188
          %s190 = smul.addr %s189, 128
          %s191 = scalar_lea.hbm %s1, %s190
          %s192 = sshll.u32 %s182, 4
          %s193 = int_to_ptr.vmem [resolvable:$true] %s192
          %198 = dma.hbm_to_vmem [thread:$0]  %s191, 10240, %s193, %s179, 1024, 512, 32
        $region24: #{hyper_network_fc_forward.4} parent=19 // pred_fallthru
          _
        // Predicated region
        $region25: #{hyper_network_fc_forward.4} parent=19 // pred_check
          %p199 = pneg %p107
        $region26: #{hyper_network_fc_forward.4} parent=19 // pred_check_branch
          %201 = sbr.rel (%p199) target = $region28
        $region27: #{hyper_network_fc_forward.4} parent=19 // pred_region
          %s202 = smul.u32 4, %s20
          %p203 = scmp.lt.s32.totalorder %s202, 7
          %s204 = scalar_select %p203, %s202, 7
          %s205 = scalar_lea.vmem %s2, %s204
          %s206 = smul.u32 4, %s20
        $region28: #{hyper_network_fc_forward.4} parent=19 // pred_fallthru
          _
      $region20: #{hyper_network_fc_forward.4} parent=5 // pred_fallthru
        _
      %p207 = scmp.le.s32.totalorder 1, %s12
      %p208 = scmp.lt.s32.totalorder %s12, 3
      %p209 = pnand %p207, %p208
      %p210 = pneg %p209
      // Predicated region
      $region29: #{hyper_network_fc_forward.4} parent=5 // pred_check
        _
      $region30: #{hyper_network_fc_forward.4} parent=5 // pred_check_branch
        %212 = sbr.rel (%p209) target = $region32
      $region31: #{hyper_network_fc_forward.4} parent=5 // pred_region
        %s213 = ssub.s32 %s12, 1
        %s214 = sand.u32 %s74, 1
        %s215 = scalar_lea.sflag [#allocation3], %s214
        %s216 = sand.u32 %s74, 1
        %s217 = smul.addr %s216, 640
        %s218 = scalar_lea.vmem [#allocation2], %s217
        // Predicated region
        $region33: #{hyper_network_fc_forward.4} parent=31 // pred_check
          %p219 = pneg %p87
        $region34: #{hyper_network_fc_forward.4} parent=31 // pred_check_branch
          %221 = sbr.rel (%p219) target = $region36
        $region35: #{hyper_network_fc_forward.4} parent=31 // pred_region
          %222 = dma.done %s215, 10240
        $region36: #{hyper_network_fc_forward.4} parent=31 // pred_fallthru
          _
        %s223 = smul.u32 4, %s22
        %s224 = smul.u32 2, %s24
        %p225 = scmp.lt.s32.totalorder %s223, 3
        %s226 = scalar_select %p225, %s223, 3
        %p227 = scmp.lt.s32.totalorder %s224, 1
        %s228 = scalar_select %p227, %s224, 1
        %s229 = smul.addr %s226, 2
        %s230 = sadd.s32 %s228, %s229
        %s231 = smul.addr %s230, 8
        %s232 = scalar_lea.vmem %s0, %s231
        %p233 = pneg %p59
        %p234 = pneg %p56
        %s235 = sand.u32 %s74, 1
        %s236 = scalar_lea.sflag [#allocation3], %s235
        %s237 = sand.u32 %s74, 1
        %s238 = smul.addr %s237, 640
        %s239 = scalar_lea.vmem [#allocation2], %s238
        %p240 = pneg %p87
        %p241 = pneg %p84
        %s242 = smul.u32 4, %s23
        %p243 = scmp.lt.s32.totalorder %s242, 7
        %s244 = scalar_select %p243, %s242, 7
        %s245 = scalar_lea.vmem %s2, %s244
        %p246 = pneg %p113
        %p247 = pneg %p110
        %p248 = pneg %p141
        %p249 = pneg %p138
        %s250 = sand.u32 %s128, 1
        %s251 = sand.u32 %s128, 1
        %s252 = smul.addr %s251, 128
        %s253 = scalar_lea.vmem [#allocation4], %s252
        %s254 = smul.u32 4, %s22
        %s255 = smul.u32 2, %s24
        %p256 = scmp.lt.s32.totalorder %s254, 3
        %s257 = scalar_select %p256, %s254, 3
        %p258 = scmp.lt.s32.totalorder %s255, 1
        %s259 = scalar_select %p258, %s255, 1
        %s260 = smul.addr %s257, 2
        %s261 = sadd.s32 %s259, %s260
        %s262 = smul.addr %s261, 8
        %s263 = scalar_lea.vmem %s0, %s262
        %s264 = smul.u32 4, %s22
        %s265 = smul.u32 2, %s24
        %s266 = smul.u32 20, %s24
        %s267 = smul.u32 4, %s23
        %s268 = smul.u32 4, %s23
        %p269 = scmp.lt.s32.totalorder %s268, 7
        %s270 = scalar_select %p269, %s268, 7
        %s271 = scalar_lea.vmem %s2, %s270
        %s272 = smul.u32 4, %s23
        %s273 = smul.u32 4, %s22
        %s274 = smul.u32 4, %s23
        %p275 = scmp.eq.s32.totalorder %s24, 0
        // Predicated region
        $region37: #{hyper_network_fc_forward.4} parent=31 // pred_check
          %p276 = pneg %p275
        $region38: #{hyper_network_fc_forward.4} parent=31 // pred_check_branch
          %278 = sbr.rel (%p276) target = $region40
        $region39: #{hyper_network_fc_forward.4} parent=31 // pred_region
          %v279 = vld [vmem:[%s271] sm:$0xf]
          %v281 = vlaneseq
          %v282 = vshrl.u32 %v281, 7
          %v283 = vsub.s32 0, %v282
          %v284 = vrot.slane %v279, %v283
          %v285 = vlaneseq
          %v286 = vshrl.u32 %v285, 7
          %v287 = vsub.s32 1, %v286
          %v288 = vrot.slane %v279, %v287
          %v289 = vlaneseq
          %v290 = vshrl.u32 %v289, 7
          %v291 = vsub.s32 2, %v290
          %v292 = vrot.slane %v279, %v291
          %v293 = vlaneseq
          %v294 = vshrl.u32 %v293, 7
          %v295 = vsub.s32 3, %v294
          %v296 = vrot.slane %v279, %v295
          %301 = vst [vmem:[%s253] sm:$0xff] %v284
          %302 = vst [vmem:[%s253 + $0x8] sm:$0xff] %v288
          %303 = vst [vmem:[%s253 + $0x10] sm:$0xff] %v292
          %304 = vst [vmem:[%s253 + $0x18] sm:$0xff] %v296
          %305 = vst [vmem:[%s253 + $0x20] sm:$0xff] %v284
          %306 = vst [vmem:[%s253 + $0x28] sm:$0xff] %v288
          %307 = vst [vmem:[%s253 + $0x30] sm:$0xff] %v292
          %308 = vst [vmem:[%s253 + $0x38] sm:$0xff] %v296
          %309 = vst [vmem:[%s253 + $0x40] sm:$0xff] %v284
          %310 = vst [vmem:[%s253 + $0x48] sm:$0xff] %v288
          %311 = vst [vmem:[%s253 + $0x50] sm:$0xff] %v292
          %312 = vst [vmem:[%s253 + $0x58] sm:$0xff] %v296
          %313 = vst [vmem:[%s253 + $0x60] sm:$0xff] %v284
          %314 = vst [vmem:[%s253 + $0x68] sm:$0xff] %v288
          %315 = vst [vmem:[%s253 + $0x70] sm:$0xff] %v292
          %316 = vst [vmem:[%s253 + $0x78] sm:$0xff] %v296
        $region40: #{hyper_network_fc_forward.4} parent=31 // pred_fallthru
          _
        %v317 = vld [vmem:[%s253] sm:$0xff]
        %v318 = vld [vmem:[%s253 + $0x8] sm:$0xff]
        %v319 = vld [vmem:[%s253 + $0x10] sm:$0xff]
        %v320 = vld [vmem:[%s253 + $0x18] sm:$0xff]
        %v321 = vld [vmem:[%s253 + $0x20] sm:$0xff]
        %v322 = vld [vmem:[%s253 + $0x28] sm:$0xff]
        %v323 = vld [vmem:[%s253 + $0x30] sm:$0xff]
        %v324 = vld [vmem:[%s253 + $0x38] sm:$0xff]
        %v325 = vld [vmem:[%s253 + $0x40] sm:$0xff]
        %v326 = vld [vmem:[%s253 + $0x48] sm:$0xff]
        %v327 = vld [vmem:[%s253 + $0x50] sm:$0xff]
        %v328 = vld [vmem:[%s253 + $0x58] sm:$0xff]
        %v329 = vld [vmem:[%s253 + $0x60] sm:$0xff]
        %v330 = vld [vmem:[%s253 + $0x68] sm:$0xff]
        %v331 = vld [vmem:[%s253 + $0x70] sm:$0xff]
        %v332 = vld [vmem:[%s253 + $0x78] sm:$0xff]
        %v333 = vld [vmem:[%s263] sm:$0xff]
        %v334 = vld [vmem:[%s263 + $0x8] sm:$0xff]
        %v335 = vld [vmem:[%s263 + $0x10] sm:$0xff]
        %v336 = vld [vmem:[%s263 + $0x18] sm:$0xff]
        %v337 = vld [vmem:[%s263 + $0x20] sm:$0xff]
        %v338 = vld [vmem:[%s263 + $0x28] sm:$0xff]
        %v339 = vld [vmem:[%s263 + $0x30] sm:$0xff]
        %v340 = vld [vmem:[%s263 + $0x38] sm:$0xff]
        %v341 = vld [vmem:[%s218] sm:$0xff]
        %v342 = vld [vmem:[%s218 + $0x8] sm:$0xff]
        %v343 = vld [vmem:[%s218 + $0x10] sm:$0xff]
        %v344 = vld [vmem:[%s218 + $0x18] sm:$0xff]
        %v345 = vld [vmem:[%s218 + $0x20] sm:$0xff]
        %v346 = vld [vmem:[%s218 + $0x28] sm:$0xff]
        %v347 = vld [vmem:[%s218 + $0x30] sm:$0xff]
        %v348 = vld [vmem:[%s218 + $0x38] sm:$0xff]
        %v349 = vld [vmem:[%s218 + $0x40] sm:$0xff]
        %v350 = vld [vmem:[%s218 + $0x48] sm:$0xff]
        %v351 = vld [vmem:[%s218 + $0x50] sm:$0xff]
        %v352 = vld [vmem:[%s218 + $0x58] sm:$0xff]
        %v353 = vld [vmem:[%s218 + $0x60] sm:$0xff]
        %v354 = vld [vmem:[%s218 + $0x68] sm:$0xff]
        %v355 = vld [vmem:[%s218 + $0x70] sm:$0xff]
        %v356 = vld [vmem:[%s218 + $0x78] sm:$0xff]
        %v357 = vld [vmem:[%s218 + $0x80] sm:$0xff]
        %v358 = vld [vmem:[%s218 + $0x88] sm:$0xff]
        %v359 = vld [vmem:[%s218 + $0x90] sm:$0xff]
        %v360 = vld [vmem:[%s218 + $0x98] sm:$0xff]
        %v361 = vld [vmem:[%s218 + $0xa0] sm:$0xff]
        %v362 = vld [vmem:[%s218 + $0xa8] sm:$0xff]
        %v363 = vld [vmem:[%s218 + $0xb0] sm:$0xff]
        %v364 = vld [vmem:[%s218 + $0xb8] sm:$0xff]
        %v365 = vld [vmem:[%s218 + $0xc0] sm:$0xff]
        %v366 = vld [vmem:[%s218 + $0xc8] sm:$0xff]
        %v367 = vld [vmem:[%s218 + $0xd0] sm:$0xff]
        %v368 = vld [vmem:[%s218 + $0xd8] sm:$0xff]
        %v369 = vld [vmem:[%s218 + $0xe0] sm:$0xff]
        %v370 = vld [vmem:[%s218 + $0xe8] sm:$0xff]
        %v371 = vld [vmem:[%s218 + $0xf0] sm:$0xff]
        %v372 = vld [vmem:[%s218 + $0xf8] sm:$0xff]
        %v373 = vld [vmem:[%s218 + $0x100] sm:$0xff]
        %v374 = vld [vmem:[%s218 + $0x108] sm:$0xff]
        %v375 = vld [vmem:[%s218 + $0x110] sm:$0xff]
        %v376 = vld [vmem:[%s218 + $0x118] sm:$0xff]
        %v377 = vld [vmem:[%s218 + $0x120] sm:$0xff]
        %v378 = vld [vmem:[%s218 + $0x128] sm:$0xff]
        %v379 = vld [vmem:[%s218 + $0x130] sm:$0xff]
        %v380 = vld [vmem:[%s218 + $0x138] sm:$0xff]
        %v381 = vld [vmem:[%s218 + $0x140] sm:$0xff]
        %v382 = vld [vmem:[%s218 + $0x148] sm:$0xff]
        %v383 = vld [vmem:[%s218 + $0x150] sm:$0xff]
        %v384 = vld [vmem:[%s218 + $0x158] sm:$0xff]
        %v385 = vld [vmem:[%s218 + $0x160] sm:$0xff]
        %v386 = vld [vmem:[%s218 + $0x168] sm:$0xff]
        %v387 = vld [vmem:[%s218 + $0x170] sm:$0xff]
        %v388 = vld [vmem:[%s218 + $0x178] sm:$0xff]
        %v389 = vld [vmem:[%s218 + $0x180] sm:$0xff]
        %v390 = vld [vmem:[%s218 + $0x188] sm:$0xff]
        %v391 = vld [vmem:[%s218 + $0x190] sm:$0xff]
        %v392 = vld [vmem:[%s218 + $0x198] sm:$0xff]
        %v393 = vld [vmem:[%s218 + $0x1a0] sm:$0xff]
        %v394 = vld [vmem:[%s218 + $0x1a8] sm:$0xff]
        %v395 = vld [vmem:[%s218 + $0x1b0] sm:$0xff]
        %v396 = vld [vmem:[%s218 + $0x1b8] sm:$0xff]
        %v397 = vld [vmem:[%s218 + $0x1c0] sm:$0xff]
        %v398 = vld [vmem:[%s218 + $0x1c8] sm:$0xff]
        %v399 = vld [vmem:[%s218 + $0x1d0] sm:$0xff]
        %v400 = vld [vmem:[%s218 + $0x1d8] sm:$0xff]
        %v401 = vld [vmem:[%s218 + $0x1e0] sm:$0xff]
        %v402 = vld [vmem:[%s218 + $0x1e8] sm:$0xff]
        %v403 = vld [vmem:[%s218 + $0x1f0] sm:$0xff]
        %v404 = vld [vmem:[%s218 + $0x1f8] sm:$0xff]
        %v405 = vld [vmem:[%s218 + $0x200] sm:$0xff]
        %v406 = vld [vmem:[%s218 + $0x208] sm:$0xff]
        %v407 = vld [vmem:[%s218 + $0x210] sm:$0xff]
        %v408 = vld [vmem:[%s218 + $0x218] sm:$0xff]
        %v409 = vld [vmem:[%s218 + $0x220] sm:$0xff]
        %v410 = vld [vmem:[%s218 + $0x228] sm:$0xff]
        %v411 = vld [vmem:[%s218 + $0x230] sm:$0xff]
        %v412 = vld [vmem:[%s218 + $0x238] sm:$0xff]
        %v413 = vld [vmem:[%s218 + $0x240] sm:$0xff]
        %v414 = vld [vmem:[%s218 + $0x248] sm:$0xff]
        %v415 = vld [vmem:[%s218 + $0x250] sm:$0xff]
        %v416 = vld [vmem:[%s218 + $0x258] sm:$0xff]
        %v417 = vld [vmem:[%s218 + $0x260] sm:$0xff]
        %v418 = vld [vmem:[%s218 + $0x268] sm:$0xff]
        %v419 = vld [vmem:[%s218 + $0x270] sm:$0xff]
        %v420 = vld [vmem:[%s218 + $0x278] sm:$0xff]
        %vm421 = vcmask 261120
        %v423 = vsel %vm421, %v334, 0
        %v426 = vsel %vm421, %v336, 0
        %v429 = vsel %vm421, %v338, 0
        %v432 = vsel %vm421, %v340, 0
        %434 = vmatprep.subr.mxu0 %v402
        %435 = vmatpush1.msra.mxu0 %v401
        %436 = vmatprep.subr.mxu0 %v398
        %437 = vmatpush1.msra.mxu0 %v397
        %438 = vmatprep.subr.mxu0 %v394
        %439 = vmatpush1.msra.mxu0 %v393
        %440 = vmatprep.subr.mxu0 %v390
        %441 = vmatpush1.msra.mxu0 %v389
        %442 = vmatprep.subr.mxu0 %v386
        %443 = vmatpush1.msra.mxu0 %v385
        %444 = vmatprep.subr.mxu0 %v382
        %445 = vmatpush1.msra.mxu0 %v381
        %446 = vmatprep.subr.mxu0 %v378
        %447 = vmatpush1.msra.mxu0 %v377
        %448 = vmatprep.subr.mxu0 %v374
        %449 = vmatpush1.msra.mxu0 %v373
        %450 = vmatprep.subr.mxu0 %v370
        %451 = vmatpush1.msra.mxu0 %v369
        %452 = vmatprep.subr.mxu0 %v366
        %453 = vmatpush1.msra.mxu0 %v365
        %454 = vmatprep.subr.mxu0 %v362
        %455 = vmatpush1.msra.mxu0 %v361
        %456 = vmatprep.subr.mxu0 %v358
        %457 = vmatpush1.msra.mxu0 %v357
        %458 = vmatprep.subr.mxu0 %v354
        %459 = vmatpush1.msra.mxu0 %v353
        %460 = vmatprep.subr.mxu0 %v350
        %461 = vmatpush1.msra.mxu0 %v349
        %462 = vmatprep.subr.mxu0 %v346
        %463 = vmatpush1.msra.mxu0 %v345
        %464 = vmatprep.subr.mxu0 %v342
        %465 = vmatpush1.msra.mxu0 %v341
        %466 = vmatprep.subr.mxu0 0.0
        %467 = vmatpush2.msra.mxu0 0.0
        %468 = vmatprep.subr.mxu0 0.0
        %469 = vmatpush2.msra.mxu0 0.0
        %470 = vmatprep.subr.mxu0 0.0
        %471 = vmatpush2.msra.mxu0 0.0
        %472 = vmatprep.subr.mxu0 0.0
        %473 = vmatpush2.msra.mxu0 0.0
        %474 = vmatprep.subr.mxu0 0.0
        %475 = vmatpush2.msra.mxu0 0.0
        %476 = vmatprep.subr.mxu0 0.0
        %477 = vmatpush2.msra.mxu0 0.0
        %478 = vmatprep.subr.mxu0 0.0
        %479 = vmatpush2.msra.mxu0 0.0
        %480 = vmatprep.subr.mxu0 0.0
        %481 = vmatpush2.msra.mxu0 0.0
        %482 = vmatprep.subr.mxu0 0.0
        %483 = vmatpush2.msra.mxu0 0.0
        %484 = vmatprep.subr.mxu0 0.0
        %485 = vmatpush2.msra.mxu0 0.0
        %486 = vmatprep.subr.mxu0 0.0
        %487 = vmatpush2.msra.mxu0 0.0
        %488 = vmatprep.subr.mxu0 0.0
        %489 = vmatpush2.msra.mxu0 0.0
        %490 = vmatprep.subr.mxu0 %v418
        %491 = vmatpush2.msra.mxu0 %v417
        %492 = vmatprep.subr.mxu0 %v414
        %493 = vmatpush2.msra.mxu0 %v413
        %494 = vmatprep.subr.mxu0 %v410
        %495 = vmatpush2.msra.mxu0 %v409
        %496 = vmatprep.subr.mxu0 %v406
        %497 = vmatpush2.msra.mxu0 %v405
        %498 = vmatprep.mubr.f32.mxu0 %v423
        %499 = vmatmul.mubr.f32.gmra.mxu0 %v333
        %v500 = vpop.f32.mrf.mxu0
        %v501 = vadd.f32 0.0, %v500
        %v502 = vpop.f32.mrf.mxu0
        %v503 = vadd.f32 0.0, %v502
        %504 = vmatprep.mubr.f32.mxu0 %v426
        %505 = vmatmul.mubr.f32.gmra.mxu0 %v335
        %v506 = vpop.f32.mrf.mxu0
        %v507 = vadd.f32 0.0, %v506
        %v508 = vpop.f32.mrf.mxu0
        %v509 = vadd.f32 0.0, %v508
        %510 = vmatprep.mubr.f32.mxu0 %v429
        %511 = vmatmul.mubr.f32.gmra.mxu0 %v337
        %v512 = vpop.f32.mrf.mxu0
        %v513 = vadd.f32 0.0, %v512
        %v514 = vpop.f32.mrf.mxu0
        %v515 = vadd.f32 0.0, %v514
        %516 = vmatprep.mubr.f32.mxu0 %v432
        %517 = vmatmul.mubr.f32.gmra.mxu0 %v339
        %v518 = vpop.f32.mrf.mxu0
        %v519 = vadd.f32 0.0, %v518
        %v520 = vpop.f32.mrf.mxu0
        %v521 = vadd.f32 0.0, %v520
        %522 = vdwg.mxu0
        %523 = vmatprep.subr.mxu0 %v404
        %524 = vmatpush1.msra.mxu0 %v403
        %525 = vmatprep.subr.mxu0 %v400
        %526 = vmatpush1.msra.mxu0 %v399
        %527 = vmatprep.subr.mxu0 %v396
        %528 = vmatpush1.msra.mxu0 %v395
        %529 = vmatprep.subr.mxu0 %v392
        %530 = vmatpush1.msra.mxu0 %v391
        %531 = vmatprep.subr.mxu0 %v388
        %532 = vmatpush1.msra.mxu0 %v387
        %533 = vmatprep.subr.mxu0 %v384
        %534 = vmatpush1.msra.mxu0 %v383
        %535 = vmatprep.subr.mxu0 %v380
        %536 = vmatpush1.msra.mxu0 %v379
        %537 = vmatprep.subr.mxu0 %v376
        %538 = vmatpush1.msra.mxu0 %v375
        %539 = vmatprep.subr.mxu0 %v372
        %540 = vmatpush1.msra.mxu0 %v371
        %541 = vmatprep.subr.mxu0 %v368
        %542 = vmatpush1.msra.mxu0 %v367
        %543 = vmatprep.subr.mxu0 %v364
        %544 = vmatpush1.msra.mxu0 %v363
        %545 = vmatprep.subr.mxu0 %v360
        %546 = vmatpush1.msra.mxu0 %v359
        %547 = vmatprep.subr.mxu0 %v356
        %548 = vmatpush1.msra.mxu0 %v355
        %549 = vmatprep.subr.mxu0 %v352
        %550 = vmatpush1.msra.mxu0 %v351
        %551 = vmatprep.subr.mxu0 %v348
        %552 = vmatpush1.msra.mxu0 %v347
        %553 = vmatprep.subr.mxu0 %v344
        %554 = vmatpush1.msra.mxu0 %v343
        %555 = vmatprep.subr.mxu0 0.0
        %556 = vmatpush2.msra.mxu0 0.0
        %557 = vmatprep.subr.mxu0 0.0
        %558 = vmatpush2.msra.mxu0 0.0
        %559 = vmatprep.subr.mxu0 0.0
        %560 = vmatpush2.msra.mxu0 0.0
        %561 = vmatprep.subr.mxu0 0.0
        %562 = vmatpush2.msra.mxu0 0.0
        %563 = vmatprep.subr.mxu0 0.0
        %564 = vmatpush2.msra.mxu0 0.0
        %565 = vmatprep.subr.mxu0 0.0
        %566 = vmatpush2.msra.mxu0 0.0
        %567 = vmatprep.subr.mxu0 0.0
        %568 = vmatpush2.msra.mxu0 0.0
        %569 = vmatprep.subr.mxu0 0.0
        %570 = vmatpush2.msra.mxu0 0.0
        %571 = vmatprep.subr.mxu0 0.0
        %572 = vmatpush2.msra.mxu0 0.0
        %573 = vmatprep.subr.mxu0 0.0
        %574 = vmatpush2.msra.mxu0 0.0
        %575 = vmatprep.subr.mxu0 0.0
        %576 = vmatpush2.msra.mxu0 0.0
        %577 = vmatprep.subr.mxu0 0.0
        %578 = vmatpush2.msra.mxu0 0.0
        %579 = vmatprep.subr.mxu0 %v420
        %580 = vmatpush2.msra.mxu0 %v419
        %581 = vmatprep.subr.mxu0 %v416
        %582 = vmatpush2.msra.mxu0 %v415
        %583 = vmatprep.subr.mxu0 %v412
        %584 = vmatpush2.msra.mxu0 %v411
        %585 = vmatprep.subr.mxu0 %v408
        %586 = vmatpush2.msra.mxu0 %v407
        %587 = vmatprep.mubr.f32.mxu0 %v423
        %588 = vmatmul.mubr.f32.gmra.mxu0 %v333
        %v589 = vpop.f32.mrf.mxu0
        %v590 = vadd.f32 0.0, %v589
        %v591 = vpop.f32.mrf.mxu0
        %v592 = vadd.f32 0.0, %v591
        %593 = vmatprep.mubr.f32.mxu0 %v426
        %594 = vmatmul.mubr.f32.gmra.mxu0 %v335
        %v595 = vpop.f32.mrf.mxu0
        %v596 = vadd.f32 0.0, %v595
        %v597 = vpop.f32.mrf.mxu0
        %v598 = vadd.f32 0.0, %v597
        %599 = vmatprep.mubr.f32.mxu0 %v429
        %600 = vmatmul.mubr.f32.gmra.mxu0 %v337
        %v601 = vpop.f32.mrf.mxu0
        %v602 = vadd.f32 0.0, %v601
        %v603 = vpop.f32.mrf.mxu0
        %v604 = vadd.f32 0.0, %v603
        %605 = vmatprep.mubr.f32.mxu0 %v432
        %606 = vmatmul.mubr.f32.gmra.mxu0 %v339
        %v607 = vpop.f32.mrf.mxu0
        %v608 = vadd.f32 0.0, %v607
        %v609 = vpop.f32.mrf.mxu0
        %v610 = vadd.f32 0.0, %v609
        %611 = vdwg.mxu0
        %v612 = vadd.f32 %v317, %v501
        %v613 = vadd.f32 %v318, %v503
        %v614 = vadd.f32 %v319, %v590
        %v615 = vadd.f32 %v320, %v592
        %v616 = vadd.f32 %v321, %v507
        %v617 = vadd.f32 %v322, %v509
        %v618 = vadd.f32 %v323, %v596
        %v619 = vadd.f32 %v324, %v598
        %v620 = vadd.f32 %v325, %v513
        %v621 = vadd.f32 %v326, %v515
        %v622 = vadd.f32 %v327, %v602
        %v623 = vadd.f32 %v328, %v604
        %v624 = vadd.f32 %v329, %v519
        %v625 = vadd.f32 %v330, %v521
        %v626 = vadd.f32 %v331, %v608
        %v627 = vadd.f32 %v332, %v610
        %628 = vst [vmem:[%s253] sm:$0xff] %v612
        %629 = vst [vmem:[%s253 + $0x8] sm:$0xff] %v613
        %630 = vst [vmem:[%s253 + $0x10] sm:$0xff] %v614
        %631 = vst [vmem:[%s253 + $0x18] sm:$0xff] %v615
        %632 = vst [vmem:[%s253 + $0x20] sm:$0xff] %v616
        %633 = vst [vmem:[%s253 + $0x28] sm:$0xff] %v617
        %634 = vst [vmem:[%s253 + $0x30] sm:$0xff] %v618
        %635 = vst [vmem:[%s253 + $0x38] sm:$0xff] %v619
        %636 = vst [vmem:[%s253 + $0x40] sm:$0xff] %v620
        %637 = vst [vmem:[%s253 + $0x48] sm:$0xff] %v621
        %638 = vst [vmem:[%s253 + $0x50] sm:$0xff] %v622
        %639 = vst [vmem:[%s253 + $0x58] sm:$0xff] %v623
        %640 = vst [vmem:[%s253 + $0x60] sm:$0xff] %v624
        %641 = vst [vmem:[%s253 + $0x68] sm:$0xff] %v625
        %642 = vst [vmem:[%s253 + $0x70] sm:$0xff] %v626
        %643 = vst [vmem:[%s253 + $0x78] sm:$0xff] %v627
        %s644 = sand.u32 %s128, 1
        %s645 = sand.u32 %s128, 1
        %s646 = smul.addr %s645, 128
        %s647 = scalar_lea.vmem [#allocation4], %s646
        // Predicated region
        $region41: #{hyper_network_fc_forward.4} parent=31 // pred_check
          %p648 = pneg %p138
        $region42: #{hyper_network_fc_forward.4} parent=31 // pred_check_branch
          %650 = sbr.rel (%p648) target = $region44
        $region43: #{hyper_network_fc_forward.4} parent=31 // pred_region
          %s651 = smul.u32 4, %s22
          %s652 = smul.u32 4, %s23
          %s653 = smul.addr %s651, 8
          %s654 = sadd.s32 %s652, %s653
          %s655 = smul.addr %s654, 8
          %s656 = scalar_lea.vmem %s3, %s655
          // Predicated region
          $region45: #{hyper_network_fc_forward.4} parent=43 // pred_check
            _
          $region46: #{hyper_network_fc_forward.4} parent=43 // pred_check_branch
            %658 = sbr.rel (0) target = $region48
          $region47: #{hyper_network_fc_forward.4} parent=43 // pred_region
            // Predicated region
            $region49: #{hyper_network_fc_forward.4} parent=47 // pred_check
              _
            $region50: #{hyper_network_fc_forward.4} parent=47 // pred_check_branch
              %660 = sbr.rel (0) target = $region52
            $region51: #{hyper_network_fc_forward.4} parent=47 // pred_region
              loop: start=0, step=1, limit=1
              $region53: #{hyper_network_fc_forward.4} parent=51 // loop_pre_header
                _
              $region54: #{hyper_network_fc_forward.4} parent=51 // loop_header
                %s662 = sphi 0, %s666
                %p663 = scmp.ge.s32.totalorder %s662, 1
                %s667 = sphi %s647, %s647
                %s668 = sphi %s656, %s656
              $region55: #{hyper_network_fc_forward.4} parent=51 // loop_header_branch
                %665 = sbr.rel (%p663) target = $region59
              $region56: #{hyper_network_fc_forward.4} parent=51 // loop_body
                %v669 = vld [vmem:[%s667] sm:$0xff]
                %670 = vst [vmem:[%s668] sm:$0xff] %v669
                %v671 = vld [vmem:[%s667 + $0x8] sm:$0xff]
                %672 = vst [vmem:[%s668 + $0x8] sm:$0xff] %v671
                %v673 = vld [vmem:[%s667 + $0x10] sm:$0xff]
                %674 = vst [vmem:[%s668 + $0x10] sm:$0xff] %v673
                %v675 = vld [vmem:[%s667 + $0x18] sm:$0xff]
                %676 = vst [vmem:[%s668 + $0x18] sm:$0xff] %v675
                %v677 = vld [vmem:[%s667 + $0x20] sm:$0xff]
                %678 = vst [vmem:[%s668 + $0x40] sm:$0xff] %v677
                %v679 = vld [vmem:[%s667 + $0x28] sm:$0xff]
                %680 = vst [vmem:[%s668 + $0x48] sm:$0xff] %v679
                %v681 = vld [vmem:[%s667 + $0x30] sm:$0xff]
                %682 = vst [vmem:[%s668 + $0x50] sm:$0xff] %v681
                %v683 = vld [vmem:[%s667 + $0x38] sm:$0xff]
                %684 = vst [vmem:[%s668 + $0x58] sm:$0xff] %v683
                %v685 = vld [vmem:[%s667 + $0x40] sm:$0xff]
                %686 = vst [vmem:[%s668 + $0x80] sm:$0xff] %v685
                %v687 = vld [vmem:[%s667 + $0x48] sm:$0xff]
                %688 = vst [vmem:[%s668 + $0x88] sm:$0xff] %v687
                %v689 = vld [vmem:[%s667 + $0x50] sm:$0xff]
                %690 = vst [vmem:[%s668 + $0x90] sm:$0xff] %v689
                %v691 = vld [vmem:[%s667 + $0x58] sm:$0xff]
                %692 = vst [vmem:[%s668 + $0x98] sm:$0xff] %v691
                %v693 = vld [vmem:[%s667 + $0x60] sm:$0xff]
                %694 = vst [vmem:[%s668 + $0xc0] sm:$0xff] %v693
                %v695 = vld [vmem:[%s667 + $0x68] sm:$0xff]
                %696 = vst [vmem:[%s668 + $0xc8] sm:$0xff] %v695
                %v697 = vld [vmem:[%s667 + $0x70] sm:$0xff]
                %698 = vst [vmem:[%s668 + $0xd0] sm:$0xff] %v697
                %v699 = vld [vmem:[%s667 + $0x78] sm:$0xff]
                %700 = vst [vmem:[%s668 + $0xd8] sm:$0xff] %v699
              $region57: #{hyper_network_fc_forward.4} parent=51 // loop_footer
                %s666 = sadd.s32 1, %s662
              $region58: #{hyper_network_fc_forward.4} parent=51 // loop_footer_branch
                %661 = sbr.rel target = $region54
              $region59: #{hyper_network_fc_forward.4} parent=51 // loop_exit
                _
            $region52: #{hyper_network_fc_forward.4} parent=47 // pred_fallthru
              _
            // Predicated region
            $region60: #{hyper_network_fc_forward.4} parent=47 // pred_check
              _
            $region61: #{hyper_network_fc_forward.4} parent=47 // pred_check_branch
              %702 = sbr.rel target = $region63
            $region62: #{hyper_network_fc_forward.4} parent=47 // pred_region
              _
            $region63: #{hyper_network_fc_forward.4} parent=47 // pred_fallthru
              _
          $region48: #{hyper_network_fc_forward.4} parent=43 // pred_fallthru
            _
          %703 = vnop
        $region44: #{hyper_network_fc_forward.4} parent=31 // pred_fallthru
          _
      $region32: #{hyper_network_fc_forward.4} parent=5 // pred_fallthru
        _
      %p704 = scmp.le.s32.totalorder 2, %s12
      // Predicated region
      $region64: #{hyper_network_fc_forward.4} parent=5 // pred_check
        %p705 = pneg %p704
      $region65: #{hyper_network_fc_forward.4} parent=5 // pred_check_branch
        %707 = sbr.rel (%p705) target = $region67
      $region66: #{hyper_network_fc_forward.4} parent=5 // pred_region
        %s708 = ssub.s32 %s12, 2
        // Predicated region
        $region68: #{hyper_network_fc_forward.4} parent=66 // pred_check
          %p709 = pneg %p144
        $region69: #{hyper_network_fc_forward.4} parent=66 // pred_check_branch
          %711 = sbr.rel (%p709) target = $region71
        $region70: #{hyper_network_fc_forward.4} parent=66 // pred_region
          %s712 = sand.u32 %s129, 1
          %s713 = sand.u32 %s129, 1
          %s714 = smul.addr %s713, 128
          %s715 = scalar_lea.vmem [#allocation4], %s714
        $region71: #{hyper_network_fc_forward.4} parent=66 // pred_fallthru
          _
      $region67: #{hyper_network_fc_forward.4} parent=5 // pred_fallthru
        _
    $region6: #{hyper_network_fc_forward.4} parent=1 // loop_footer
      %s16 = sadd.s32 1, %s12
    $region7: #{hyper_network_fc_forward.4} parent=1 // loop_footer_branch
      %11 = sbr.rel target = $region3
    $region8: #{hyper_network_fc_forward.4} parent=1 // loop_exit
      _
    %716 = vsyncpa [#allocation3], 1
    %s717 = scalar_lea.sflag [#allocation3], 1
    %718 = vsyncpa %s717, 1

// kernel: hyper_network_fc_forward.6
$region0: #{hyper_network_fc_forward.6}
  #allocation0 [shape = 'u32[]', space=smem, size = 0x4, offset = 0x4, fixed_abs, tag = 'smem constant byte address 0x4 - core index']
  #allocation1 [shape = 'u32[144,128]{1,0:T(1,128)}', space=vmem, size = 0x12000, scoped, tag = 'internal scratch']
  %s0 = inlined_call_operand.vmem [shape: f32[32,160], index: 0, kind: input, shape index: {}]
  %s1 = inlined_call_operand.vmem [shape: f32[160,512], index: 1, kind: input, shape index: {}]
  %s2 = inlined_call_operand.vmem [shape: f32[1,512], index: 2, kind: input, shape index: {}]
  %s3 = inlined_call_operand.vmem [shape: f32[32,512], index: 3, kind: output, shape index: {}]
  %s4 = sld [smem:[#allocation0]]
  $region26: #{hyper_network_fc_forward.6} parent=0
    _
  %s6 = ssub.s32 1, %s4
  %s7 = scalar_select 0, %s6, %s4
  // Predicated region
  $region2: #{hyper_network_fc_forward.6} parent=0 // pred_check
    _
  $region3: #{hyper_network_fc_forward.6} parent=0 // pred_check_branch
    %9 = sbr.rel (0) target = $region5
  $region4: #{hyper_network_fc_forward.6} parent=0 // pred_region
    _
  $region5: #{hyper_network_fc_forward.6} parent=0 // pred_fallthru
    _
  // Predicated region
  $region6: #{hyper_network_fc_forward.6} parent=0 // pred_check
    _
  $region7: #{hyper_network_fc_forward.6} parent=0 // pred_check_branch
    %11 = sbr.rel (0) target = $region9
  $region8: #{hyper_network_fc_forward.6} parent=0 // pred_region
    _
  $region9: #{hyper_network_fc_forward.6} parent=0 // pred_fallthru
    _
  // Predicated region
  $region10: #{hyper_network_fc_forward.6} parent=0 // pred_check
    _
  $region11: #{hyper_network_fc_forward.6} parent=0 // pred_check_branch
    %13 = sbr.rel (0) target = $region13
  $region12: #{hyper_network_fc_forward.6} parent=0 // pred_region
    _
  $region13: #{hyper_network_fc_forward.6} parent=0 // pred_fallthru
    _
  %p14 = scmp.eq.s32.totalorder 0, 0
  // Predicated region
  $region14: #{hyper_network_fc_forward.6} parent=0 // pred_check
    %p15 = pneg %p14
  $region15: #{hyper_network_fc_forward.6} parent=0 // pred_check_branch
    %17 = sbr.rel (%p15) target = $region17
  $region16: #{hyper_network_fc_forward.6} parent=0 // pred_region
    %v18 = vld [vmem:[%s2] sm:$0xf]
    %v20 = vlaneseq
    %v21 = vshrl.u32 %v20, 7
    %v22 = vsub.s32 0, %v21
    %v23 = vrot.slane %v18, %v22
    %v24 = vlaneseq
    %v25 = vshrl.u32 %v24, 7
    %v26 = vsub.s32 1, %v25
    %v27 = vrot.slane %v18, %v26
    %v28 = vlaneseq
    %v29 = vshrl.u32 %v28, 7
    %v30 = vsub.s32 2, %v29
    %v31 = vrot.slane %v18, %v30
    %v32 = vlaneseq
    %v33 = vshrl.u32 %v32, 7
    %v34 = vsub.s32 3, %v33
    %v35 = vrot.slane %v18, %v34
    %40 = vst [vmem:[%s3] sm:$0xff] %v23
    %41 = vst [vmem:[%s3 + $0x8] sm:$0xff] %v27
    %42 = vst [vmem:[%s3 + $0x10] sm:$0xff] %v31
    %43 = vst [vmem:[%s3 + $0x18] sm:$0xff] %v35
    %44 = vst [vmem:[%s3 + $0x20] sm:$0xff] %v23
    %45 = vst [vmem:[%s3 + $0x28] sm:$0xff] %v27
    %46 = vst [vmem:[%s3 + $0x30] sm:$0xff] %v31
    %47 = vst [vmem:[%s3 + $0x38] sm:$0xff] %v35
    %48 = vst [vmem:[%s3 + $0x40] sm:$0xff] %v23
    %49 = vst [vmem:[%s3 + $0x48] sm:$0xff] %v27
    %50 = vst [vmem:[%s3 + $0x50] sm:$0xff] %v31
    %51 = vst [vmem:[%s3 + $0x58] sm:$0xff] %v35
    %52 = vst [vmem:[%s3 + $0x60] sm:$0xff] %v23
    %53 = vst [vmem:[%s3 + $0x68] sm:$0xff] %v27
    %54 = vst [vmem:[%s3 + $0x70] sm:$0xff] %v31
    %55 = vst [vmem:[%s3 + $0x78] sm:$0xff] %v35
  $region17: #{hyper_network_fc_forward.6} parent=0 // pred_fallthru
    _
  %v56 = vld [vmem:[%s3] sm:$0xff]
  %v57 = vld [vmem:[%s3 + $0x8] sm:$0xff]
  %v58 = vld [vmem:[%s3 + $0x10] sm:$0xff]
  %v59 = vld [vmem:[%s3 + $0x18] sm:$0xff]
  %v60 = vld [vmem:[%s3 + $0x20] sm:$0xff]
  %v61 = vld [vmem:[%s3 + $0x28] sm:$0xff]
  %v62 = vld [vmem:[%s3 + $0x30] sm:$0xff]
  %v63 = vld [vmem:[%s3 + $0x38] sm:$0xff]
  %v64 = vld [vmem:[%s3 + $0x40] sm:$0xff]
  %v65 = vld [vmem:[%s3 + $0x48] sm:$0xff]
  %v66 = vld [vmem:[%s3 + $0x50] sm:$0xff]
  %v67 = vld [vmem:[%s3 + $0x58] sm:$0xff]
  %v68 = vld [vmem:[%s3 + $0x60] sm:$0xff]
  %v69 = vld [vmem:[%s3 + $0x68] sm:$0xff]
  %v70 = vld [vmem:[%s3 + $0x70] sm:$0xff]
  %v71 = vld [vmem:[%s3 + $0x78] sm:$0xff]
  %v72 = vld [vmem:[%s0] sm:$0xff]
  %v73 = vld [vmem:[%s0 + $0x8] sm:$0xff]
  %v74 = vld [vmem:[%s0 + $0x10] sm:$0xff]
  %v75 = vld [vmem:[%s0 + $0x18] sm:$0xff]
  %v76 = vld [vmem:[%s0 + $0x20] sm:$0xff]
  %v77 = vld [vmem:[%s0 + $0x28] sm:$0xff]
  %v78 = vld [vmem:[%s0 + $0x30] sm:$0xff]
  %v79 = vld [vmem:[%s0 + $0x38] sm:$0xff]
  %v80 = vld [vmem:[%s1] sm:$0xff]
  %v81 = vld [vmem:[%s1 + $0x8] sm:$0xff]
  %v82 = vld [vmem:[%s1 + $0x10] sm:$0xff]
  %v83 = vld [vmem:[%s1 + $0x18] sm:$0xff]
  %v84 = vld [vmem:[%s1 + $0x20] sm:$0xff]
  %v85 = vld [vmem:[%s1 + $0x28] sm:$0xff]
  %v86 = vld [vmem:[%s1 + $0x30] sm:$0xff]
  %v87 = vld [vmem:[%s1 + $0x38] sm:$0xff]
  %v88 = vld [vmem:[%s1 + $0x40] sm:$0xff]
  %v89 = vld [vmem:[%s1 + $0x48] sm:$0xff]
  %v90 = vld [vmem:[%s1 + $0x50] sm:$0xff]
  %v91 = vld [vmem:[%s1 + $0x58] sm:$0xff]
  %v92 = vld [vmem:[%s1 + $0x60] sm:$0xff]
  %v93 = vld [vmem:[%s1 + $0x68] sm:$0xff]
  %v94 = vld [vmem:[%s1 + $0x70] sm:$0xff]
  %v95 = vld [vmem:[%s1 + $0x78] sm:$0xff]
  %v96 = vld [vmem:[%s1 + $0x80] sm:$0xff]
  %v97 = vld [vmem:[%s1 + $0x88] sm:$0xff]
  %v98 = vld [vmem:[%s1 + $0x90] sm:$0xff]
  %v99 = vld [vmem:[%s1 + $0x98] sm:$0xff]
  %v100 = vld [vmem:[%s1 + $0xa0] sm:$0xff]
  %v101 = vld [vmem:[%s1 + $0xa8] sm:$0xff]
  %v102 = vld [vmem:[%s1 + $0xb0] sm:$0xff]
  %v103 = vld [vmem:[%s1 + $0xb8] sm:$0xff]
  %v104 = vld [vmem:[%s1 + $0xc0] sm:$0xff]
  %v105 = vld [vmem:[%s1 + $0xc8] sm:$0xff]
  %v106 = vld [vmem:[%s1 + $0xd0] sm:$0xff]
  %v107 = vld [vmem:[%s1 + $0xd8] sm:$0xff]
  %v108 = vld [vmem:[%s1 + $0xe0] sm:$0xff]
  %v109 = vld [vmem:[%s1 + $0xe8] sm:$0xff]
  %v110 = vld [vmem:[%s1 + $0xf0] sm:$0xff]
  %v111 = vld [vmem:[%s1 + $0xf8] sm:$0xff]
  %v112 = vld [vmem:[%s1 + $0x100] sm:$0xff]
  %v113 = vld [vmem:[%s1 + $0x108] sm:$0xff]
  %v114 = vld [vmem:[%s1 + $0x110] sm:$0xff]
  %v115 = vld [vmem:[%s1 + $0x118] sm:$0xff]
  %v116 = vld [vmem:[%s1 + $0x120] sm:$0xff]
  %v117 = vld [vmem:[%s1 + $0x128] sm:$0xff]
  %v118 = vld [vmem:[%s1 + $0x130] sm:$0xff]
  %v119 = vld [vmem:[%s1 + $0x138] sm:$0xff]
  %v120 = vld [vmem:[%s1 + $0x140] sm:$0xff]
  %v121 = vld [vmem:[%s1 + $0x148] sm:$0xff]
  %v122 = vld [vmem:[%s1 + $0x150] sm:$0xff]
  %v123 = vld [vmem:[%s1 + $0x158] sm:$0xff]
  %v124 = vld [vmem:[%s1 + $0x160] sm:$0xff]
  %v125 = vld [vmem:[%s1 + $0x168] sm:$0xff]
  %v126 = vld [vmem:[%s1 + $0x170] sm:$0xff]
  %v127 = vld [vmem:[%s1 + $0x178] sm:$0xff]
  %v128 = vld [vmem:[%s1 + $0x180] sm:$0xff]
  %v129 = vld [vmem:[%s1 + $0x188] sm:$0xff]
  %v130 = vld [vmem:[%s1 + $0x190] sm:$0xff]
  %v131 = vld [vmem:[%s1 + $0x198] sm:$0xff]
  %v132 = vld [vmem:[%s1 + $0x1a0] sm:$0xff]
  %v133 = vld [vmem:[%s1 + $0x1a8] sm:$0xff]
  %v134 = vld [vmem:[%s1 + $0x1b0] sm:$0xff]
  %v135 = vld [vmem:[%s1 + $0x1b8] sm:$0xff]
  %v136 = vld [vmem:[%s1 + $0x1c0] sm:$0xff]
  %v137 = vld [vmem:[%s1 + $0x1c8] sm:$0xff]
  %v138 = vld [vmem:[%s1 + $0x1d0] sm:$0xff]
  %v139 = vld [vmem:[%s1 + $0x1d8] sm:$0xff]
  %v140 = vld [vmem:[%s1 + $0x1e0] sm:$0xff]
  %v141 = vld [vmem:[%s1 + $0x1e8] sm:$0xff]
  %v142 = vld [vmem:[%s1 + $0x1f0] sm:$0xff]
  %v143 = vld [vmem:[%s1 + $0x1f8] sm:$0xff]
  %v144 = vld [vmem:[%s1 + $0x200] sm:$0xff]
  %v145 = vld [vmem:[%s1 + $0x208] sm:$0xff]
  %v146 = vld [vmem:[%s1 + $0x210] sm:$0xff]
  %v147 = vld [vmem:[%s1 + $0x218] sm:$0xff]
  %v148 = vld [vmem:[%s1 + $0x220] sm:$0xff]
  %v149 = vld [vmem:[%s1 + $0x228] sm:$0xff]
  %v150 = vld [vmem:[%s1 + $0x230] sm:$0xff]
  %v151 = vld [vmem:[%s1 + $0x238] sm:$0xff]
  %v152 = vld [vmem:[%s1 + $0x240] sm:$0xff]
  %v153 = vld [vmem:[%s1 + $0x248] sm:$0xff]
  %v154 = vld [vmem:[%s1 + $0x250] sm:$0xff]
  %v155 = vld [vmem:[%s1 + $0x258] sm:$0xff]
  %v156 = vld [vmem:[%s1 + $0x260] sm:$0xff]
  %v157 = vld [vmem:[%s1 + $0x268] sm:$0xff]
  %v158 = vld [vmem:[%s1 + $0x270] sm:$0xff]
  %v159 = vld [vmem:[%s1 + $0x278] sm:$0xff]
  %vm160 = vcmask 261120
  %v162 = vsel %vm160, %v73, 0
  %v165 = vsel %vm160, %v75, 0
  %v168 = vsel %vm160, %v77, 0
  %v171 = vsel %vm160, %v79, 0
  %173 = vmatprep.subr.mxu0 %v141
  %174 = vmatpush1.msra.mxu0 %v140
  %175 = vmatprep.subr.mxu0 %v137
  %176 = vmatpush1.msra.mxu0 %v136
  %177 = vmatprep.subr.mxu0 %v133
  %178 = vmatpush1.msra.mxu0 %v132
  %179 = vmatprep.subr.mxu0 %v129
  %180 = vmatpush1.msra.mxu0 %v128
  %181 = vmatprep.subr.mxu0 %v125
  %182 = vmatpush1.msra.mxu0 %v124
  %183 = vmatprep.subr.mxu0 %v121
  %184 = vmatpush1.msra.mxu0 %v120
  %185 = vmatprep.subr.mxu0 %v117
  %186 = vmatpush1.msra.mxu0 %v116
  %187 = vmatprep.subr.mxu0 %v113
  %188 = vmatpush1.msra.mxu0 %v112
  %189 = vmatprep.subr.mxu0 %v109
  %190 = vmatpush1.msra.mxu0 %v108
  %191 = vmatprep.subr.mxu0 %v105
  %192 = vmatpush1.msra.mxu0 %v104
  %193 = vmatprep.subr.mxu0 %v101
  %194 = vmatpush1.msra.mxu0 %v100
  %195 = vmatprep.subr.mxu0 %v97
  %196 = vmatpush1.msra.mxu0 %v96
  %197 = vmatprep.subr.mxu0 %v93
  %198 = vmatpush1.msra.mxu0 %v92
  %199 = vmatprep.subr.mxu0 %v89
  %200 = vmatpush1.msra.mxu0 %v88
  %201 = vmatprep.subr.mxu0 %v85
  %202 = vmatpush1.msra.mxu0 %v84
  %203 = vmatprep.subr.mxu0 %v81
  %204 = vmatpush1.msra.mxu0 %v80
  %205 = vmatprep.subr.mxu0 0.0
  %206 = vmatpush2.msra.mxu0 0.0
  %207 = vmatprep.subr.mxu0 0.0
  %208 = vmatpush2.msra.mxu0 0.0
  %209 = vmatprep.subr.mxu0 0.0
  %210 = vmatpush2.msra.mxu0 0.0
  %211 = vmatprep.subr.mxu0 0.0
  %212 = vmatpush2.msra.mxu0 0.0
  %213 = vmatprep.subr.mxu0 0.0
  %214 = vmatpush2.msra.mxu0 0.0
  %215 = vmatprep.subr.mxu0 0.0
  %216 = vmatpush2.msra.mxu0 0.0
  %217 = vmatprep.subr.mxu0 0.0
  %218 = vmatpush2.msra.mxu0 0.0
  %219 = vmatprep.subr.mxu0 0.0
  %220 = vmatpush2.msra.mxu0 0.0
  %221 = vmatprep.subr.mxu0 0.0
  %222 = vmatpush2.msra.mxu0 0.0
  %223 = vmatprep.subr.mxu0 0.0
  %224 = vmatpush2.msra.mxu0 0.0
  %225 = vmatprep.subr.mxu0 0.0
  %226 = vmatpush2.msra.mxu0 0.0
  %227 = vmatprep.subr.mxu0 0.0
  %228 = vmatpush2.msra.mxu0 0.0
  %229 = vmatprep.subr.mxu0 %v157
  %230 = vmatpush2.msra.mxu0 %v156
  %231 = vmatprep.subr.mxu0 %v153
  %232 = vmatpush2.msra.mxu0 %v152
  %233 = vmatprep.subr.mxu0 %v149
  %234 = vmatpush2.msra.mxu0 %v148
  %235 = vmatprep.subr.mxu0 %v145
  %236 = vmatpush2.msra.mxu0 %v144
  %237 = vmatprep.mubr.f32.mxu0 %v162
  %238 = vmatmul.mubr.f32.gmra.mxu0 %v72
  %v239 = vpop.f32.mrf.mxu0
  %v240 = vadd.f32 0.0, %v239
  %v241 = vpop.f32.mrf.mxu0
  %v242 = vadd.f32 0.0, %v241
  %243 = vmatprep.mubr.f32.mxu0 %v165
  %244 = vmatmul.mubr.f32.gmra.mxu0 %v74
  %v245 = vpop.f32.mrf.mxu0
  %v246 = vadd.f32 0.0, %v245
  %v247 = vpop.f32.mrf.mxu0
  %v248 = vadd.f32 0.0, %v247
  %249 = vmatprep.mubr.f32.mxu0 %v168
  %250 = vmatmul.mubr.f32.gmra.mxu0 %v76
  %v251 = vpop.f32.mrf.mxu0
  %v252 = vadd.f32 0.0, %v251
  %v253 = vpop.f32.mrf.mxu0
  %v254 = vadd.f32 0.0, %v253
  %255 = vmatprep.mubr.f32.mxu0 %v171
  %256 = vmatmul.mubr.f32.gmra.mxu0 %v78
  %v257 = vpop.f32.mrf.mxu0
  %v258 = vadd.f32 0.0, %v257
  %v259 = vpop.f32.mrf.mxu0
  %v260 = vadd.f32 0.0, %v259
  %261 = vdwg.mxu0
  %262 = vmatprep.subr.mxu0 %v143
  %263 = vmatpush1.msra.mxu0 %v142
  %264 = vmatprep.subr.mxu0 %v139
  %265 = vmatpush1.msra.mxu0 %v138
  %266 = vmatprep.subr.mxu0 %v135
  %267 = vmatpush1.msra.mxu0 %v134
  %268 = vmatprep.subr.mxu0 %v131
  %269 = vmatpush1.msra.mxu0 %v130
  %270 = vmatprep.subr.mxu0 %v127
  %271 = vmatpush1.msra.mxu0 %v126
  %272 = vmatprep.subr.mxu0 %v123
  %273 = vmatpush1.msra.mxu0 %v122
  %274 = vmatprep.subr.mxu0 %v119
  %275 = vmatpush1.msra.mxu0 %v118
  %276 = vmatprep.subr.mxu0 %v115
  %277 = vmatpush1.msra.mxu0 %v114
  %278 = vmatprep.subr.mxu0 %v111
  %279 = vmatpush1.msra.mxu0 %v110
  %280 = vmatprep.subr.mxu0 %v107
  %281 = vmatpush1.msra.mxu0 %v106
  %282 = vmatprep.subr.mxu0 %v103
  %283 = vmatpush1.msra.mxu0 %v102
  %284 = vmatprep.subr.mxu0 %v99
  %285 = vmatpush1.msra.mxu0 %v98
  %286 = vmatprep.subr.mxu0 %v95
  %287 = vmatpush1.msra.mxu0 %v94
  %288 = vmatprep.subr.mxu0 %v91
  %289 = vmatpush1.msra.mxu0 %v90
  %290 = vmatprep.subr.mxu0 %v87
  %291 = vmatpush1.msra.mxu0 %v86
  %292 = vmatprep.subr.mxu0 %v83
  %293 = vmatpush1.msra.mxu0 %v82
  %294 = vmatprep.subr.mxu0 0.0
  %295 = vmatpush2.msra.mxu0 0.0
  %296 = vmatprep.subr.mxu0 0.0
  %297 = vmatpush2.msra.mxu0 0.0
  %298 = vmatprep.subr.mxu0 0.0
  %299 = vmatpush2.msra.mxu0 0.0
  %300 = vmatprep.subr.mxu0 0.0
  %301 = vmatpush2.msra.mxu0 0.0
  %302 = vmatprep.subr.mxu0 0.0
  %303 = vmatpush2.msra.mxu0 0.0
  %304 = vmatprep.subr.mxu0 0.0
  %305 = vmatpush2.msra.mxu0 0.0
  %306 = vmatprep.subr.mxu0 0.0
  %307 = vmatpush2.msra.mxu0 0.0
  %308 = vmatprep.subr.mxu0 0.0
  %309 = vmatpush2.msra.mxu0 0.0
  %310 = vmatprep.subr.mxu0 0.0
  %311 = vmatpush2.msra.mxu0 0.0
  %312 = vmatprep.subr.mxu0 0.0
  %313 = vmatpush2.msra.mxu0 0.0
  %314 = vmatprep.subr.mxu0 0.0
  %315 = vmatpush2.msra.mxu0 0.0
  %316 = vmatprep.subr.mxu0 0.0
  %317 = vmatpush2.msra.mxu0 0.0
  %318 = vmatprep.subr.mxu0 %v159
  %319 = vmatpush2.msra.mxu0 %v158
  %320 = vmatprep.subr.mxu0 %v155
  %321 = vmatpush2.msra.mxu0 %v154
  %322 = vmatprep.subr.mxu0 %v151
  %323 = vmatpush2.msra.mxu0 %v150
  %324 = vmatprep.subr.mxu0 %v147
  %325 = vmatpush2.msra.mxu0 %v146
  %326 = vmatprep.mubr.f32.mxu0 %v162
  %327 = vmatmul.mubr.f32.gmra.mxu0 %v72
  %v328 = vpop.f32.mrf.mxu0
  %v329 = vadd.f32 0.0, %v328
  %v330 = vpop.f32.mrf.mxu0
  %v331 = vadd.f32 0.0, %v330
  %332 = vmatprep.mubr.f32.mxu0 %v165
  %333 = vmatmul.mubr.f32.gmra.mxu0 %v74
  %v334 = vpop.f32.mrf.mxu0
  %v335 = vadd.f32 0.0, %v334
  %v336 = vpop.f32.mrf.mxu0
  %v337 = vadd.f32 0.0, %v336
  %338 = vmatprep.mubr.f32.mxu0 %v168
  %339 = vmatmul.mubr.f32.gmra.mxu0 %v76
  %v340 = vpop.f32.mrf.mxu0
  %v341 = vadd.f32 0.0, %v340
  %v342 = vpop.f32.mrf.mxu0
  %v343 = vadd.f32 0.0, %v342
  %344 = vmatprep.mubr.f32.mxu0 %v171
  %345 = vmatmul.mubr.f32.gmra.mxu0 %v78
  %v346 = vpop.f32.mrf.mxu0
  %v347 = vadd.f32 0.0, %v346
  %v348 = vpop.f32.mrf.mxu0
  %v349 = vadd.f32 0.0, %v348
  %350 = vdwg.mxu0
  %v351 = vadd.f32 %v56, %v240
  %v352 = vadd.f32 %v57, %v242
  %v353 = vadd.f32 %v58, %v329
  %v354 = vadd.f32 %v59, %v331
  %v355 = vadd.f32 %v60, %v246
  %v356 = vadd.f32 %v61, %v248
  %v357 = vadd.f32 %v62, %v335
  %v358 = vadd.f32 %v63, %v337
  %v359 = vadd.f32 %v64, %v252
  %v360 = vadd.f32 %v65, %v254
  %v361 = vadd.f32 %v66, %v341
  %v362 = vadd.f32 %v67, %v343
  %v363 = vadd.f32 %v68, %v258
  %v364 = vadd.f32 %v69, %v260
  %v365 = vadd.f32 %v70, %v347
  %v366 = vadd.f32 %v71, %v349
  %367 = vst [vmem:[%s3] sm:$0xff] %v351
  %368 = vst [vmem:[%s3 + $0x8] sm:$0xff] %v352
  %369 = vst [vmem:[%s3 + $0x10] sm:$0xff] %v353
  %370 = vst [vmem:[%s3 + $0x18] sm:$0xff] %v354
  %371 = vst [vmem:[%s3 + $0x20] sm:$0xff] %v355
  %372 = vst [vmem:[%s3 + $0x28] sm:$0xff] %v356
  %373 = vst [vmem:[%s3 + $0x30] sm:$0xff] %v357
  %374 = vst [vmem:[%s3 + $0x38] sm:$0xff] %v358
  %375 = vst [vmem:[%s3 + $0x40] sm:$0xff] %v359
  %376 = vst [vmem:[%s3 + $0x48] sm:$0xff] %v360
  %377 = vst [vmem:[%s3 + $0x50] sm:$0xff] %v361
  %378 = vst [vmem:[%s3 + $0x58] sm:$0xff] %v362
  %379 = vst [vmem:[%s3 + $0x60] sm:$0xff] %v363
  %380 = vst [vmem:[%s3 + $0x68] sm:$0xff] %v364
  %381 = vst [vmem:[%s3 + $0x70] sm:$0xff] %v365
  %382 = vst [vmem:[%s3 + $0x78] sm:$0xff] %v366
  // Predicated region
  $region18: #{hyper_network_fc_forward.6} parent=0 // pred_check
    _
  $region19: #{hyper_network_fc_forward.6} parent=0 // pred_check_branch
    %384 = sbr.rel (0) target = $region21
  $region20: #{hyper_network_fc_forward.6} parent=0 // pred_region
    _
  $region21: #{hyper_network_fc_forward.6} parent=0 // pred_fallthru
    _
  // Predicated region
  $region22: #{hyper_network_fc_forward.6} parent=0 // pred_check
    _
  $region23: #{hyper_network_fc_forward.6} parent=0 // pred_check_branch
    %386 = sbr.rel (0) target = $region25
  $region24: #{hyper_network_fc_forward.6} parent=0 // pred_region
    _
  $region25: #{hyper_network_fc_forward.6} parent=0 // pred_fallthru
    _

// kernel: hyper_network_fc_forward.5
$region0: #{hyper_network_fc_forward.5}
  #allocation0 [shape = 'u32[]', space=smem, size = 0x4, offset = 0x4, fixed_abs, tag = 'smem constant byte address 0x4 - core index']
  #allocation1 [shape = 'u32[144,128]{1,0:T(1,128)}', space=vmem, size = 0x12000, scoped, tag = 'internal scratch']
  %s0 = inlined_call_operand.vmem [shape: f32[32,32,1], index: 0, kind: input, shape index: {}]
  %s1 = inlined_call_operand.vmem [shape: f32[32,32,32], index: 1, kind: input, shape index: {}]
  %s2 = inlined_call_operand.vmem [shape: f32[32,160], index: 2, kind: input, shape index: {}]
  %s3 = inlined_call_operand.vmem [shape: f32[160,32], index: 3, kind: input, shape index: {}]
  %s4 = inlined_call_operand.vmem [shape: f32[1,32], index: 4, kind: input, shape index: {}]
  %s5 = inlined_call_operand.vmem [shape: f32[32,32], index: 5, kind: output, shape index: {}]
  %s6 = sld [smem:[#allocation0]]
  $region30: #{hyper_network_fc_forward.5} parent=0
    _
  %s8 = ssub.s32 1, %s6
  %s9 = scalar_select 0, %s8, %s6
  // Predicated region
  $region2: #{hyper_network_fc_forward.5} parent=0 // pred_check
    _
  $region3: #{hyper_network_fc_forward.5} parent=0 // pred_check_branch
    %11 = sbr.rel (0) target = $region5
  $region4: #{hyper_network_fc_forward.5} parent=0 // pred_region
    _
  $region5: #{hyper_network_fc_forward.5} parent=0 // pred_fallthru
    _
  // Predicated region
  $region6: #{hyper_network_fc_forward.5} parent=0 // pred_check
    _
  $region7: #{hyper_network_fc_forward.5} parent=0 // pred_check_branch
    %13 = sbr.rel (0) target = $region9
  $region8: #{hyper_network_fc_forward.5} parent=0 // pred_region
    _
  $region9: #{hyper_network_fc_forward.5} parent=0 // pred_fallthru
    _
  // Predicated region
  $region10: #{hyper_network_fc_forward.5} parent=0 // pred_check
    _
  $region11: #{hyper_network_fc_forward.5} parent=0 // pred_check_branch
    %15 = sbr.rel (0) target = $region13
  $region12: #{hyper_network_fc_forward.5} parent=0 // pred_region
    _
  $region13: #{hyper_network_fc_forward.5} parent=0 // pred_fallthru
    _
  // Predicated region
  $region14: #{hyper_network_fc_forward.5} parent=0 // pred_check
    _
  $region15: #{hyper_network_fc_forward.5} parent=0 // pred_check_branch
    %17 = sbr.rel (0) target = $region17
  $region16: #{hyper_network_fc_forward.5} parent=0 // pred_region
    _
  $region17: #{hyper_network_fc_forward.5} parent=0 // pred_fallthru
    _
  // Predicated region
  $region18: #{hyper_network_fc_forward.5} parent=0 // pred_check
    _
  $region19: #{hyper_network_fc_forward.5} parent=0 // pred_check_branch
    %19 = sbr.rel (0) target = $region21
  $region20: #{hyper_network_fc_forward.5} parent=0 // pred_region
    _
  $region21: #{hyper_network_fc_forward.5} parent=0 // pred_fallthru
    _
  %v20 = vld [vmem:[%s0] sm:$0xff]
  %v21 = vld [vmem:[%s0 + $0x8] sm:$0xff]
  %v22 = vld [vmem:[%s0 + $0x10] sm:$0xff]
  %v23 = vld [vmem:[%s0 + $0x18] sm:$0xff]
  %v24 = vld [vmem:[%s0 + $0x20] sm:$0xff]
  %v25 = vld [vmem:[%s0 + $0x28] sm:$0xff]
  %v26 = vld [vmem:[%s0 + $0x30] sm:$0xff]
  %v27 = vld [vmem:[%s0 + $0x38] sm:$0xff]
  %v28 = vld [vmem:[%s0 + $0x40] sm:$0xff]
  %v29 = vld [vmem:[%s0 + $0x48] sm:$0xff]
  %v30 = vld [vmem:[%s0 + $0x50] sm:$0xff]
  %v31 = vld [vmem:[%s0 + $0x58] sm:$0xff]
  %v32 = vld [vmem:[%s0 + $0x60] sm:$0xff]
  %v33 = vld [vmem:[%s0 + $0x68] sm:$0xff]
  %v34 = vld [vmem:[%s0 + $0x70] sm:$0xff]
  %v35 = vld [vmem:[%s0 + $0x78] sm:$0xff]
  %v36 = vld [vmem:[%s0 + $0x80] sm:$0xff]
  %v37 = vld [vmem:[%s0 + $0x88] sm:$0xff]
  %v38 = vld [vmem:[%s0 + $0x90] sm:$0xff]
  %v39 = vld [vmem:[%s0 + $0x98] sm:$0xff]
  %v40 = vld [vmem:[%s0 + $0xa0] sm:$0xff]
  %v41 = vld [vmem:[%s0 + $0xa8] sm:$0xff]
  %v42 = vld [vmem:[%s0 + $0xb0] sm:$0xff]
  %v43 = vld [vmem:[%s0 + $0xb8] sm:$0xff]
  %v44 = vld [vmem:[%s0 + $0xc0] sm:$0xff]
  %v45 = vld [vmem:[%s0 + $0xc8] sm:$0xff]
  %v46 = vld [vmem:[%s0 + $0xd0] sm:$0xff]
  %v47 = vld [vmem:[%s0 + $0xd8] sm:$0xff]
  %v48 = vld [vmem:[%s0 + $0xe0] sm:$0xff]
  %v49 = vld [vmem:[%s0 + $0xe8] sm:$0xff]
  %v50 = vld [vmem:[%s0 + $0xf0] sm:$0xff]
  %v51 = vld [vmem:[%s0 + $0xf8] sm:$0xff]
  %v52 = vld [vmem:[%s0 + $0x100] sm:$0xff]
  %v53 = vld [vmem:[%s0 + $0x108] sm:$0xff]
  %v54 = vld [vmem:[%s0 + $0x110] sm:$0xff]
  %v55 = vld [vmem:[%s0 + $0x118] sm:$0xff]
  %v56 = vld [vmem:[%s0 + $0x120] sm:$0xff]
  %v57 = vld [vmem:[%s0 + $0x128] sm:$0xff]
  %v58 = vld [vmem:[%s0 + $0x130] sm:$0xff]
  %v59 = vld [vmem:[%s0 + $0x138] sm:$0xff]
  %v60 = vld [vmem:[%s0 + $0x140] sm:$0xff]
  %v61 = vld [vmem:[%s0 + $0x148] sm:$0xff]
  %v62 = vld [vmem:[%s0 + $0x150] sm:$0xff]
  %v63 = vld [vmem:[%s0 + $0x158] sm:$0xff]
  %v64 = vld [vmem:[%s0 + $0x160] sm:$0xff]
  %v65 = vld [vmem:[%s0 + $0x168] sm:$0xff]
  %v66 = vld [vmem:[%s0 + $0x170] sm:$0xff]
  %v67 = vld [vmem:[%s0 + $0x178] sm:$0xff]
  %v68 = vld [vmem:[%s0 + $0x180] sm:$0xff]
  %v69 = vld [vmem:[%s0 + $0x188] sm:$0xff]
  %v70 = vld [vmem:[%s0 + $0x190] sm:$0xff]
  %v71 = vld [vmem:[%s0 + $0x198] sm:$0xff]
  %v72 = vld [vmem:[%s0 + $0x1a0] sm:$0xff]
  %v73 = vld [vmem:[%s0 + $0x1a8] sm:$0xff]
  %v74 = vld [vmem:[%s0 + $0x1b0] sm:$0xff]
  %v75 = vld [vmem:[%s0 + $0x1b8] sm:$0xff]
  %v76 = vld [vmem:[%s0 + $0x1c0] sm:$0xff]
  %v77 = vld [vmem:[%s0 + $0x1c8] sm:$0xff]
  %v78 = vld [vmem:[%s0 + $0x1d0] sm:$0xff]
  %v79 = vld [vmem:[%s0 + $0x1d8] sm:$0xff]
  %v80 = vld [vmem:[%s0 + $0x1e0] sm:$0xff]
  %v81 = vld [vmem:[%s0 + $0x1e8] sm:$0xff]
  %v82 = vld [vmem:[%s0 + $0x1f0] sm:$0xff]
  %v83 = vld [vmem:[%s0 + $0x1f8] sm:$0xff]
  %v84 = vld [vmem:[%s0 + $0x200] sm:$0xff]
  %v85 = vld [vmem:[%s0 + $0x208] sm:$0xff]
  %v86 = vld [vmem:[%s0 + $0x210] sm:$0xff]
  %v87 = vld [vmem:[%s0 + $0x218] sm:$0xff]
  %v88 = vld [vmem:[%s0 + $0x220] sm:$0xff]
  %v89 = vld [vmem:[%s0 + $0x228] sm:$0xff]
  %v90 = vld [vmem:[%s0 + $0x230] sm:$0xff]
  %v91 = vld [vmem:[%s0 + $0x238] sm:$0xff]
  %v92 = vld [vmem:[%s0 + $0x240] sm:$0xff]
  %v93 = vld [vmem:[%s0 + $0x248] sm:$0xff]
  %v94 = vld [vmem:[%s0 + $0x250] sm:$0xff]
  %v95 = vld [vmem:[%s0 + $0x258] sm:$0xff]
  %v96 = vld [vmem:[%s0 + $0x260] sm:$0xff]
  %v97 = vld [vmem:[%s0 + $0x268] sm:$0xff]
  %v98 = vld [vmem:[%s0 + $0x270] sm:$0xff]
  %v99 = vld [vmem:[%s0 + $0x278] sm:$0xff]
  %v100 = vld [vmem:[%s0 + $0x280] sm:$0xff]
  %v101 = vld [vmem:[%s0 + $0x288] sm:$0xff]
  %v102 = vld [vmem:[%s0 + $0x290] sm:$0xff]
  %v103 = vld [vmem:[%s0 + $0x298] sm:$0xff]
  %v104 = vld [vmem:[%s0 + $0x2a0] sm:$0xff]
  %v105 = vld [vmem:[%s0 + $0x2a8] sm:$0xff]
  %v106 = vld [vmem:[%s0 + $0x2b0] sm:$0xff]
  %v107 = vld [vmem:[%s0 + $0x2b8] sm:$0xff]
  %v108 = vld [vmem:[%s0 + $0x2c0] sm:$0xff]
  %v109 = vld [vmem:[%s0 + $0x2c8] sm:$0xff]
  %v110 = vld [vmem:[%s0 + $0x2d0] sm:$0xff]
  %v111 = vld [vmem:[%s0 + $0x2d8] sm:$0xff]
  %v112 = vld [vmem:[%s0 + $0x2e0] sm:$0xff]
  %v113 = vld [vmem:[%s0 + $0x2e8] sm:$0xff]
  %v114 = vld [vmem:[%s0 + $0x2f0] sm:$0xff]
  %v115 = vld [vmem:[%s0 + $0x2f8] sm:$0xff]
  %v116 = vld [vmem:[%s0 + $0x300] sm:$0xff]
  %v117 = vld [vmem:[%s0 + $0x308] sm:$0xff]
  %v118 = vld [vmem:[%s0 + $0x310] sm:$0xff]
  %v119 = vld [vmem:[%s0 + $0x318] sm:$0xff]
  %v120 = vld [vmem:[%s0 + $0x320] sm:$0xff]
  %v121 = vld [vmem:[%s0 + $0x328] sm:$0xff]
  %v122 = vld [vmem:[%s0 + $0x330] sm:$0xff]
  %v123 = vld [vmem:[%s0 + $0x338] sm:$0xff]
  %v124 = vld [vmem:[%s0 + $0x340] sm:$0xff]
  %v125 = vld [vmem:[%s0 + $0x348] sm:$0xff]
  %v126 = vld [vmem:[%s0 + $0x350] sm:$0xff]
  %v127 = vld [vmem:[%s0 + $0x358] sm:$0xff]
  %v128 = vld [vmem:[%s0 + $0x360] sm:$0xff]
  %v129 = vld [vmem:[%s0 + $0x368] sm:$0xff]
  %v130 = vld [vmem:[%s0 + $0x370] sm:$0xff]
  %v131 = vld [vmem:[%s0 + $0x378] sm:$0xff]
  %v132 = vld [vmem:[%s0 + $0x380] sm:$0xff]
  %v133 = vld [vmem:[%s0 + $0x388] sm:$0xff]
  %v134 = vld [vmem:[%s0 + $0x390] sm:$0xff]
  %v135 = vld [vmem:[%s0 + $0x398] sm:$0xff]
  %v136 = vld [vmem:[%s0 + $0x3a0] sm:$0xff]
  %v137 = vld [vmem:[%s0 + $0x3a8] sm:$0xff]
  %v138 = vld [vmem:[%s0 + $0x3b0] sm:$0xff]
  %v139 = vld [vmem:[%s0 + $0x3b8] sm:$0xff]
  %v140 = vld [vmem:[%s0 + $0x3c0] sm:$0xff]
  %v141 = vld [vmem:[%s0 + $0x3c8] sm:$0xff]
  %v142 = vld [vmem:[%s0 + $0x3d0] sm:$0xff]
  %v143 = vld [vmem:[%s0 + $0x3d8] sm:$0xff]
  %v144 = vld [vmem:[%s0 + $0x3e0] sm:$0xff]
  %v145 = vld [vmem:[%s0 + $0x3e8] sm:$0xff]
  %v146 = vld [vmem:[%s0 + $0x3f0] sm:$0xff]
  %v147 = vld [vmem:[%s0 + $0x3f8] sm:$0xff]
  %v148 = vld [vmem:[%s1] sm:$0xff]
  %v149 = vld [vmem:[%s1 + $0x8] sm:$0xff]
  %v150 = vld [vmem:[%s1 + $0x10] sm:$0xff]
  %v151 = vld [vmem:[%s1 + $0x18] sm:$0xff]
  %v152 = vld [vmem:[%s1 + $0x20] sm:$0xff]
  %v153 = vld [vmem:[%s1 + $0x28] sm:$0xff]
  %v154 = vld [vmem:[%s1 + $0x30] sm:$0xff]
  %v155 = vld [vmem:[%s1 + $0x38] sm:$0xff]
  %v156 = vld [vmem:[%s1 + $0x40] sm:$0xff]
  %v157 = vld [vmem:[%s1 + $0x48] sm:$0xff]
  %v158 = vld [vmem:[%s1 + $0x50] sm:$0xff]
  %v159 = vld [vmem:[%s1 + $0x58] sm:$0xff]
  %v160 = vld [vmem:[%s1 + $0x60] sm:$0xff]
  %v161 = vld [vmem:[%s1 + $0x68] sm:$0xff]
  %v162 = vld [vmem:[%s1 + $0x70] sm:$0xff]
  %v163 = vld [vmem:[%s1 + $0x78] sm:$0xff]
  %v164 = vld [vmem:[%s1 + $0x80] sm:$0xff]
  %v165 = vld [vmem:[%s1 + $0x88] sm:$0xff]
  %v166 = vld [vmem:[%s1 + $0x90] sm:$0xff]
  %v167 = vld [vmem:[%s1 + $0x98] sm:$0xff]
  %v168 = vld [vmem:[%s1 + $0xa0] sm:$0xff]
  %v169 = vld [vmem:[%s1 + $0xa8] sm:$0xff]
  %v170 = vld [vmem:[%s1 + $0xb0] sm:$0xff]
  %v171 = vld [vmem:[%s1 + $0xb8] sm:$0xff]
  %v172 = vld [vmem:[%s1 + $0xc0] sm:$0xff]
  %v173 = vld [vmem:[%s1 + $0xc8] sm:$0xff]
  %v174 = vld [vmem:[%s1 + $0xd0] sm:$0xff]
  %v175 = vld [vmem:[%s1 + $0xd8] sm:$0xff]
  %v176 = vld [vmem:[%s1 + $0xe0] sm:$0xff]
  %v177 = vld [vmem:[%s1 + $0xe8] sm:$0xff]
  %v178 = vld [vmem:[%s1 + $0xf0] sm:$0xff]
  %v179 = vld [vmem:[%s1 + $0xf8] sm:$0xff]
  %v180 = vld [vmem:[%s1 + $0x100] sm:$0xff]
  %v181 = vld [vmem:[%s1 + $0x108] sm:$0xff]
  %v182 = vld [vmem:[%s1 + $0x110] sm:$0xff]
  %v183 = vld [vmem:[%s1 + $0x118] sm:$0xff]
  %v184 = vld [vmem:[%s1 + $0x120] sm:$0xff]
  %v185 = vld [vmem:[%s1 + $0x128] sm:$0xff]
  %v186 = vld [vmem:[%s1 + $0x130] sm:$0xff]
  %v187 = vld [vmem:[%s1 + $0x138] sm:$0xff]
  %v188 = vld [vmem:[%s1 + $0x140] sm:$0xff]
  %v189 = vld [vmem:[%s1 + $0x148] sm:$0xff]
  %v190 = vld [vmem:[%s1 + $0x150] sm:$0xff]
  %v191 = vld [vmem:[%s1 + $0x158] sm:$0xff]
  %v192 = vld [vmem:[%s1 + $0x160] sm:$0xff]
  %v193 = vld [vmem:[%s1 + $0x168] sm:$0xff]
  %v194 = vld [vmem:[%s1 + $0x170] sm:$0xff]
  %v195 = vld [vmem:[%s1 + $0x178] sm:$0xff]
  %v196 = vld [vmem:[%s1 + $0x180] sm:$0xff]
  %v197 = vld [vmem:[%s1 + $0x188] sm:$0xff]
  %v198 = vld [vmem:[%s1 + $0x190] sm:$0xff]
  %v199 = vld [vmem:[%s1 + $0x198] sm:$0xff]
  %v200 = vld [vmem:[%s1 + $0x1a0] sm:$0xff]
  %v201 = vld [vmem:[%s1 + $0x1a8] sm:$0xff]
  %v202 = vld [vmem:[%s1 + $0x1b0] sm:$0xff]
  %v203 = vld [vmem:[%s1 + $0x1b8] sm:$0xff]
  %v204 = vld [vmem:[%s1 + $0x1c0] sm:$0xff]
  %v205 = vld [vmem:[%s1 + $0x1c8] sm:$0xff]
  %v206 = vld [vmem:[%s1 + $0x1d0] sm:$0xff]
  %v207 = vld [vmem:[%s1 + $0x1d8] sm:$0xff]
  %v208 = vld [vmem:[%s1 + $0x1e0] sm:$0xff]
  %v209 = vld [vmem:[%s1 + $0x1e8] sm:$0xff]
  %v210 = vld [vmem:[%s1 + $0x1f0] sm:$0xff]
  %v211 = vld [vmem:[%s1 + $0x1f8] sm:$0xff]
  %v212 = vld [vmem:[%s1 + $0x200] sm:$0xff]
  %v213 = vld [vmem:[%s1 + $0x208] sm:$0xff]
  %v214 = vld [vmem:[%s1 + $0x210] sm:$0xff]
  %v215 = vld [vmem:[%s1 + $0x218] sm:$0xff]
  %v216 = vld [vmem:[%s1 + $0x220] sm:$0xff]
  %v217 = vld [vmem:[%s1 + $0x228] sm:$0xff]
  %v218 = vld [vmem:[%s1 + $0x230] sm:$0xff]
  %v219 = vld [vmem:[%s1 + $0x238] sm:$0xff]
  %v220 = vld [vmem:[%s1 + $0x240] sm:$0xff]
  %v221 = vld [vmem:[%s1 + $0x248] sm:$0xff]
  %v222 = vld [vmem:[%s1 + $0x250] sm:$0xff]
  %v223 = vld [vmem:[%s1 + $0x258] sm:$0xff]
  %v224 = vld [vmem:[%s1 + $0x260] sm:$0xff]
  %v225 = vld [vmem:[%s1 + $0x268] sm:$0xff]
  %v226 = vld [vmem:[%s1 + $0x270] sm:$0xff]
  %v227 = vld [vmem:[%s1 + $0x278] sm:$0xff]
  %v228 = vld [vmem:[%s1 + $0x280] sm:$0xff]
  %v229 = vld [vmem:[%s1 + $0x288] sm:$0xff]
  %v230 = vld [vmem:[%s1 + $0x290] sm:$0xff]
  %v231 = vld [vmem:[%s1 + $0x298] sm:$0xff]
  %v232 = vld [vmem:[%s1 + $0x2a0] sm:$0xff]
  %v233 = vld [vmem:[%s1 + $0x2a8] sm:$0xff]
  %v234 = vld [vmem:[%s1 + $0x2b0] sm:$0xff]
  %v235 = vld [vmem:[%s1 + $0x2b8] sm:$0xff]
  %v236 = vld [vmem:[%s1 + $0x2c0] sm:$0xff]
  %v237 = vld [vmem:[%s1 + $0x2c8] sm:$0xff]
  %v238 = vld [vmem:[%s1 + $0x2d0] sm:$0xff]
  %v239 = vld [vmem:[%s1 + $0x2d8] sm:$0xff]
  %v240 = vld [vmem:[%s1 + $0x2e0] sm:$0xff]
  %v241 = vld [vmem:[%s1 + $0x2e8] sm:$0xff]
  %v242 = vld [vmem:[%s1 + $0x2f0] sm:$0xff]
  %v243 = vld [vmem:[%s1 + $0x2f8] sm:$0xff]
  %v244 = vld [vmem:[%s1 + $0x300] sm:$0xff]
  %v245 = vld [vmem:[%s1 + $0x308] sm:$0xff]
  %v246 = vld [vmem:[%s1 + $0x310] sm:$0xff]
  %v247 = vld [vmem:[%s1 + $0x318] sm:$0xff]
  %v248 = vld [vmem:[%s1 + $0x320] sm:$0xff]
  %v249 = vld [vmem:[%s1 + $0x328] sm:$0xff]
  %v250 = vld [vmem:[%s1 + $0x330] sm:$0xff]
  %v251 = vld [vmem:[%s1 + $0x338] sm:$0xff]
  %v252 = vld [vmem:[%s1 + $0x340] sm:$0xff]
  %v253 = vld [vmem:[%s1 + $0x348] sm:$0xff]
  %v254 = vld [vmem:[%s1 + $0x350] sm:$0xff]
  %v255 = vld [vmem:[%s1 + $0x358] sm:$0xff]
  %v256 = vld [vmem:[%s1 + $0x360] sm:$0xff]
  %v257 = vld [vmem:[%s1 + $0x368] sm:$0xff]
  %v258 = vld [vmem:[%s1 + $0x370] sm:$0xff]
  %v259 = vld [vmem:[%s1 + $0x378] sm:$0xff]
  %v260 = vld [vmem:[%s1 + $0x380] sm:$0xff]
  %v261 = vld [vmem:[%s1 + $0x388] sm:$0xff]
  %v262 = vld [vmem:[%s1 + $0x390] sm:$0xff]
  %v263 = vld [vmem:[%s1 + $0x398] sm:$0xff]
  %v264 = vld [vmem:[%s1 + $0x3a0] sm:$0xff]
  %v265 = vld [vmem:[%s1 + $0x3a8] sm:$0xff]
  %v266 = vld [vmem:[%s1 + $0x3b0] sm:$0xff]
  %v267 = vld [vmem:[%s1 + $0x3b8] sm:$0xff]
  %v268 = vld [vmem:[%s1 + $0x3c0] sm:$0xff]
  %v269 = vld [vmem:[%s1 + $0x3c8] sm:$0xff]
  %v270 = vld [vmem:[%s1 + $0x3d0] sm:$0xff]
  %v271 = vld [vmem:[%s1 + $0x3d8] sm:$0xff]
  %v272 = vld [vmem:[%s1 + $0x3e0] sm:$0xff]
  %v273 = vld [vmem:[%s1 + $0x3e8] sm:$0xff]
  %v274 = vld [vmem:[%s1 + $0x3f0] sm:$0xff]
  %v275 = vld [vmem:[%s1 + $0x3f8] sm:$0xff]
  %277 = vset.pattern.permute.xlu0 0
  %278 = vperm.xlu0 %277, %v20
  %v279 = vpop.permute.xlu0 %278
  %282 = vset.pattern.permute.xlu0 0
  %283 = vperm.xlu0 %282, %v21
  %v284 = vpop.permute.xlu0 %283
  %287 = vset.pattern.permute.xlu0 0
  %288 = vperm.xlu0 %287, %v22
  %v289 = vpop.permute.xlu0 %288
  %292 = vset.pattern.permute.xlu0 0
  %293 = vperm.xlu0 %292, %v23
  %v294 = vpop.permute.xlu0 %293
  %297 = vset.pattern.permute.xlu0 0
  %298 = vperm.xlu0 %297, %v24
  %v299 = vpop.permute.xlu0 %298
  %302 = vset.pattern.permute.xlu0 0
  %303 = vperm.xlu0 %302, %v25
  %v304 = vpop.permute.xlu0 %303
  %307 = vset.pattern.permute.xlu0 0
  %308 = vperm.xlu0 %307, %v26
  %v309 = vpop.permute.xlu0 %308
  %312 = vset.pattern.permute.xlu0 0
  %313 = vperm.xlu0 %312, %v27
  %v314 = vpop.permute.xlu0 %313
  %317 = vset.pattern.permute.xlu0 0
  %318 = vperm.xlu0 %317, %v28
  %v319 = vpop.permute.xlu0 %318
  %322 = vset.pattern.permute.xlu0 0
  %323 = vperm.xlu0 %322, %v29
  %v324 = vpop.permute.xlu0 %323
  %327 = vset.pattern.permute.xlu0 0
  %328 = vperm.xlu0 %327, %v30
  %v329 = vpop.permute.xlu0 %328
  %332 = vset.pattern.permute.xlu0 0
  %333 = vperm.xlu0 %332, %v31
  %v334 = vpop.permute.xlu0 %333
  %337 = vset.pattern.permute.xlu0 0
  %338 = vperm.xlu0 %337, %v32
  %v339 = vpop.permute.xlu0 %338
  %342 = vset.pattern.permute.xlu0 0
  %343 = vperm.xlu0 %342, %v33
  %v344 = vpop.permute.xlu0 %343
  %347 = vset.pattern.permute.xlu0 0
  %348 = vperm.xlu0 %347, %v34
  %v349 = vpop.permute.xlu0 %348
  %352 = vset.pattern.permute.xlu0 0
  %353 = vperm.xlu0 %352, %v35
  %v354 = vpop.permute.xlu0 %353
  %357 = vset.pattern.permute.xlu0 0
  %358 = vperm.xlu0 %357, %v36
  %v359 = vpop.permute.xlu0 %358
  %362 = vset.pattern.permute.xlu0 0
  %363 = vperm.xlu0 %362, %v37
  %v364 = vpop.permute.xlu0 %363
  %367 = vset.pattern.permute.xlu0 0
  %368 = vperm.xlu0 %367, %v38
  %v369 = vpop.permute.xlu0 %368
  %372 = vset.pattern.permute.xlu0 0
  %373 = vperm.xlu0 %372, %v39
  %v374 = vpop.permute.xlu0 %373
  %377 = vset.pattern.permute.xlu0 0
  %378 = vperm.xlu0 %377, %v40
  %v379 = vpop.permute.xlu0 %378
  %382 = vset.pattern.permute.xlu0 0
  %383 = vperm.xlu0 %382, %v41
  %v384 = vpop.permute.xlu0 %383
  %387 = vset.pattern.permute.xlu0 0
  %388 = vperm.xlu0 %387, %v42
  %v389 = vpop.permute.xlu0 %388
  %392 = vset.pattern.permute.xlu0 0
  %393 = vperm.xlu0 %392, %v43
  %v394 = vpop.permute.xlu0 %393
  %397 = vset.pattern.permute.xlu0 0
  %398 = vperm.xlu0 %397, %v44
  %v399 = vpop.permute.xlu0 %398
  %402 = vset.pattern.permute.xlu0 0
  %403 = vperm.xlu0 %402, %v45
  %v404 = vpop.permute.xlu0 %403
  %407 = vset.pattern.permute.xlu0 0
  %408 = vperm.xlu0 %407, %v46
  %v409 = vpop.permute.xlu0 %408
  %412 = vset.pattern.permute.xlu0 0
  %413 = vperm.xlu0 %412, %v47
  %v414 = vpop.permute.xlu0 %413
  %417 = vset.pattern.permute.xlu0 0
  %418 = vperm.xlu0 %417, %v48
  %v419 = vpop.permute.xlu0 %418
  %422 = vset.pattern.permute.xlu0 0
  %423 = vperm.xlu0 %422, %v49
  %v424 = vpop.permute.xlu0 %423
  %427 = vset.pattern.permute.xlu0 0
  %428 = vperm.xlu0 %427, %v50
  %v429 = vpop.permute.xlu0 %428
  %432 = vset.pattern.permute.xlu0 0
  %433 = vperm.xlu0 %432, %v51
  %v434 = vpop.permute.xlu0 %433
  %437 = vset.pattern.permute.xlu0 0
  %438 = vperm.xlu0 %437, %v52
  %v439 = vpop.permute.xlu0 %438
  %442 = vset.pattern.permute.xlu0 0
  %443 = vperm.xlu0 %442, %v53
  %v444 = vpop.permute.xlu0 %443
  %447 = vset.pattern.permute.xlu0 0
  %448 = vperm.xlu0 %447, %v54
  %v449 = vpop.permute.xlu0 %448
  %452 = vset.pattern.permute.xlu0 0
  %453 = vperm.xlu0 %452, %v55
  %v454 = vpop.permute.xlu0 %453
  %457 = vset.pattern.permute.xlu0 0
  %458 = vperm.xlu0 %457, %v56
  %v459 = vpop.permute.xlu0 %458
  %462 = vset.pattern.permute.xlu0 0
  %463 = vperm.xlu0 %462, %v57
  %v464 = vpop.permute.xlu0 %463
  %467 = vset.pattern.permute.xlu0 0
  %468 = vperm.xlu0 %467, %v58
  %v469 = vpop.permute.xlu0 %468
  %472 = vset.pattern.permute.xlu0 0
  %473 = vperm.xlu0 %472, %v59
  %v474 = vpop.permute.xlu0 %473
  %477 = vset.pattern.permute.xlu0 0
  %478 = vperm.xlu0 %477, %v60
  %v479 = vpop.permute.xlu0 %478
  %482 = vset.pattern.permute.xlu0 0
  %483 = vperm.xlu0 %482, %v61
  %v484 = vpop.permute.xlu0 %483
  %487 = vset.pattern.permute.xlu0 0
  %488 = vperm.xlu0 %487, %v62
  %v489 = vpop.permute.xlu0 %488
  %492 = vset.pattern.permute.xlu0 0
  %493 = vperm.xlu0 %492, %v63
  %v494 = vpop.permute.xlu0 %493
  %497 = vset.pattern.permute.xlu0 0
  %498 = vperm.xlu0 %497, %v64
  %v499 = vpop.permute.xlu0 %498
  %502 = vset.pattern.permute.xlu0 0
  %503 = vperm.xlu0 %502, %v65
  %v504 = vpop.permute.xlu0 %503
  %507 = vset.pattern.permute.xlu0 0
  %508 = vperm.xlu0 %507, %v66
  %v509 = vpop.permute.xlu0 %508
  %512 = vset.pattern.permute.xlu0 0
  %513 = vperm.xlu0 %512, %v67
  %v514 = vpop.permute.xlu0 %513
  %517 = vset.pattern.permute.xlu0 0
  %518 = vperm.xlu0 %517, %v68
  %v519 = vpop.permute.xlu0 %518
  %522 = vset.pattern.permute.xlu0 0
  %523 = vperm.xlu0 %522, %v69
  %v524 = vpop.permute.xlu0 %523
  %527 = vset.pattern.permute.xlu0 0
  %528 = vperm.xlu0 %527, %v70
  %v529 = vpop.permute.xlu0 %528
  %532 = vset.pattern.permute.xlu0 0
  %533 = vperm.xlu0 %532, %v71
  %v534 = vpop.permute.xlu0 %533
  %537 = vset.pattern.permute.xlu0 0
  %538 = vperm.xlu0 %537, %v72
  %v539 = vpop.permute.xlu0 %538
  %542 = vset.pattern.permute.xlu0 0
  %543 = vperm.xlu0 %542, %v73
  %v544 = vpop.permute.xlu0 %543
  %547 = vset.pattern.permute.xlu0 0
  %548 = vperm.xlu0 %547, %v74
  %v549 = vpop.permute.xlu0 %548
  %552 = vset.pattern.permute.xlu0 0
  %553 = vperm.xlu0 %552, %v75
  %v554 = vpop.permute.xlu0 %553
  %557 = vset.pattern.permute.xlu0 0
  %558 = vperm.xlu0 %557, %v76
  %v559 = vpop.permute.xlu0 %558
  %562 = vset.pattern.permute.xlu0 0
  %563 = vperm.xlu0 %562, %v77
  %v564 = vpop.permute.xlu0 %563
  %567 = vset.pattern.permute.xlu0 0
  %568 = vperm.xlu0 %567, %v78
  %v569 = vpop.permute.xlu0 %568
  %572 = vset.pattern.permute.xlu0 0
  %573 = vperm.xlu0 %572, %v79
  %v574 = vpop.permute.xlu0 %573
  %577 = vset.pattern.permute.xlu0 0
  %578 = vperm.xlu0 %577, %v80
  %v579 = vpop.permute.xlu0 %578
  %582 = vset.pattern.permute.xlu0 0
  %583 = vperm.xlu0 %582, %v81
  %v584 = vpop.permute.xlu0 %583
  %587 = vset.pattern.permute.xlu0 0
  %588 = vperm.xlu0 %587, %v82
  %v589 = vpop.permute.xlu0 %588
  %592 = vset.pattern.permute.xlu0 0
  %593 = vperm.xlu0 %592, %v83
  %v594 = vpop.permute.xlu0 %593
  %597 = vset.pattern.permute.xlu0 0
  %598 = vperm.xlu0 %597, %v84
  %v599 = vpop.permute.xlu0 %598
  %602 = vset.pattern.permute.xlu0 0
  %603 = vperm.xlu0 %602, %v85
  %v604 = vpop.permute.xlu0 %603
  %607 = vset.pattern.permute.xlu0 0
  %608 = vperm.xlu0 %607, %v86
  %v609 = vpop.permute.xlu0 %608
  %612 = vset.pattern.permute.xlu0 0
  %613 = vperm.xlu0 %612, %v87
  %v614 = vpop.permute.xlu0 %613
  %617 = vset.pattern.permute.xlu0 0
  %618 = vperm.xlu0 %617, %v88
  %v619 = vpop.permute.xlu0 %618
  %622 = vset.pattern.permute.xlu0 0
  %623 = vperm.xlu0 %622, %v89
  %v624 = vpop.permute.xlu0 %623
  %627 = vset.pattern.permute.xlu0 0
  %628 = vperm.xlu0 %627, %v90
  %v629 = vpop.permute.xlu0 %628
  %632 = vset.pattern.permute.xlu0 0
  %633 = vperm.xlu0 %632, %v91
  %v634 = vpop.permute.xlu0 %633
  %637 = vset.pattern.permute.xlu0 0
  %638 = vperm.xlu0 %637, %v92
  %v639 = vpop.permute.xlu0 %638
  %642 = vset.pattern.permute.xlu0 0
  %643 = vperm.xlu0 %642, %v93
  %v644 = vpop.permute.xlu0 %643
  %647 = vset.pattern.permute.xlu0 0
  %648 = vperm.xlu0 %647, %v94
  %v649 = vpop.permute.xlu0 %648
  %652 = vset.pattern.permute.xlu0 0
  %653 = vperm.xlu0 %652, %v95
  %v654 = vpop.permute.xlu0 %653
  %657 = vset.pattern.permute.xlu0 0
  %658 = vperm.xlu0 %657, %v96
  %v659 = vpop.permute.xlu0 %658
  %662 = vset.pattern.permute.xlu0 0
  %663 = vperm.xlu0 %662, %v97
  %v664 = vpop.permute.xlu0 %663
  %667 = vset.pattern.permute.xlu0 0
  %668 = vperm.xlu0 %667, %v98
  %v669 = vpop.permute.xlu0 %668
  %672 = vset.pattern.permute.xlu0 0
  %673 = vperm.xlu0 %672, %v99
  %v674 = vpop.permute.xlu0 %673
  %677 = vset.pattern.permute.xlu0 0
  %678 = vperm.xlu0 %677, %v100
  %v679 = vpop.permute.xlu0 %678
  %682 = vset.pattern.permute.xlu0 0
  %683 = vperm.xlu0 %682, %v101
  %v684 = vpop.permute.xlu0 %683
  %687 = vset.pattern.permute.xlu0 0
  %688 = vperm.xlu0 %687, %v102
  %v689 = vpop.permute.xlu0 %688
  %692 = vset.pattern.permute.xlu0 0
  %693 = vperm.xlu0 %692, %v103
  %v694 = vpop.permute.xlu0 %693
  %697 = vset.pattern.permute.xlu0 0
  %698 = vperm.xlu0 %697, %v104
  %v699 = vpop.permute.xlu0 %698
  %702 = vset.pattern.permute.xlu0 0
  %703 = vperm.xlu0 %702, %v105
  %v704 = vpop.permute.xlu0 %703
  %707 = vset.pattern.permute.xlu0 0
  %708 = vperm.xlu0 %707, %v106
  %v709 = vpop.permute.xlu0 %708
  %712 = vset.pattern.permute.xlu0 0
  %713 = vperm.xlu0 %712, %v107
  %v714 = vpop.permute.xlu0 %713
  %717 = vset.pattern.permute.xlu0 0
  %718 = vperm.xlu0 %717, %v108
  %v719 = vpop.permute.xlu0 %718
  %722 = vset.pattern.permute.xlu0 0
  %723 = vperm.xlu0 %722, %v109
  %v724 = vpop.permute.xlu0 %723
  %727 = vset.pattern.permute.xlu0 0
  %728 = vperm.xlu0 %727, %v110
  %v729 = vpop.permute.xlu0 %728
  %732 = vset.pattern.permute.xlu0 0
  %733 = vperm.xlu0 %732, %v111
  %v734 = vpop.permute.xlu0 %733
  %737 = vset.pattern.permute.xlu0 0
  %738 = vperm.xlu0 %737, %v112
  %v739 = vpop.permute.xlu0 %738
  %742 = vset.pattern.permute.xlu0 0
  %743 = vperm.xlu0 %742, %v113
  %v744 = vpop.permute.xlu0 %743
  %747 = vset.pattern.permute.xlu0 0
  %748 = vperm.xlu0 %747, %v114
  %v749 = vpop.permute.xlu0 %748
  %752 = vset.pattern.permute.xlu0 0
  %753 = vperm.xlu0 %752, %v115
  %v754 = vpop.permute.xlu0 %753
  %757 = vset.pattern.permute.xlu0 0
  %758 = vperm.xlu0 %757, %v116
  %v759 = vpop.permute.xlu0 %758
  %762 = vset.pattern.permute.xlu0 0
  %763 = vperm.xlu0 %762, %v117
  %v764 = vpop.permute.xlu0 %763
  %767 = vset.pattern.permute.xlu0 0
  %768 = vperm.xlu0 %767, %v118
  %v769 = vpop.permute.xlu0 %768
  %772 = vset.pattern.permute.xlu0 0
  %773 = vperm.xlu0 %772, %v119
  %v774 = vpop.permute.xlu0 %773
  %777 = vset.pattern.permute.xlu0 0
  %778 = vperm.xlu0 %777, %v120
  %v779 = vpop.permute.xlu0 %778
  %782 = vset.pattern.permute.xlu0 0
  %783 = vperm.xlu0 %782, %v121
  %v784 = vpop.permute.xlu0 %783
  %787 = vset.pattern.permute.xlu0 0
  %788 = vperm.xlu0 %787, %v122
  %v789 = vpop.permute.xlu0 %788
  %792 = vset.pattern.permute.xlu0 0
  %793 = vperm.xlu0 %792, %v123
  %v794 = vpop.permute.xlu0 %793
  %797 = vset.pattern.permute.xlu0 0
  %798 = vperm.xlu0 %797, %v124
  %v799 = vpop.permute.xlu0 %798
  %802 = vset.pattern.permute.xlu0 0
  %803 = vperm.xlu0 %802, %v125
  %v804 = vpop.permute.xlu0 %803
  %807 = vset.pattern.permute.xlu0 0
  %808 = vperm.xlu0 %807, %v126
  %v809 = vpop.permute.xlu0 %808
  %812 = vset.pattern.permute.xlu0 0
  %813 = vperm.xlu0 %812, %v127
  %v814 = vpop.permute.xlu0 %813
  %817 = vset.pattern.permute.xlu0 0
  %818 = vperm.xlu0 %817, %v128
  %v819 = vpop.permute.xlu0 %818
  %822 = vset.pattern.permute.xlu0 0
  %823 = vperm.xlu0 %822, %v129
  %v824 = vpop.permute.xlu0 %823
  %827 = vset.pattern.permute.xlu0 0
  %828 = vperm.xlu0 %827, %v130
  %v829 = vpop.permute.xlu0 %828
  %832 = vset.pattern.permute.xlu0 0
  %833 = vperm.xlu0 %832, %v131
  %v834 = vpop.permute.xlu0 %833
  %837 = vset.pattern.permute.xlu0 0
  %838 = vperm.xlu0 %837, %v132
  %v839 = vpop.permute.xlu0 %838
  %842 = vset.pattern.permute.xlu0 0
  %843 = vperm.xlu0 %842, %v133
  %v844 = vpop.permute.xlu0 %843
  %847 = vset.pattern.permute.xlu0 0
  %848 = vperm.xlu0 %847, %v134
  %v849 = vpop.permute.xlu0 %848
  %852 = vset.pattern.permute.xlu0 0
  %853 = vperm.xlu0 %852, %v135
  %v854 = vpop.permute.xlu0 %853
  %857 = vset.pattern.permute.xlu0 0
  %858 = vperm.xlu0 %857, %v136
  %v859 = vpop.permute.xlu0 %858
  %862 = vset.pattern.permute.xlu0 0
  %863 = vperm.xlu0 %862, %v137
  %v864 = vpop.permute.xlu0 %863
  %867 = vset.pattern.permute.xlu0 0
  %868 = vperm.xlu0 %867, %v138
  %v869 = vpop.permute.xlu0 %868
  %872 = vset.pattern.permute.xlu0 0
  %873 = vperm.xlu0 %872, %v139
  %v874 = vpop.permute.xlu0 %873
  %877 = vset.pattern.permute.xlu0 0
  %878 = vperm.xlu0 %877, %v140
  %v879 = vpop.permute.xlu0 %878
  %882 = vset.pattern.permute.xlu0 0
  %883 = vperm.xlu0 %882, %v141
  %v884 = vpop.permute.xlu0 %883
  %887 = vset.pattern.permute.xlu0 0
  %888 = vperm.xlu0 %887, %v142
  %v889 = vpop.permute.xlu0 %888
  %892 = vset.pattern.permute.xlu0 0
  %893 = vperm.xlu0 %892, %v143
  %v894 = vpop.permute.xlu0 %893
  %897 = vset.pattern.permute.xlu0 0
  %898 = vperm.xlu0 %897, %v144
  %v899 = vpop.permute.xlu0 %898
  %902 = vset.pattern.permute.xlu0 0
  %903 = vperm.xlu0 %902, %v145
  %v904 = vpop.permute.xlu0 %903
  %907 = vset.pattern.permute.xlu0 0
  %908 = vperm.xlu0 %907, %v146
  %v909 = vpop.permute.xlu0 %908
  %912 = vset.pattern.permute.xlu0 0
  %913 = vperm.xlu0 %912, %v147
  %v914 = vpop.permute.xlu0 %913
  %v916 = vmul.f32 %v279, %v148
  %v917 = vmul.f32 %v284, %v149
  %v918 = vmul.f32 %v289, %v150
  %v919 = vmul.f32 %v294, %v151
  %v920 = vmul.f32 %v299, %v152
  %v921 = vmul.f32 %v304, %v153
  %v922 = vmul.f32 %v309, %v154
  %v923 = vmul.f32 %v314, %v155
  %v924 = vmul.f32 %v319, %v156
  %v925 = vmul.f32 %v324, %v157
  %v926 = vmul.f32 %v329, %v158
  %v927 = vmul.f32 %v334, %v159
  %v928 = vmul.f32 %v339, %v160
  %v929 = vmul.f32 %v344, %v161
  %v930 = vmul.f32 %v349, %v162
  %v931 = vmul.f32 %v354, %v163
  %v932 = vmul.f32 %v359, %v164
  %v933 = vmul.f32 %v364, %v165
  %v934 = vmul.f32 %v369, %v166
  %v935 = vmul.f32 %v374, %v167
  %v936 = vmul.f32 %v379, %v168
  %v937 = vmul.f32 %v384, %v169
  %v938 = vmul.f32 %v389, %v170
  %v939 = vmul.f32 %v394, %v171
  %v940 = vmul.f32 %v399, %v172
  %v941 = vmul.f32 %v404, %v173
  %v942 = vmul.f32 %v409, %v174
  %v943 = vmul.f32 %v414, %v175
  %v944 = vmul.f32 %v419, %v176
  %v945 = vmul.f32 %v424, %v177
  %v946 = vmul.f32 %v429, %v178
  %v947 = vmul.f32 %v434, %v179
  %v948 = vmul.f32 %v439, %v180
  %v949 = vmul.f32 %v444, %v181
  %v950 = vmul.f32 %v449, %v182
  %v951 = vmul.f32 %v454, %v183
  %v952 = vmul.f32 %v459, %v184
  %v953 = vmul.f32 %v464, %v185
  %v954 = vmul.f32 %v469, %v186
  %v955 = vmul.f32 %v474, %v187
  %v956 = vmul.f32 %v479, %v188
  %v957 = vmul.f32 %v484, %v189
  %v958 = vmul.f32 %v489, %v190
  %v959 = vmul.f32 %v494, %v191
  %v960 = vmul.f32 %v499, %v192
  %v961 = vmul.f32 %v504, %v193
  %v962 = vmul.f32 %v509, %v194
  %v963 = vmul.f32 %v514, %v195
  %v964 = vmul.f32 %v519, %v196
  %v965 = vmul.f32 %v524, %v197
  %v966 = vmul.f32 %v529, %v198
  %v967 = vmul.f32 %v534, %v199
  %v968 = vmul.f32 %v539, %v200
  %v969 = vmul.f32 %v544, %v201
  %v970 = vmul.f32 %v549, %v202
  %v971 = vmul.f32 %v554, %v203
  %v972 = vmul.f32 %v559, %v204
  %v973 = vmul.f32 %v564, %v205
  %v974 = vmul.f32 %v569, %v206
  %v975 = vmul.f32 %v574, %v207
  %v976 = vmul.f32 %v579, %v208
  %v977 = vmul.f32 %v584, %v209
  %v978 = vmul.f32 %v589, %v210
  %v979 = vmul.f32 %v594, %v211
  %v980 = vmul.f32 %v599, %v212
  %v981 = vmul.f32 %v604, %v213
  %v982 = vmul.f32 %v609, %v214
  %v983 = vmul.f32 %v614, %v215
  %v984 = vmul.f32 %v619, %v216
  %v985 = vmul.f32 %v624, %v217
  %v986 = vmul.f32 %v629, %v218
  %v987 = vmul.f32 %v634, %v219
  %v988 = vmul.f32 %v639, %v220
  %v989 = vmul.f32 %v644, %v221
  %v990 = vmul.f32 %v649, %v222
  %v991 = vmul.f32 %v654, %v223
  %v992 = vmul.f32 %v659, %v224
  %v993 = vmul.f32 %v664, %v225
  %v994 = vmul.f32 %v669, %v226
  %v995 = vmul.f32 %v674, %v227
  %v996 = vmul.f32 %v679, %v228
  %v997 = vmul.f32 %v684, %v229
  %v998 = vmul.f32 %v689, %v230
  %v999 = vmul.f32 %v694, %v231
  %v1000 = vmul.f32 %v699, %v232
  %v1001 = vmul.f32 %v704, %v233
  %v1002 = vmul.f32 %v709, %v234
  %v1003 = vmul.f32 %v714, %v235
  %v1004 = vmul.f32 %v719, %v236
  %v1005 = vmul.f32 %v724, %v237
  %v1006 = vmul.f32 %v729, %v238
  %v1007 = vmul.f32 %v734, %v239
  %v1008 = vmul.f32 %v739, %v240
  %v1009 = vmul.f32 %v744, %v241
  %v1010 = vmul.f32 %v749, %v242
  %v1011 = vmul.f32 %v754, %v243
  %v1012 = vmul.f32 %v759, %v244
  %v1013 = vmul.f32 %v764, %v245
  %v1014 = vmul.f32 %v769, %v246
  %v1015 = vmul.f32 %v774, %v247
  %v1016 = vmul.f32 %v779, %v248
  %v1017 = vmul.f32 %v784, %v249
  %v1018 = vmul.f32 %v789, %v250
  %v1019 = vmul.f32 %v794, %v251
  %v1020 = vmul.f32 %v799, %v252
  %v1021 = vmul.f32 %v804, %v253
  %v1022 = vmul.f32 %v809, %v254
  %v1023 = vmul.f32 %v814, %v255
  %v1024 = vmul.f32 %v819, %v256
  %v1025 = vmul.f32 %v824, %v257
  %v1026 = vmul.f32 %v829, %v258
  %v1027 = vmul.f32 %v834, %v259
  %v1028 = vmul.f32 %v839, %v260
  %v1029 = vmul.f32 %v844, %v261
  %v1030 = vmul.f32 %v849, %v262
  %v1031 = vmul.f32 %v854, %v263
  %v1032 = vmul.f32 %v859, %v264
  %v1033 = vmul.f32 %v864, %v265
  %v1034 = vmul.f32 %v869, %v266
  %v1035 = vmul.f32 %v874, %v267
  %v1036 = vmul.f32 %v879, %v268
  %v1037 = vmul.f32 %v884, %v269
  %v1038 = vmul.f32 %v889, %v270
  %v1039 = vmul.f32 %v894, %v271
  %v1040 = vmul.f32 %v899, %v272
  %v1041 = vmul.f32 %v904, %v273
  %v1042 = vmul.f32 %v909, %v274
  %v1043 = vmul.f32 %v914, %v275
  %vm1044 = vcmask 261120
  %v1045 = vsel %vm1044, %v916, 0.0
  %v1046 = vsel %vm1044, %v917, 0.0
  %v1047 = vadd.f32 %v1045, %v1046
  %v1048 = vsel %vm1044, %v918, 0.0
  %v1049 = vadd.f32 %v1047, %v1048
  %v1050 = vsel %vm1044, %v919, 0.0
  %v1051 = vadd.f32 %v1049, %v1050
  %v1052 = vrot.slane %v1051, 4
  %v1053 = vadd.f32 %v1051, %v1052
  %v1054 = vrot.slane %v1053, 2
  %v1055 = vadd.f32 %v1053, %v1054
  %v1056 = vrot.slane %v1055, 1
  %v1057 = vadd.f32 %v1055, %v1056
  %v1058 = vsel %vm1044, %v920, 0.0
  %v1059 = vsel %vm1044, %v921, 0.0
  %v1060 = vadd.f32 %v1058, %v1059
  %v1061 = vsel %vm1044, %v922, 0.0
  %v1062 = vadd.f32 %v1060, %v1061
  %v1063 = vsel %vm1044, %v923, 0.0
  %v1064 = vadd.f32 %v1062, %v1063
  %v1065 = vrot.slane %v1064, 4
  %v1066 = vadd.f32 %v1064, %v1065
  %v1067 = vrot.slane %v1066, 2
  %v1068 = vadd.f32 %v1066, %v1067
  %v1069 = vrot.slane %v1068, 1
  %v1070 = vadd.f32 %v1068, %v1069
  %v1071 = vsel %vm1044, %v924, 0.0
  %v1072 = vsel %vm1044, %v925, 0.0
  %v1073 = vadd.f32 %v1071, %v1072
  %v1074 = vsel %vm1044, %v926, 0.0
  %v1075 = vadd.f32 %v1073, %v1074
  %v1076 = vsel %vm1044, %v927, 0.0
  %v1077 = vadd.f32 %v1075, %v1076
  %v1078 = vrot.slane %v1077, 4
  %v1079 = vadd.f32 %v1077, %v1078
  %v1080 = vrot.slane %v1079, 2
  %v1081 = vadd.f32 %v1079, %v1080
  %v1082 = vrot.slane %v1081, 1
  %v1083 = vadd.f32 %v1081, %v1082
  %v1084 = vsel %vm1044, %v928, 0.0
  %v1085 = vsel %vm1044, %v929, 0.0
  %v1086 = vadd.f32 %v1084, %v1085
  %v1087 = vsel %vm1044, %v930, 0.0
  %v1088 = vadd.f32 %v1086, %v1087
  %v1089 = vsel %vm1044, %v931, 0.0
  %v1090 = vadd.f32 %v1088, %v1089
  %v1091 = vrot.slane %v1090, 4
  %v1092 = vadd.f32 %v1090, %v1091
  %v1093 = vrot.slane %v1092, 2
  %v1094 = vadd.f32 %v1092, %v1093
  %v1095 = vrot.slane %v1094, 1
  %v1096 = vadd.f32 %v1094, %v1095
  %v1097 = vsel %vm1044, %v932, 0.0
  %v1098 = vsel %vm1044, %v933, 0.0
  %v1099 = vadd.f32 %v1097, %v1098
  %v1100 = vsel %vm1044, %v934, 0.0
  %v1101 = vadd.f32 %v1099, %v1100
  %v1102 = vsel %vm1044, %v935, 0.0
  %v1103 = vadd.f32 %v1101, %v1102
  %v1104 = vrot.slane %v1103, 4
  %v1105 = vadd.f32 %v1103, %v1104
  %v1106 = vrot.slane %v1105, 2
  %v1107 = vadd.f32 %v1105, %v1106
  %v1108 = vrot.slane %v1107, 1
  %v1109 = vadd.f32 %v1107, %v1108
  %v1110 = vsel %vm1044, %v936, 0.0
  %v1111 = vsel %vm1044, %v937, 0.0
  %v1112 = vadd.f32 %v1110, %v1111
  %v1113 = vsel %vm1044, %v938, 0.0
  %v1114 = vadd.f32 %v1112, %v1113
  %v1115 = vsel %vm1044, %v939, 0.0
  %v1116 = vadd.f32 %v1114, %v1115
  %v1117 = vrot.slane %v1116, 4
  %v1118 = vadd.f32 %v1116, %v1117
  %v1119 = vrot.slane %v1118, 2
  %v1120 = vadd.f32 %v1118, %v1119
  %v1121 = vrot.slane %v1120, 1
  %v1122 = vadd.f32 %v1120, %v1121
  %v1123 = vsel %vm1044, %v940, 0.0
  %v1124 = vsel %vm1044, %v941, 0.0
  %v1125 = vadd.f32 %v1123, %v1124
  %v1126 = vsel %vm1044, %v942, 0.0
  %v1127 = vadd.f32 %v1125, %v1126
  %v1128 = vsel %vm1044, %v943, 0.0
  %v1129 = vadd.f32 %v1127, %v1128
  %v1130 = vrot.slane %v1129, 4
  %v1131 = vadd.f32 %v1129, %v1130
  %v1132 = vrot.slane %v1131, 2
  %v1133 = vadd.f32 %v1131, %v1132
  %v1134 = vrot.slane %v1133, 1
  %v1135 = vadd.f32 %v1133, %v1134
  %v1136 = vsel %vm1044, %v944, 0.0
  %v1137 = vsel %vm1044, %v945, 0.0
  %v1138 = vadd.f32 %v1136, %v1137
  %v1139 = vsel %vm1044, %v946, 0.0
  %v1140 = vadd.f32 %v1138, %v1139
  %v1141 = vsel %vm1044, %v947, 0.0
  %v1142 = vadd.f32 %v1140, %v1141
  %v1143 = vrot.slane %v1142, 4
  %v1144 = vadd.f32 %v1142, %v1143
  %v1145 = vrot.slane %v1144, 2
  %v1146 = vadd.f32 %v1144, %v1145
  %v1147 = vrot.slane %v1146, 1
  %v1148 = vadd.f32 %v1146, %v1147
  %v1149 = vsel %vm1044, %v948, 0.0
  %v1150 = vsel %vm1044, %v949, 0.0
  %v1151 = vadd.f32 %v1149, %v1150
  %v1152 = vsel %vm1044, %v950, 0.0
  %v1153 = vadd.f32 %v1151, %v1152
  %v1154 = vsel %vm1044, %v951, 0.0
  %v1155 = vadd.f32 %v1153, %v1154
  %v1156 = vrot.slane %v1155, 4
  %v1157 = vadd.f32 %v1155, %v1156
  %v1158 = vrot.slane %v1157, 2
  %v1159 = vadd.f32 %v1157, %v1158
  %v1160 = vrot.slane %v1159, 1
  %v1161 = vadd.f32 %v1159, %v1160
  %v1162 = vsel %vm1044, %v952, 0.0
  %v1163 = vsel %vm1044, %v953, 0.0
  %v1164 = vadd.f32 %v1162, %v1163
  %v1165 = vsel %vm1044, %v954, 0.0
  %v1166 = vadd.f32 %v1164, %v1165
  %v1167 = vsel %vm1044, %v955, 0.0
  %v1168 = vadd.f32 %v1166, %v1167
  %v1169 = vrot.slane %v1168, 4
  %v1170 = vadd.f32 %v1168, %v1169
  %v1171 = vrot.slane %v1170, 2
  %v1172 = vadd.f32 %v1170, %v1171
  %v1173 = vrot.slane %v1172, 1
  %v1174 = vadd.f32 %v1172, %v1173
  %v1175 = vsel %vm1044, %v956, 0.0
  %v1176 = vsel %vm1044, %v957, 0.0
  %v1177 = vadd.f32 %v1175, %v1176
  %v1178 = vsel %vm1044, %v958, 0.0
  %v1179 = vadd.f32 %v1177, %v1178
  %v1180 = vsel %vm1044, %v959, 0.0
  %v1181 = vadd.f32 %v1179, %v1180
  %v1182 = vrot.slane %v1181, 4
  %v1183 = vadd.f32 %v1181, %v1182
  %v1184 = vrot.slane %v1183, 2
  %v1185 = vadd.f32 %v1183, %v1184
  %v1186 = vrot.slane %v1185, 1
  %v1187 = vadd.f32 %v1185, %v1186
  %v1188 = vsel %vm1044, %v960, 0.0
  %v1189 = vsel %vm1044, %v961, 0.0
  %v1190 = vadd.f32 %v1188, %v1189
  %v1191 = vsel %vm1044, %v962, 0.0
  %v1192 = vadd.f32 %v1190, %v1191
  %v1193 = vsel %vm1044, %v963, 0.0
  %v1194 = vadd.f32 %v1192, %v1193
  %v1195 = vrot.slane %v1194, 4
  %v1196 = vadd.f32 %v1194, %v1195
  %v1197 = vrot.slane %v1196, 2
  %v1198 = vadd.f32 %v1196, %v1197
  %v1199 = vrot.slane %v1198, 1
  %v1200 = vadd.f32 %v1198, %v1199
  %v1201 = vsel %vm1044, %v964, 0.0
  %v1202 = vsel %vm1044, %v965, 0.0
  %v1203 = vadd.f32 %v1201, %v1202
  %v1204 = vsel %vm1044, %v966, 0.0
  %v1205 = vadd.f32 %v1203, %v1204
  %v1206 = vsel %vm1044, %v967, 0.0
  %v1207 = vadd.f32 %v1205, %v1206
  %v1208 = vrot.slane %v1207, 4
  %v1209 = vadd.f32 %v1207, %v1208
  %v1210 = vrot.slane %v1209, 2
  %v1211 = vadd.f32 %v1209, %v1210
  %v1212 = vrot.slane %v1211, 1
  %v1213 = vadd.f32 %v1211, %v1212
  %v1214 = vsel %vm1044, %v968, 0.0
  %v1215 = vsel %vm1044, %v969, 0.0
  %v1216 = vadd.f32 %v1214, %v1215
  %v1217 = vsel %vm1044, %v970, 0.0
  %v1218 = vadd.f32 %v1216, %v1217
  %v1219 = vsel %vm1044, %v971, 0.0
  %v1220 = vadd.f32 %v1218, %v1219
  %v1221 = vrot.slane %v1220, 4
  %v1222 = vadd.f32 %v1220, %v1221
  %v1223 = vrot.slane %v1222, 2
  %v1224 = vadd.f32 %v1222, %v1223
  %v1225 = vrot.slane %v1224, 1
  %v1226 = vadd.f32 %v1224, %v1225
  %v1227 = vsel %vm1044, %v972, 0.0
  %v1228 = vsel %vm1044, %v973, 0.0
  %v1229 = vadd.f32 %v1227, %v1228
  %v1230 = vsel %vm1044, %v974, 0.0
  %v1231 = vadd.f32 %v1229, %v1230
  %v1232 = vsel %vm1044, %v975, 0.0
  %v1233 = vadd.f32 %v1231, %v1232
  %v1234 = vrot.slane %v1233, 4
  %v1235 = vadd.f32 %v1233, %v1234
  %v1236 = vrot.slane %v1235, 2
  %v1237 = vadd.f32 %v1235, %v1236
  %v1238 = vrot.slane %v1237, 1
  %v1239 = vadd.f32 %v1237, %v1238
  %v1240 = vsel %vm1044, %v976, 0.0
  %v1241 = vsel %vm1044, %v977, 0.0
  %v1242 = vadd.f32 %v1240, %v1241
  %v1243 = vsel %vm1044, %v978, 0.0
  %v1244 = vadd.f32 %v1242, %v1243
  %v1245 = vsel %vm1044, %v979, 0.0
  %v1246 = vadd.f32 %v1244, %v1245
  %v1247 = vrot.slane %v1246, 4
  %v1248 = vadd.f32 %v1246, %v1247
  %v1249 = vrot.slane %v1248, 2
  %v1250 = vadd.f32 %v1248, %v1249
  %v1251 = vrot.slane %v1250, 1
  %v1252 = vadd.f32 %v1250, %v1251
  %v1253 = vsel %vm1044, %v980, 0.0
  %v1254 = vsel %vm1044, %v981, 0.0
  %v1255 = vadd.f32 %v1253, %v1254
  %v1256 = vsel %vm1044, %v982, 0.0
  %v1257 = vadd.f32 %v1255, %v1256
  %v1258 = vsel %vm1044, %v983, 0.0
  %v1259 = vadd.f32 %v1257, %v1258
  %v1260 = vrot.slane %v1259, 4
  %v1261 = vadd.f32 %v1259, %v1260
  %v1262 = vrot.slane %v1261, 2
  %v1263 = vadd.f32 %v1261, %v1262
  %v1264 = vrot.slane %v1263, 1
  %v1265 = vadd.f32 %v1263, %v1264
  %v1266 = vsel %vm1044, %v984, 0.0
  %v1267 = vsel %vm1044, %v985, 0.0
  %v1268 = vadd.f32 %v1266, %v1267
  %v1269 = vsel %vm1044, %v986, 0.0
  %v1270 = vadd.f32 %v1268, %v1269
  %v1271 = vsel %vm1044, %v987, 0.0
  %v1272 = vadd.f32 %v1270, %v1271
  %v1273 = vrot.slane %v1272, 4
  %v1274 = vadd.f32 %v1272, %v1273
  %v1275 = vrot.slane %v1274, 2
  %v1276 = vadd.f32 %v1274, %v1275
  %v1277 = vrot.slane %v1276, 1
  %v1278 = vadd.f32 %v1276, %v1277
  %v1279 = vsel %vm1044, %v988, 0.0
  %v1280 = vsel %vm1044, %v989, 0.0
  %v1281 = vadd.f32 %v1279, %v1280
  %v1282 = vsel %vm1044, %v990, 0.0
  %v1283 = vadd.f32 %v1281, %v1282
  %v1284 = vsel %vm1044, %v991, 0.0
  %v1285 = vadd.f32 %v1283, %v1284
  %v1286 = vrot.slane %v1285, 4
  %v1287 = vadd.f32 %v1285, %v1286
  %v1288 = vrot.slane %v1287, 2
  %v1289 = vadd.f32 %v1287, %v1288
  %v1290 = vrot.slane %v1289, 1
  %v1291 = vadd.f32 %v1289, %v1290
  %v1292 = vsel %vm1044, %v992, 0.0
  %v1293 = vsel %vm1044, %v993, 0.0
  %v1294 = vadd.f32 %v1292, %v1293
  %v1295 = vsel %vm1044, %v994, 0.0
  %v1296 = vadd.f32 %v1294, %v1295
  %v1297 = vsel %vm1044, %v995, 0.0
  %v1298 = vadd.f32 %v1296, %v1297
  %v1299 = vrot.slane %v1298, 4
  %v1300 = vadd.f32 %v1298, %v1299
  %v1301 = vrot.slane %v1300, 2
  %v1302 = vadd.f32 %v1300, %v1301
  %v1303 = vrot.slane %v1302, 1
  %v1304 = vadd.f32 %v1302, %v1303
  %v1305 = vsel %vm1044, %v996, 0.0
  %v1306 = vsel %vm1044, %v997, 0.0
  %v1307 = vadd.f32 %v1305, %v1306
  %v1308 = vsel %vm1044, %v998, 0.0
  %v1309 = vadd.f32 %v1307, %v1308
  %v1310 = vsel %vm1044, %v999, 0.0
  %v1311 = vadd.f32 %v1309, %v1310
  %v1312 = vrot.slane %v1311, 4
  %v1313 = vadd.f32 %v1311, %v1312
  %v1314 = vrot.slane %v1313, 2
  %v1315 = vadd.f32 %v1313, %v1314
  %v1316 = vrot.slane %v1315, 1
  %v1317 = vadd.f32 %v1315, %v1316
  %v1318 = vsel %vm1044, %v1000, 0.0
  %v1319 = vsel %vm1044, %v1001, 0.0
  %v1320 = vadd.f32 %v1318, %v1319
  %v1321 = vsel %vm1044, %v1002, 0.0
  %v1322 = vadd.f32 %v1320, %v1321
  %v1323 = vsel %vm1044, %v1003, 0.0
  %v1324 = vadd.f32 %v1322, %v1323
  %v1325 = vrot.slane %v1324, 4
  %v1326 = vadd.f32 %v1324, %v1325
  %v1327 = vrot.slane %v1326, 2
  %v1328 = vadd.f32 %v1326, %v1327
  %v1329 = vrot.slane %v1328, 1
  %v1330 = vadd.f32 %v1328, %v1329
  %v1331 = vsel %vm1044, %v1004, 0.0
  %v1332 = vsel %vm1044, %v1005, 0.0
  %v1333 = vadd.f32 %v1331, %v1332
  %v1334 = vsel %vm1044, %v1006, 0.0
  %v1335 = vadd.f32 %v1333, %v1334
  %v1336 = vsel %vm1044, %v1007, 0.0
  %v1337 = vadd.f32 %v1335, %v1336
  %v1338 = vrot.slane %v1337, 4
  %v1339 = vadd.f32 %v1337, %v1338
  %v1340 = vrot.slane %v1339, 2
  %v1341 = vadd.f32 %v1339, %v1340
  %v1342 = vrot.slane %v1341, 1
  %v1343 = vadd.f32 %v1341, %v1342
  %v1344 = vsel %vm1044, %v1008, 0.0
  %v1345 = vsel %vm1044, %v1009, 0.0
  %v1346 = vadd.f32 %v1344, %v1345
  %v1347 = vsel %vm1044, %v1010, 0.0
  %v1348 = vadd.f32 %v1346, %v1347
  %v1349 = vsel %vm1044, %v1011, 0.0
  %v1350 = vadd.f32 %v1348, %v1349
  %v1351 = vrot.slane %v1350, 4
  %v1352 = vadd.f32 %v1350, %v1351
  %v1353 = vrot.slane %v1352, 2
  %v1354 = vadd.f32 %v1352, %v1353
  %v1355 = vrot.slane %v1354, 1
  %v1356 = vadd.f32 %v1354, %v1355
  %v1357 = vsel %vm1044, %v1012, 0.0
  %v1358 = vsel %vm1044, %v1013, 0.0
  %v1359 = vadd.f32 %v1357, %v1358
  %v1360 = vsel %vm1044, %v1014, 0.0
  %v1361 = vadd.f32 %v1359, %v1360
  %v1362 = vsel %vm1044, %v1015, 0.0
  %v1363 = vadd.f32 %v1361, %v1362
  %v1364 = vrot.slane %v1363, 4
  %v1365 = vadd.f32 %v1363, %v1364
  %v1366 = vrot.slane %v1365, 2
  %v1367 = vadd.f32 %v1365, %v1366
  %v1368 = vrot.slane %v1367, 1
  %v1369 = vadd.f32 %v1367, %v1368
  %v1370 = vsel %vm1044, %v1016, 0.0
  %v1371 = vsel %vm1044, %v1017, 0.0
  %v1372 = vadd.f32 %v1370, %v1371
  %v1373 = vsel %vm1044, %v1018, 0.0
  %v1374 = vadd.f32 %v1372, %v1373
  %v1375 = vsel %vm1044, %v1019, 0.0
  %v1376 = vadd.f32 %v1374, %v1375
  %v1377 = vrot.slane %v1376, 4
  %v1378 = vadd.f32 %v1376, %v1377
  %v1379 = vrot.slane %v1378, 2
  %v1380 = vadd.f32 %v1378, %v1379
  %v1381 = vrot.slane %v1380, 1
  %v1382 = vadd.f32 %v1380, %v1381
  %v1383 = vsel %vm1044, %v1020, 0.0
  %v1384 = vsel %vm1044, %v1021, 0.0
  %v1385 = vadd.f32 %v1383, %v1384
  %v1386 = vsel %vm1044, %v1022, 0.0
  %v1387 = vadd.f32 %v1385, %v1386
  %v1388 = vsel %vm1044, %v1023, 0.0
  %v1389 = vadd.f32 %v1387, %v1388
  %v1390 = vrot.slane %v1389, 4
  %v1391 = vadd.f32 %v1389, %v1390
  %v1392 = vrot.slane %v1391, 2
  %v1393 = vadd.f32 %v1391, %v1392
  %v1394 = vrot.slane %v1393, 1
  %v1395 = vadd.f32 %v1393, %v1394
  %v1396 = vsel %vm1044, %v1024, 0.0
  %v1397 = vsel %vm1044, %v1025, 0.0
  %v1398 = vadd.f32 %v1396, %v1397
  %v1399 = vsel %vm1044, %v1026, 0.0
  %v1400 = vadd.f32 %v1398, %v1399
  %v1401 = vsel %vm1044, %v1027, 0.0
  %v1402 = vadd.f32 %v1400, %v1401
  %v1403 = vrot.slane %v1402, 4
  %v1404 = vadd.f32 %v1402, %v1403
  %v1405 = vrot.slane %v1404, 2
  %v1406 = vadd.f32 %v1404, %v1405
  %v1407 = vrot.slane %v1406, 1
  %v1408 = vadd.f32 %v1406, %v1407
  %v1409 = vsel %vm1044, %v1028, 0.0
  %v1410 = vsel %vm1044, %v1029, 0.0
  %v1411 = vadd.f32 %v1409, %v1410
  %v1412 = vsel %vm1044, %v1030, 0.0
  %v1413 = vadd.f32 %v1411, %v1412
  %v1414 = vsel %vm1044, %v1031, 0.0
  %v1415 = vadd.f32 %v1413, %v1414
  %v1416 = vrot.slane %v1415, 4
  %v1417 = vadd.f32 %v1415, %v1416
  %v1418 = vrot.slane %v1417, 2
  %v1419 = vadd.f32 %v1417, %v1418
  %v1420 = vrot.slane %v1419, 1
  %v1421 = vadd.f32 %v1419, %v1420
  %v1422 = vsel %vm1044, %v1032, 0.0
  %v1423 = vsel %vm1044, %v1033, 0.0
  %v1424 = vadd.f32 %v1422, %v1423
  %v1425 = vsel %vm1044, %v1034, 0.0
  %v1426 = vadd.f32 %v1424, %v1425
  %v1427 = vsel %vm1044, %v1035, 0.0
  %v1428 = vadd.f32 %v1426, %v1427
  %v1429 = vrot.slane %v1428, 4
  %v1430 = vadd.f32 %v1428, %v1429
  %v1431 = vrot.slane %v1430, 2
  %v1432 = vadd.f32 %v1430, %v1431
  %v1433 = vrot.slane %v1432, 1
  %v1434 = vadd.f32 %v1432, %v1433
  %v1435 = vsel %vm1044, %v1036, 0.0
  %v1436 = vsel %vm1044, %v1037, 0.0
  %v1437 = vadd.f32 %v1435, %v1436
  %v1438 = vsel %vm1044, %v1038, 0.0
  %v1439 = vadd.f32 %v1437, %v1438
  %v1440 = vsel %vm1044, %v1039, 0.0
  %v1441 = vadd.f32 %v1439, %v1440
  %v1442 = vrot.slane %v1441, 4
  %v1443 = vadd.f32 %v1441, %v1442
  %v1444 = vrot.slane %v1443, 2
  %v1445 = vadd.f32 %v1443, %v1444
  %v1446 = vrot.slane %v1445, 1
  %v1447 = vadd.f32 %v1445, %v1446
  %v1448 = vsel %vm1044, %v1040, 0.0
  %v1449 = vsel %vm1044, %v1041, 0.0
  %v1450 = vadd.f32 %v1448, %v1449
  %v1451 = vsel %vm1044, %v1042, 0.0
  %v1452 = vadd.f32 %v1450, %v1451
  %v1453 = vsel %vm1044, %v1043, 0.0
  %v1454 = vadd.f32 %v1452, %v1453
  %v1455 = vrot.slane %v1454, 4
  %v1456 = vadd.f32 %v1454, %v1455
  %v1457 = vrot.slane %v1456, 2
  %v1458 = vadd.f32 %v1456, %v1457
  %v1459 = vrot.slane %v1458, 1
  %v1460 = vadd.f32 %v1458, %v1459
  %v1461 = vld [vmem:[%s2] sm:$0xff]
  %v1462 = vld [vmem:[%s2 + $0x8] sm:$0xff]
  %v1463 = vld [vmem:[%s2 + $0x10] sm:$0xff]
  %v1464 = vld [vmem:[%s2 + $0x18] sm:$0xff]
  %v1465 = vld [vmem:[%s2 + $0x20] sm:$0xff]
  %v1466 = vld [vmem:[%s2 + $0x28] sm:$0xff]
  %v1467 = vld [vmem:[%s2 + $0x30] sm:$0xff]
  %v1468 = vld [vmem:[%s2 + $0x38] sm:$0xff]
  %v1469 = vld [vmem:[%s3] sm:$0xff]
  %v1470 = vld [vmem:[%s3 + $0x8] sm:$0xff]
  %v1471 = vld [vmem:[%s3 + $0x10] sm:$0xff]
  %v1472 = vld [vmem:[%s3 + $0x18] sm:$0xff]
  %v1473 = vld [vmem:[%s3 + $0x20] sm:$0xff]
  %v1474 = vld [vmem:[%s3 + $0x28] sm:$0xff]
  %v1475 = vld [vmem:[%s3 + $0x30] sm:$0xff]
  %v1476 = vld [vmem:[%s3 + $0x38] sm:$0xff]
  %v1477 = vld [vmem:[%s3 + $0x40] sm:$0xff]
  %v1478 = vld [vmem:[%s3 + $0x48] sm:$0xff]
  %v1479 = vld [vmem:[%s3 + $0x50] sm:$0xff]
  %v1480 = vld [vmem:[%s3 + $0x58] sm:$0xff]
  %v1481 = vld [vmem:[%s3 + $0x60] sm:$0xff]
  %v1482 = vld [vmem:[%s3 + $0x68] sm:$0xff]
  %v1483 = vld [vmem:[%s3 + $0x70] sm:$0xff]
  %v1484 = vld [vmem:[%s3 + $0x78] sm:$0xff]
  %v1485 = vld [vmem:[%s3 + $0x80] sm:$0xff]
  %v1486 = vld [vmem:[%s3 + $0x88] sm:$0xff]
  %v1487 = vld [vmem:[%s3 + $0x90] sm:$0xff]
  %v1488 = vld [vmem:[%s3 + $0x98] sm:$0xff]
  %v1489 = vld [vmem:[%s4] sm:$0x1]
  %v1491 = vlaneseq
  %v1492 = vshrl.u32 %v1491, 7
  %v1493 = vsub.s32 0, %v1492
  %v1494 = vrot.slane %v1489, %v1493
  %v1497 = vsel %vm1044, %v1462, 0
  %v1500 = vsel %vm1044, %v1464, 0
  %v1503 = vsel %vm1044, %v1466, 0
  %v1506 = vsel %vm1044, %v1468, 0
  %1508 = vmatprep.subr.mxu0 0.0
  %1509 = vmatpush1.msra.mxu0 %v1484
  %1510 = vmatprep.subr.mxu0 0.0
  %1511 = vmatpush1.msra.mxu0 %v1483
  %1512 = vmatprep.subr.mxu0 0.0
  %1513 = vmatpush1.msra.mxu0 %v1482
  %1514 = vmatprep.subr.mxu0 0.0
  %1515 = vmatpush1.msra.mxu0 %v1481
  %1516 = vmatprep.subr.mxu0 0.0
  %1517 = vmatpush1.msra.mxu0 %v1480
  %1518 = vmatprep.subr.mxu0 0.0
  %1519 = vmatpush1.msra.mxu0 %v1479
  %1520 = vmatprep.subr.mxu0 0.0
  %1521 = vmatpush1.msra.mxu0 %v1478
  %1522 = vmatprep.subr.mxu0 0.0
  %1523 = vmatpush1.msra.mxu0 %v1477
  %1524 = vmatprep.subr.mxu0 0.0
  %1525 = vmatpush1.msra.mxu0 %v1476
  %1526 = vmatprep.subr.mxu0 0.0
  %1527 = vmatpush1.msra.mxu0 %v1475
  %1528 = vmatprep.subr.mxu0 0.0
  %1529 = vmatpush1.msra.mxu0 %v1474
  %1530 = vmatprep.subr.mxu0 0.0
  %1531 = vmatpush1.msra.mxu0 %v1473
  %1532 = vmatprep.subr.mxu0 0.0
  %1533 = vmatpush1.msra.mxu0 %v1472
  %1534 = vmatprep.subr.mxu0 0.0
  %1535 = vmatpush1.msra.mxu0 %v1471
  %1536 = vmatprep.subr.mxu0 0.0
  %1537 = vmatpush1.msra.mxu0 %v1470
  %1538 = vmatprep.subr.mxu0 0.0
  %1539 = vmatpush1.msra.mxu0 %v1469
  %1540 = vmatprep.subr.mxu0 0.0
  %1541 = vmatpush2.msra.mxu0 0.0
  %1542 = vmatprep.subr.mxu0 0.0
  %1543 = vmatpush2.msra.mxu0 0.0
  %1544 = vmatprep.subr.mxu0 0.0
  %1545 = vmatpush2.msra.mxu0 0.0
  %1546 = vmatprep.subr.mxu0 0.0
  %1547 = vmatpush2.msra.mxu0 0.0
  %1548 = vmatprep.subr.mxu0 0.0
  %1549 = vmatpush2.msra.mxu0 0.0
  %1550 = vmatprep.subr.mxu0 0.0
  %1551 = vmatpush2.msra.mxu0 0.0
  %1552 = vmatprep.subr.mxu0 0.0
  %1553 = vmatpush2.msra.mxu0 0.0
  %1554 = vmatprep.subr.mxu0 0.0
  %1555 = vmatpush2.msra.mxu0 0.0
  %1556 = vmatprep.subr.mxu0 0.0
  %1557 = vmatpush2.msra.mxu0 0.0
  %1558 = vmatprep.subr.mxu0 0.0
  %1559 = vmatpush2.msra.mxu0 0.0
  %1560 = vmatprep.subr.mxu0 0.0
  %1561 = vmatpush2.msra.mxu0 0.0
  %1562 = vmatprep.subr.mxu0 0.0
  %1563 = vmatpush2.msra.mxu0 0.0
  %1564 = vmatprep.subr.mxu0 0.0
  %1565 = vmatpush2.msra.mxu0 %v1488
  %1566 = vmatprep.subr.mxu0 0.0
  %1567 = vmatpush2.msra.mxu0 %v1487
  %1568 = vmatprep.subr.mxu0 0.0
  %1569 = vmatpush2.msra.mxu0 %v1486
  %1570 = vmatprep.subr.mxu0 0.0
  %1571 = vmatpush2.msra.mxu0 %v1485
  %1572 = vmatprep.mubr.f32.mxu0 %v1497
  %1573 = vmatmul.mubr.f32.gmra.mxu0 %v1461
  %v1574 = vpop.f32.mrf.mxu0
  %v1575 = vadd.f32 %v1494, %v1574
  %v1576 = vpop.f32.mrf.mxu0
  %1577 = vmatprep.mubr.f32.mxu0 %v1500
  %1578 = vmatmul.mubr.f32.gmra.mxu0 %v1463
  %v1579 = vpop.f32.mrf.mxu0
  %v1580 = vadd.f32 %v1494, %v1579
  %v1581 = vpop.f32.mrf.mxu0
  %1582 = vmatprep.mubr.f32.mxu0 %v1503
  %1583 = vmatmul.mubr.f32.gmra.mxu0 %v1465
  %v1584 = vpop.f32.mrf.mxu0
  %v1585 = vadd.f32 %v1494, %v1584
  %v1586 = vpop.f32.mrf.mxu0
  %1587 = vmatprep.mubr.f32.mxu0 %v1506
  %1588 = vmatmul.mubr.f32.gmra.mxu0 %v1467
  %v1589 = vpop.f32.mrf.mxu0
  %v1590 = vadd.f32 %v1494, %v1589
  %v1591 = vpop.f32.mrf.mxu0
  %1592 = vdwg.mxu0
  %v1597 = vrot.slane %v1575, 1
  %v1598 = vrot.slane %v1575, 2
  %v1599 = vrot.slane %v1575, 3
  %v1600 = vrot.slane %v1575, 4
  %v1601 = vrot.slane %v1575, 5
  %v1602 = vrot.slane %v1575, 6
  %v1603 = vrot.slane %v1575, 7
  %v1604 = vrot.slane %v1580, 1
  %v1605 = vrot.slane %v1580, 2
  %v1606 = vrot.slane %v1580, 3
  %v1607 = vrot.slane %v1580, 4
  %v1608 = vrot.slane %v1580, 5
  %v1609 = vrot.slane %v1580, 6
  %v1610 = vrot.slane %v1580, 7
  %v1611 = vrot.slane %v1585, 1
  %v1612 = vrot.slane %v1585, 2
  %v1613 = vrot.slane %v1585, 3
  %v1614 = vrot.slane %v1585, 4
  %v1615 = vrot.slane %v1585, 5
  %v1616 = vrot.slane %v1585, 6
  %v1617 = vrot.slane %v1585, 7
  %v1618 = vrot.slane %v1590, 1
  %v1619 = vrot.slane %v1590, 2
  %v1620 = vrot.slane %v1590, 3
  %v1621 = vrot.slane %v1590, 4
  %v1622 = vrot.slane %v1590, 5
  %v1623 = vrot.slane %v1590, 6
  %v1624 = vrot.slane %v1590, 7
  %v1657 = vadd.f32 %v1057, %v1575
  %v1658 = vadd.f32 %v1070, %v1597
  %v1659 = vadd.f32 %v1083, %v1598
  %v1660 = vadd.f32 %v1096, %v1599
  %v1661 = vadd.f32 %v1109, %v1600
  %v1662 = vadd.f32 %v1122, %v1601
  %v1663 = vadd.f32 %v1135, %v1602
  %v1664 = vadd.f32 %v1148, %v1603
  %v1665 = vadd.f32 %v1161, %v1580
  %v1666 = vadd.f32 %v1174, %v1604
  %v1667 = vadd.f32 %v1187, %v1605
  %v1668 = vadd.f32 %v1200, %v1606
  %v1669 = vadd.f32 %v1213, %v1607
  %v1670 = vadd.f32 %v1226, %v1608
  %v1671 = vadd.f32 %v1239, %v1609
  %v1672 = vadd.f32 %v1252, %v1610
  %v1673 = vadd.f32 %v1265, %v1585
  %v1674 = vadd.f32 %v1278, %v1611
  %v1675 = vadd.f32 %v1291, %v1612
  %v1676 = vadd.f32 %v1304, %v1613
  %v1677 = vadd.f32 %v1317, %v1614
  %v1678 = vadd.f32 %v1330, %v1615
  %v1679 = vadd.f32 %v1343, %v1616
  %v1680 = vadd.f32 %v1356, %v1617
  %v1681 = vadd.f32 %v1369, %v1590
  %v1682 = vadd.f32 %v1382, %v1618
  %v1683 = vadd.f32 %v1395, %v1619
  %v1684 = vadd.f32 %v1408, %v1620
  %v1685 = vadd.f32 %v1421, %v1621
  %v1686 = vadd.f32 %v1434, %v1622
  %v1687 = vadd.f32 %v1447, %v1623
  %v1688 = vadd.f32 %v1460, %v1624
  %v1721 = vrot.slane %v1658, 7
  %vm1722 = vcmask 1041409
  %v1723 = vsel %vm1722, %v1721, %v1657
  %v1724 = vrot.slane %v1659, 6
  %vm1725 = vcmask 1042434
  %v1726 = vsel %vm1725, %v1724, %v1723
  %v1727 = vrot.slane %v1660, 5
  %vm1728 = vcmask 1043459
  %v1729 = vsel %vm1728, %v1727, %v1726
  %v1730 = vrot.slane %v1661, 4
  %vm1731 = vcmask 1044484
  %v1732 = vsel %vm1731, %v1730, %v1729
  %v1733 = vrot.slane %v1662, 3
  %vm1734 = vcmask 1045509
  %v1735 = vsel %vm1734, %v1733, %v1732
  %v1736 = vrot.slane %v1663, 2
  %vm1737 = vcmask 1046534
  %v1738 = vsel %vm1737, %v1736, %v1735
  %v1739 = vrot.slane %v1664, 1
  %vm1740 = vcmask 1047559
  %v1741 = vsel %vm1740, %v1739, %v1738
  %v1742 = vrot.slane %v1666, 7
  %v1743 = vsel %vm1722, %v1742, %v1665
  %v1744 = vrot.slane %v1667, 6
  %v1745 = vsel %vm1725, %v1744, %v1743
  %v1746 = vrot.slane %v1668, 5
  %v1747 = vsel %vm1728, %v1746, %v1745
  %v1748 = vrot.slane %v1669, 4
  %v1749 = vsel %vm1731, %v1748, %v1747
  %v1750 = vrot.slane %v1670, 3
  %v1751 = vsel %vm1734, %v1750, %v1749
  %v1752 = vrot.slane %v1671, 2
  %v1753 = vsel %vm1737, %v1752, %v1751
  %v1754 = vrot.slane %v1672, 1
  %v1755 = vsel %vm1740, %v1754, %v1753
  %v1756 = vrot.slane %v1674, 7
  %v1757 = vsel %vm1722, %v1756, %v1673
  %v1758 = vrot.slane %v1675, 6
  %v1759 = vsel %vm1725, %v1758, %v1757
  %v1760 = vrot.slane %v1676, 5
  %v1761 = vsel %vm1728, %v1760, %v1759
  %v1762 = vrot.slane %v1677, 4
  %v1763 = vsel %vm1731, %v1762, %v1761
  %v1764 = vrot.slane %v1678, 3
  %v1765 = vsel %vm1734, %v1764, %v1763
  %v1766 = vrot.slane %v1679, 2
  %v1767 = vsel %vm1737, %v1766, %v1765
  %v1768 = vrot.slane %v1680, 1
  %v1769 = vsel %vm1740, %v1768, %v1767
  %v1770 = vrot.slane %v1682, 7
  %v1771 = vsel %vm1722, %v1770, %v1681
  %v1772 = vrot.slane %v1683, 6
  %v1773 = vsel %vm1725, %v1772, %v1771
  %v1774 = vrot.slane %v1684, 5
  %v1775 = vsel %vm1728, %v1774, %v1773
  %v1776 = vrot.slane %v1685, 4
  %v1777 = vsel %vm1731, %v1776, %v1775
  %v1778 = vrot.slane %v1686, 3
  %v1779 = vsel %vm1734, %v1778, %v1777
  %v1780 = vrot.slane %v1687, 2
  %v1781 = vsel %vm1737, %v1780, %v1779
  %v1782 = vrot.slane %v1688, 1
  %v1783 = vsel %vm1740, %v1782, %v1781
  %1788 = vst.msk [vmem:[%s5] sm:$0xff] %vm1044, %v1741
  %1789 = vst.msk [vmem:[%s5 + $0x8] sm:$0xff] %vm1044, %v1755
  %1790 = vst.msk [vmem:[%s5 + $0x10] sm:$0xff] %vm1044, %v1769
  %1791 = vst.msk [vmem:[%s5 + $0x18] sm:$0xff] %vm1044, %v1783
  // Predicated region
  $region22: #{hyper_network_fc_forward.5} parent=0 // pred_check
    _
  $region23: #{hyper_network_fc_forward.5} parent=0 // pred_check_branch
    %1793 = sbr.rel (0) target = $region25
  $region24: #{hyper_network_fc_forward.5} parent=0 // pred_region
    _
  $region25: #{hyper_network_fc_forward.5} parent=0 // pred_fallthru
    _
  // Predicated region
  $region26: #{hyper_network_fc_forward.5} parent=0 // pred_check
    _
  $region27: #{hyper_network_fc_forward.5} parent=0 // pred_check_branch
    %1795 = sbr.rel (0) target = $region29
  $region28: #{hyper_network_fc_forward.5} parent=0 // pred_region
    _
  $region29: #{hyper_network_fc_forward.5} parent=0 // pred_fallthru
    _

// kernel: hyper_network_fc_forward.7
$region0: #{hyper_network_fc_forward.7}
  #allocation0 [shape = 'u32[]', space=smem, size = 0x4, offset = 0x4, fixed_abs, tag = 'smem constant byte address 0x4 - core index']
  #allocation1 [shape = 'u32[144,128]{1,0:T(1,128)}', space=vmem, size = 0x12000, scoped, tag = 'internal scratch']
  %s0 = inlined_call_operand.vmem [shape: f32[32,32,1], index: 0, kind: input, shape index: {}]
  %s1 = inlined_call_operand.vmem [shape: f32[32,32,16], index: 1, kind: input, shape index: {}]
  %s2 = inlined_call_operand.vmem [shape: f32[32,160], index: 2, kind: input, shape index: {}]
  %s3 = inlined_call_operand.vmem [shape: f32[160,16], index: 3, kind: input, shape index: {}]
  %s4 = inlined_call_operand.vmem [shape: f32[1,16], index: 4, kind: input, shape index: {}]
  %s5 = inlined_call_operand.vmem [shape: f32[32,16], index: 5, kind: output, shape index: {}]
  %s6 = sld [smem:[#allocation0]]
  $region30: #{hyper_network_fc_forward.7} parent=0
    _
  %s8 = ssub.s32 1, %s6
  %s9 = scalar_select 0, %s8, %s6
  // Predicated region
  $region2: #{hyper_network_fc_forward.7} parent=0 // pred_check
    _
  $region3: #{hyper_network_fc_forward.7} parent=0 // pred_check_branch
    %11 = sbr.rel (0) target = $region5
  $region4: #{hyper_network_fc_forward.7} parent=0 // pred_region
    _
  $region5: #{hyper_network_fc_forward.7} parent=0 // pred_fallthru
    _
  // Predicated region
  $region6: #{hyper_network_fc_forward.7} parent=0 // pred_check
    _
  $region7: #{hyper_network_fc_forward.7} parent=0 // pred_check_branch
    %13 = sbr.rel (0) target = $region9
  $region8: #{hyper_network_fc_forward.7} parent=0 // pred_region
    _
  $region9: #{hyper_network_fc_forward.7} parent=0 // pred_fallthru
    _
  // Predicated region
  $region10: #{hyper_network_fc_forward.7} parent=0 // pred_check
    _
  $region11: #{hyper_network_fc_forward.7} parent=0 // pred_check_branch
    %15 = sbr.rel (0) target = $region13
  $region12: #{hyper_network_fc_forward.7} parent=0 // pred_region
    _
  $region13: #{hyper_network_fc_forward.7} parent=0 // pred_fallthru
    _
  // Predicated region
  $region14: #{hyper_network_fc_forward.7} parent=0 // pred_check
    _
  $region15: #{hyper_network_fc_forward.7} parent=0 // pred_check_branch
    %17 = sbr.rel (0) target = $region17
  $region16: #{hyper_network_fc_forward.7} parent=0 // pred_region
    _
  $region17: #{hyper_network_fc_forward.7} parent=0 // pred_fallthru
    _
  // Predicated region
  $region18: #{hyper_network_fc_forward.7} parent=0 // pred_check
    _
  $region19: #{hyper_network_fc_forward.7} parent=0 // pred_check_branch
    %19 = sbr.rel (0) target = $region21
  $region20: #{hyper_network_fc_forward.7} parent=0 // pred_region
    _
  $region21: #{hyper_network_fc_forward.7} parent=0 // pred_fallthru
    _
  %v20 = vld [vmem:[%s0] sm:$0xff]
  %v21 = vld [vmem:[%s0 + $0x8] sm:$0xff]
  %v22 = vld [vmem:[%s0 + $0x10] sm:$0xff]
  %v23 = vld [vmem:[%s0 + $0x18] sm:$0xff]
  %v24 = vld [vmem:[%s0 + $0x20] sm:$0xff]
  %v25 = vld [vmem:[%s0 + $0x28] sm:$0xff]
  %v26 = vld [vmem:[%s0 + $0x30] sm:$0xff]
  %v27 = vld [vmem:[%s0 + $0x38] sm:$0xff]
  %v28 = vld [vmem:[%s0 + $0x40] sm:$0xff]
  %v29 = vld [vmem:[%s0 + $0x48] sm:$0xff]
  %v30 = vld [vmem:[%s0 + $0x50] sm:$0xff]
  %v31 = vld [vmem:[%s0 + $0x58] sm:$0xff]
  %v32 = vld [vmem:[%s0 + $0x60] sm:$0xff]
  %v33 = vld [vmem:[%s0 + $0x68] sm:$0xff]
  %v34 = vld [vmem:[%s0 + $0x70] sm:$0xff]
  %v35 = vld [vmem:[%s0 + $0x78] sm:$0xff]
  %v36 = vld [vmem:[%s0 + $0x80] sm:$0xff]
  %v37 = vld [vmem:[%s0 + $0x88] sm:$0xff]
  %v38 = vld [vmem:[%s0 + $0x90] sm:$0xff]
  %v39 = vld [vmem:[%s0 + $0x98] sm:$0xff]
  %v40 = vld [vmem:[%s0 + $0xa0] sm:$0xff]
  %v41 = vld [vmem:[%s0 + $0xa8] sm:$0xff]
  %v42 = vld [vmem:[%s0 + $0xb0] sm:$0xff]
  %v43 = vld [vmem:[%s0 + $0xb8] sm:$0xff]
  %v44 = vld [vmem:[%s0 + $0xc0] sm:$0xff]
  %v45 = vld [vmem:[%s0 + $0xc8] sm:$0xff]
  %v46 = vld [vmem:[%s0 + $0xd0] sm:$0xff]
  %v47 = vld [vmem:[%s0 + $0xd8] sm:$0xff]
  %v48 = vld [vmem:[%s0 + $0xe0] sm:$0xff]
  %v49 = vld [vmem:[%s0 + $0xe8] sm:$0xff]
  %v50 = vld [vmem:[%s0 + $0xf0] sm:$0xff]
  %v51 = vld [vmem:[%s0 + $0xf8] sm:$0xff]
  %v52 = vld [vmem:[%s0 + $0x100] sm:$0xff]
  %v53 = vld [vmem:[%s0 + $0x108] sm:$0xff]
  %v54 = vld [vmem:[%s0 + $0x110] sm:$0xff]
  %v55 = vld [vmem:[%s0 + $0x118] sm:$0xff]
  %v56 = vld [vmem:[%s0 + $0x120] sm:$0xff]
  %v57 = vld [vmem:[%s0 + $0x128] sm:$0xff]
  %v58 = vld [vmem:[%s0 + $0x130] sm:$0xff]
  %v59 = vld [vmem:[%s0 + $0x138] sm:$0xff]
  %v60 = vld [vmem:[%s0 + $0x140] sm:$0xff]
  %v61 = vld [vmem:[%s0 + $0x148] sm:$0xff]
  %v62 = vld [vmem:[%s0 + $0x150] sm:$0xff]
  %v63 = vld [vmem:[%s0 + $0x158] sm:$0xff]
  %v64 = vld [vmem:[%s0 + $0x160] sm:$0xff]
  %v65 = vld [vmem:[%s0 + $0x168] sm:$0xff]
  %v66 = vld [vmem:[%s0 + $0x170] sm:$0xff]
  %v67 = vld [vmem:[%s0 + $0x178] sm:$0xff]
  %v68 = vld [vmem:[%s0 + $0x180] sm:$0xff]
  %v69 = vld [vmem:[%s0 + $0x188] sm:$0xff]
  %v70 = vld [vmem:[%s0 + $0x190] sm:$0xff]
  %v71 = vld [vmem:[%s0 + $0x198] sm:$0xff]
  %v72 = vld [vmem:[%s0 + $0x1a0] sm:$0xff]
  %v73 = vld [vmem:[%s0 + $0x1a8] sm:$0xff]
  %v74 = vld [vmem:[%s0 + $0x1b0] sm:$0xff]
  %v75 = vld [vmem:[%s0 + $0x1b8] sm:$0xff]
  %v76 = vld [vmem:[%s0 + $0x1c0] sm:$0xff]
  %v77 = vld [vmem:[%s0 + $0x1c8] sm:$0xff]
  %v78 = vld [vmem:[%s0 + $0x1d0] sm:$0xff]
  %v79 = vld [vmem:[%s0 + $0x1d8] sm:$0xff]
  %v80 = vld [vmem:[%s0 + $0x1e0] sm:$0xff]
  %v81 = vld [vmem:[%s0 + $0x1e8] sm:$0xff]
  %v82 = vld [vmem:[%s0 + $0x1f0] sm:$0xff]
  %v83 = vld [vmem:[%s0 + $0x1f8] sm:$0xff]
  %v84 = vld [vmem:[%s0 + $0x200] sm:$0xff]
  %v85 = vld [vmem:[%s0 + $0x208] sm:$0xff]
  %v86 = vld [vmem:[%s0 + $0x210] sm:$0xff]
  %v87 = vld [vmem:[%s0 + $0x218] sm:$0xff]
  %v88 = vld [vmem:[%s0 + $0x220] sm:$0xff]
  %v89 = vld [vmem:[%s0 + $0x228] sm:$0xff]
  %v90 = vld [vmem:[%s0 + $0x230] sm:$0xff]
  %v91 = vld [vmem:[%s0 + $0x238] sm:$0xff]
  %v92 = vld [vmem:[%s0 + $0x240] sm:$0xff]
  %v93 = vld [vmem:[%s0 + $0x248] sm:$0xff]
  %v94 = vld [vmem:[%s0 + $0x250] sm:$0xff]
  %v95 = vld [vmem:[%s0 + $0x258] sm:$0xff]
  %v96 = vld [vmem:[%s0 + $0x260] sm:$0xff]
  %v97 = vld [vmem:[%s0 + $0x268] sm:$0xff]
  %v98 = vld [vmem:[%s0 + $0x270] sm:$0xff]
  %v99 = vld [vmem:[%s0 + $0x278] sm:$0xff]
  %v100 = vld [vmem:[%s0 + $0x280] sm:$0xff]
  %v101 = vld [vmem:[%s0 + $0x288] sm:$0xff]
  %v102 = vld [vmem:[%s0 + $0x290] sm:$0xff]
  %v103 = vld [vmem:[%s0 + $0x298] sm:$0xff]
  %v104 = vld [vmem:[%s0 + $0x2a0] sm:$0xff]
  %v105 = vld [vmem:[%s0 + $0x2a8] sm:$0xff]
  %v106 = vld [vmem:[%s0 + $0x2b0] sm:$0xff]
  %v107 = vld [vmem:[%s0 + $0x2b8] sm:$0xff]
  %v108 = vld [vmem:[%s0 + $0x2c0] sm:$0xff]
  %v109 = vld [vmem:[%s0 + $0x2c8] sm:$0xff]
  %v110 = vld [vmem:[%s0 + $0x2d0] sm:$0xff]
  %v111 = vld [vmem:[%s0 + $0x2d8] sm:$0xff]
  %v112 = vld [vmem:[%s0 + $0x2e0] sm:$0xff]
  %v113 = vld [vmem:[%s0 + $0x2e8] sm:$0xff]
  %v114 = vld [vmem:[%s0 + $0x2f0] sm:$0xff]
  %v115 = vld [vmem:[%s0 + $0x2f8] sm:$0xff]
  %v116 = vld [vmem:[%s0 + $0x300] sm:$0xff]
  %v117 = vld [vmem:[%s0 + $0x308] sm:$0xff]
  %v118 = vld [vmem:[%s0 + $0x310] sm:$0xff]
  %v119 = vld [vmem:[%s0 + $0x318] sm:$0xff]
  %v120 = vld [vmem:[%s0 + $0x320] sm:$0xff]
  %v121 = vld [vmem:[%s0 + $0x328] sm:$0xff]
  %v122 = vld [vmem:[%s0 + $0x330] sm:$0xff]
  %v123 = vld [vmem:[%s0 + $0x338] sm:$0xff]
  %v124 = vld [vmem:[%s0 + $0x340] sm:$0xff]
  %v125 = vld [vmem:[%s0 + $0x348] sm:$0xff]
  %v126 = vld [vmem:[%s0 + $0x350] sm:$0xff]
  %v127 = vld [vmem:[%s0 + $0x358] sm:$0xff]
  %v128 = vld [vmem:[%s0 + $0x360] sm:$0xff]
  %v129 = vld [vmem:[%s0 + $0x368] sm:$0xff]
  %v130 = vld [vmem:[%s0 + $0x370] sm:$0xff]
  %v131 = vld [vmem:[%s0 + $0x378] sm:$0xff]
  %v132 = vld [vmem:[%s0 + $0x380] sm:$0xff]
  %v133 = vld [vmem:[%s0 + $0x388] sm:$0xff]
  %v134 = vld [vmem:[%s0 + $0x390] sm:$0xff]
  %v135 = vld [vmem:[%s0 + $0x398] sm:$0xff]
  %v136 = vld [vmem:[%s0 + $0x3a0] sm:$0xff]
  %v137 = vld [vmem:[%s0 + $0x3a8] sm:$0xff]
  %v138 = vld [vmem:[%s0 + $0x3b0] sm:$0xff]
  %v139 = vld [vmem:[%s0 + $0x3b8] sm:$0xff]
  %v140 = vld [vmem:[%s0 + $0x3c0] sm:$0xff]
  %v141 = vld [vmem:[%s0 + $0x3c8] sm:$0xff]
  %v142 = vld [vmem:[%s0 + $0x3d0] sm:$0xff]
  %v143 = vld [vmem:[%s0 + $0x3d8] sm:$0xff]
  %v144 = vld [vmem:[%s0 + $0x3e0] sm:$0xff]
  %v145 = vld [vmem:[%s0 + $0x3e8] sm:$0xff]
  %v146 = vld [vmem:[%s0 + $0x3f0] sm:$0xff]
  %v147 = vld [vmem:[%s0 + $0x3f8] sm:$0xff]
  %v148 = vld [vmem:[%s1] sm:$0xff]
  %v149 = vld [vmem:[%s1 + $0x8] sm:$0xff]
  %v150 = vld [vmem:[%s1 + $0x10] sm:$0xff]
  %v151 = vld [vmem:[%s1 + $0x18] sm:$0xff]
  %v152 = vld [vmem:[%s1 + $0x20] sm:$0xff]
  %v153 = vld [vmem:[%s1 + $0x28] sm:$0xff]
  %v154 = vld [vmem:[%s1 + $0x30] sm:$0xff]
  %v155 = vld [vmem:[%s1 + $0x38] sm:$0xff]
  %v156 = vld [vmem:[%s1 + $0x40] sm:$0xff]
  %v157 = vld [vmem:[%s1 + $0x48] sm:$0xff]
  %v158 = vld [vmem:[%s1 + $0x50] sm:$0xff]
  %v159 = vld [vmem:[%s1 + $0x58] sm:$0xff]
  %v160 = vld [vmem:[%s1 + $0x60] sm:$0xff]
  %v161 = vld [vmem:[%s1 + $0x68] sm:$0xff]
  %v162 = vld [vmem:[%s1 + $0x70] sm:$0xff]
  %v163 = vld [vmem:[%s1 + $0x78] sm:$0xff]
  %v164 = vld [vmem:[%s1 + $0x80] sm:$0xff]
  %v165 = vld [vmem:[%s1 + $0x88] sm:$0xff]
  %v166 = vld [vmem:[%s1 + $0x90] sm:$0xff]
  %v167 = vld [vmem:[%s1 + $0x98] sm:$0xff]
  %v168 = vld [vmem:[%s1 + $0xa0] sm:$0xff]
  %v169 = vld [vmem:[%s1 + $0xa8] sm:$0xff]
  %v170 = vld [vmem:[%s1 + $0xb0] sm:$0xff]
  %v171 = vld [vmem:[%s1 + $0xb8] sm:$0xff]
  %v172 = vld [vmem:[%s1 + $0xc0] sm:$0xff]
  %v173 = vld [vmem:[%s1 + $0xc8] sm:$0xff]
  %v174 = vld [vmem:[%s1 + $0xd0] sm:$0xff]
  %v175 = vld [vmem:[%s1 + $0xd8] sm:$0xff]
  %v176 = vld [vmem:[%s1 + $0xe0] sm:$0xff]
  %v177 = vld [vmem:[%s1 + $0xe8] sm:$0xff]
  %v178 = vld [vmem:[%s1 + $0xf0] sm:$0xff]
  %v179 = vld [vmem:[%s1 + $0xf8] sm:$0xff]
  %v180 = vld [vmem:[%s1 + $0x100] sm:$0xff]
  %v181 = vld [vmem:[%s1 + $0x108] sm:$0xff]
  %v182 = vld [vmem:[%s1 + $0x110] sm:$0xff]
  %v183 = vld [vmem:[%s1 + $0x118] sm:$0xff]
  %v184 = vld [vmem:[%s1 + $0x120] sm:$0xff]
  %v185 = vld [vmem:[%s1 + $0x128] sm:$0xff]
  %v186 = vld [vmem:[%s1 + $0x130] sm:$0xff]
  %v187 = vld [vmem:[%s1 + $0x138] sm:$0xff]
  %v188 = vld [vmem:[%s1 + $0x140] sm:$0xff]
  %v189 = vld [vmem:[%s1 + $0x148] sm:$0xff]
  %v190 = vld [vmem:[%s1 + $0x150] sm:$0xff]
  %v191 = vld [vmem:[%s1 + $0x158] sm:$0xff]
  %v192 = vld [vmem:[%s1 + $0x160] sm:$0xff]
  %v193 = vld [vmem:[%s1 + $0x168] sm:$0xff]
  %v194 = vld [vmem:[%s1 + $0x170] sm:$0xff]
  %v195 = vld [vmem:[%s1 + $0x178] sm:$0xff]
  %v196 = vld [vmem:[%s1 + $0x180] sm:$0xff]
  %v197 = vld [vmem:[%s1 + $0x188] sm:$0xff]
  %v198 = vld [vmem:[%s1 + $0x190] sm:$0xff]
  %v199 = vld [vmem:[%s1 + $0x198] sm:$0xff]
  %v200 = vld [vmem:[%s1 + $0x1a0] sm:$0xff]
  %v201 = vld [vmem:[%s1 + $0x1a8] sm:$0xff]
  %v202 = vld [vmem:[%s1 + $0x1b0] sm:$0xff]
  %v203 = vld [vmem:[%s1 + $0x1b8] sm:$0xff]
  %v204 = vld [vmem:[%s1 + $0x1c0] sm:$0xff]
  %v205 = vld [vmem:[%s1 + $0x1c8] sm:$0xff]
  %v206 = vld [vmem:[%s1 + $0x1d0] sm:$0xff]
  %v207 = vld [vmem:[%s1 + $0x1d8] sm:$0xff]
  %v208 = vld [vmem:[%s1 + $0x1e0] sm:$0xff]
  %v209 = vld [vmem:[%s1 + $0x1e8] sm:$0xff]
  %v210 = vld [vmem:[%s1 + $0x1f0] sm:$0xff]
  %v211 = vld [vmem:[%s1 + $0x1f8] sm:$0xff]
  %v212 = vld [vmem:[%s1 + $0x200] sm:$0xff]
  %v213 = vld [vmem:[%s1 + $0x208] sm:$0xff]
  %v214 = vld [vmem:[%s1 + $0x210] sm:$0xff]
  %v215 = vld [vmem:[%s1 + $0x218] sm:$0xff]
  %v216 = vld [vmem:[%s1 + $0x220] sm:$0xff]
  %v217 = vld [vmem:[%s1 + $0x228] sm:$0xff]
  %v218 = vld [vmem:[%s1 + $0x230] sm:$0xff]
  %v219 = vld [vmem:[%s1 + $0x238] sm:$0xff]
  %v220 = vld [vmem:[%s1 + $0x240] sm:$0xff]
  %v221 = vld [vmem:[%s1 + $0x248] sm:$0xff]
  %v222 = vld [vmem:[%s1 + $0x250] sm:$0xff]
  %v223 = vld [vmem:[%s1 + $0x258] sm:$0xff]
  %v224 = vld [vmem:[%s1 + $0x260] sm:$0xff]
  %v225 = vld [vmem:[%s1 + $0x268] sm:$0xff]
  %v226 = vld [vmem:[%s1 + $0x270] sm:$0xff]
  %v227 = vld [vmem:[%s1 + $0x278] sm:$0xff]
  %v228 = vld [vmem:[%s1 + $0x280] sm:$0xff]
  %v229 = vld [vmem:[%s1 + $0x288] sm:$0xff]
  %v230 = vld [vmem:[%s1 + $0x290] sm:$0xff]
  %v231 = vld [vmem:[%s1 + $0x298] sm:$0xff]
  %v232 = vld [vmem:[%s1 + $0x2a0] sm:$0xff]
  %v233 = vld [vmem:[%s1 + $0x2a8] sm:$0xff]
  %v234 = vld [vmem:[%s1 + $0x2b0] sm:$0xff]
  %v235 = vld [vmem:[%s1 + $0x2b8] sm:$0xff]
  %v236 = vld [vmem:[%s1 + $0x2c0] sm:$0xff]
  %v237 = vld [vmem:[%s1 + $0x2c8] sm:$0xff]
  %v238 = vld [vmem:[%s1 + $0x2d0] sm:$0xff]
  %v239 = vld [vmem:[%s1 + $0x2d8] sm:$0xff]
  %v240 = vld [vmem:[%s1 + $0x2e0] sm:$0xff]
  %v241 = vld [vmem:[%s1 + $0x2e8] sm:$0xff]
  %v242 = vld [vmem:[%s1 + $0x2f0] sm:$0xff]
  %v243 = vld [vmem:[%s1 + $0x2f8] sm:$0xff]
  %v244 = vld [vmem:[%s1 + $0x300] sm:$0xff]
  %v245 = vld [vmem:[%s1 + $0x308] sm:$0xff]
  %v246 = vld [vmem:[%s1 + $0x310] sm:$0xff]
  %v247 = vld [vmem:[%s1 + $0x318] sm:$0xff]
  %v248 = vld [vmem:[%s1 + $0x320] sm:$0xff]
  %v249 = vld [vmem:[%s1 + $0x328] sm:$0xff]
  %v250 = vld [vmem:[%s1 + $0x330] sm:$0xff]
  %v251 = vld [vmem:[%s1 + $0x338] sm:$0xff]
  %v252 = vld [vmem:[%s1 + $0x340] sm:$0xff]
  %v253 = vld [vmem:[%s1 + $0x348] sm:$0xff]
  %v254 = vld [vmem:[%s1 + $0x350] sm:$0xff]
  %v255 = vld [vmem:[%s1 + $0x358] sm:$0xff]
  %v256 = vld [vmem:[%s1 + $0x360] sm:$0xff]
  %v257 = vld [vmem:[%s1 + $0x368] sm:$0xff]
  %v258 = vld [vmem:[%s1 + $0x370] sm:$0xff]
  %v259 = vld [vmem:[%s1 + $0x378] sm:$0xff]
  %v260 = vld [vmem:[%s1 + $0x380] sm:$0xff]
  %v261 = vld [vmem:[%s1 + $0x388] sm:$0xff]
  %v262 = vld [vmem:[%s1 + $0x390] sm:$0xff]
  %v263 = vld [vmem:[%s1 + $0x398] sm:$0xff]
  %v264 = vld [vmem:[%s1 + $0x3a0] sm:$0xff]
  %v265 = vld [vmem:[%s1 + $0x3a8] sm:$0xff]
  %v266 = vld [vmem:[%s1 + $0x3b0] sm:$0xff]
  %v267 = vld [vmem:[%s1 + $0x3b8] sm:$0xff]
  %v268 = vld [vmem:[%s1 + $0x3c0] sm:$0xff]
  %v269 = vld [vmem:[%s1 + $0x3c8] sm:$0xff]
  %v270 = vld [vmem:[%s1 + $0x3d0] sm:$0xff]
  %v271 = vld [vmem:[%s1 + $0x3d8] sm:$0xff]
  %v272 = vld [vmem:[%s1 + $0x3e0] sm:$0xff]
  %v273 = vld [vmem:[%s1 + $0x3e8] sm:$0xff]
  %v274 = vld [vmem:[%s1 + $0x3f0] sm:$0xff]
  %v275 = vld [vmem:[%s1 + $0x3f8] sm:$0xff]
  %277 = vset.pattern.permute.xlu0 0
  %278 = vperm.xlu0 %277, %v20
  %v279 = vpop.permute.xlu0 %278
  %282 = vset.pattern.permute.xlu0 0
  %283 = vperm.xlu0 %282, %v21
  %v284 = vpop.permute.xlu0 %283
  %287 = vset.pattern.permute.xlu0 0
  %288 = vperm.xlu0 %287, %v22
  %v289 = vpop.permute.xlu0 %288
  %292 = vset.pattern.permute.xlu0 0
  %293 = vperm.xlu0 %292, %v23
  %v294 = vpop.permute.xlu0 %293
  %297 = vset.pattern.permute.xlu0 0
  %298 = vperm.xlu0 %297, %v24
  %v299 = vpop.permute.xlu0 %298
  %302 = vset.pattern.permute.xlu0 0
  %303 = vperm.xlu0 %302, %v25
  %v304 = vpop.permute.xlu0 %303
  %307 = vset.pattern.permute.xlu0 0
  %308 = vperm.xlu0 %307, %v26
  %v309 = vpop.permute.xlu0 %308
  %312 = vset.pattern.permute.xlu0 0
  %313 = vperm.xlu0 %312, %v27
  %v314 = vpop.permute.xlu0 %313
  %317 = vset.pattern.permute.xlu0 0
  %318 = vperm.xlu0 %317, %v28
  %v319 = vpop.permute.xlu0 %318
  %322 = vset.pattern.permute.xlu0 0
  %323 = vperm.xlu0 %322, %v29
  %v324 = vpop.permute.xlu0 %323
  %327 = vset.pattern.permute.xlu0 0
  %328 = vperm.xlu0 %327, %v30
  %v329 = vpop.permute.xlu0 %328
  %332 = vset.pattern.permute.xlu0 0
  %333 = vperm.xlu0 %332, %v31
  %v334 = vpop.permute.xlu0 %333
  %337 = vset.pattern.permute.xlu0 0
  %338 = vperm.xlu0 %337, %v32
  %v339 = vpop.permute.xlu0 %338
  %342 = vset.pattern.permute.xlu0 0
  %343 = vperm.xlu0 %342, %v33
  %v344 = vpop.permute.xlu0 %343
  %347 = vset.pattern.permute.xlu0 0
  %348 = vperm.xlu0 %347, %v34
  %v349 = vpop.permute.xlu0 %348
  %352 = vset.pattern.permute.xlu0 0
  %353 = vperm.xlu0 %352, %v35
  %v354 = vpop.permute.xlu0 %353
  %357 = vset.pattern.permute.xlu0 0
  %358 = vperm.xlu0 %357, %v36
  %v359 = vpop.permute.xlu0 %358
  %362 = vset.pattern.permute.xlu0 0
  %363 = vperm.xlu0 %362, %v37
  %v364 = vpop.permute.xlu0 %363
  %367 = vset.pattern.permute.xlu0 0
  %368 = vperm.xlu0 %367, %v38
  %v369 = vpop.permute.xlu0 %368
  %372 = vset.pattern.permute.xlu0 0
  %373 = vperm.xlu0 %372, %v39
  %v374 = vpop.permute.xlu0 %373
  %377 = vset.pattern.permute.xlu0 0
  %378 = vperm.xlu0 %377, %v40
  %v379 = vpop.permute.xlu0 %378
  %382 = vset.pattern.permute.xlu0 0
  %383 = vperm.xlu0 %382, %v41
  %v384 = vpop.permute.xlu0 %383
  %387 = vset.pattern.permute.xlu0 0
  %388 = vperm.xlu0 %387, %v42
  %v389 = vpop.permute.xlu0 %388
  %392 = vset.pattern.permute.xlu0 0
  %393 = vperm.xlu0 %392, %v43
  %v394 = vpop.permute.xlu0 %393
  %397 = vset.pattern.permute.xlu0 0
  %398 = vperm.xlu0 %397, %v44
  %v399 = vpop.permute.xlu0 %398
  %402 = vset.pattern.permute.xlu0 0
  %403 = vperm.xlu0 %402, %v45
  %v404 = vpop.permute.xlu0 %403
  %407 = vset.pattern.permute.xlu0 0
  %408 = vperm.xlu0 %407, %v46
  %v409 = vpop.permute.xlu0 %408
  %412 = vset.pattern.permute.xlu0 0
  %413 = vperm.xlu0 %412, %v47
  %v414 = vpop.permute.xlu0 %413
  %417 = vset.pattern.permute.xlu0 0
  %418 = vperm.xlu0 %417, %v48
  %v419 = vpop.permute.xlu0 %418
  %422 = vset.pattern.permute.xlu0 0
  %423 = vperm.xlu0 %422, %v49
  %v424 = vpop.permute.xlu0 %423
  %427 = vset.pattern.permute.xlu0 0
  %428 = vperm.xlu0 %427, %v50
  %v429 = vpop.permute.xlu0 %428
  %432 = vset.pattern.permute.xlu0 0
  %433 = vperm.xlu0 %432, %v51
  %v434 = vpop.permute.xlu0 %433
  %437 = vset.pattern.permute.xlu0 0
  %438 = vperm.xlu0 %437, %v52
  %v439 = vpop.permute.xlu0 %438
  %442 = vset.pattern.permute.xlu0 0
  %443 = vperm.xlu0 %442, %v53
  %v444 = vpop.permute.xlu0 %443
  %447 = vset.pattern.permute.xlu0 0
  %448 = vperm.xlu0 %447, %v54
  %v449 = vpop.permute.xlu0 %448
  %452 = vset.pattern.permute.xlu0 0
  %453 = vperm.xlu0 %452, %v55
  %v454 = vpop.permute.xlu0 %453
  %457 = vset.pattern.permute.xlu0 0
  %458 = vperm.xlu0 %457, %v56
  %v459 = vpop.permute.xlu0 %458
  %462 = vset.pattern.permute.xlu0 0
  %463 = vperm.xlu0 %462, %v57
  %v464 = vpop.permute.xlu0 %463
  %467 = vset.pattern.permute.xlu0 0
  %468 = vperm.xlu0 %467, %v58
  %v469 = vpop.permute.xlu0 %468
  %472 = vset.pattern.permute.xlu0 0
  %473 = vperm.xlu0 %472, %v59
  %v474 = vpop.permute.xlu0 %473
  %477 = vset.pattern.permute.xlu0 0
  %478 = vperm.xlu0 %477, %v60
  %v479 = vpop.permute.xlu0 %478
  %482 = vset.pattern.permute.xlu0 0
  %483 = vperm.xlu0 %482, %v61
  %v484 = vpop.permute.xlu0 %483
  %487 = vset.pattern.permute.xlu0 0
  %488 = vperm.xlu0 %487, %v62
  %v489 = vpop.permute.xlu0 %488
  %492 = vset.pattern.permute.xlu0 0
  %493 = vperm.xlu0 %492, %v63
  %v494 = vpop.permute.xlu0 %493
  %497 = vset.pattern.permute.xlu0 0
  %498 = vperm.xlu0 %497, %v64
  %v499 = vpop.permute.xlu0 %498
  %502 = vset.pattern.permute.xlu0 0
  %503 = vperm.xlu0 %502, %v65
  %v504 = vpop.permute.xlu0 %503
  %507 = vset.pattern.permute.xlu0 0
  %508 = vperm.xlu0 %507, %v66
  %v509 = vpop.permute.xlu0 %508
  %512 = vset.pattern.permute.xlu0 0
  %513 = vperm.xlu0 %512, %v67
  %v514 = vpop.permute.xlu0 %513
  %517 = vset.pattern.permute.xlu0 0
  %518 = vperm.xlu0 %517, %v68
  %v519 = vpop.permute.xlu0 %518
  %522 = vset.pattern.permute.xlu0 0
  %523 = vperm.xlu0 %522, %v69
  %v524 = vpop.permute.xlu0 %523
  %527 = vset.pattern.permute.xlu0 0
  %528 = vperm.xlu0 %527, %v70
  %v529 = vpop.permute.xlu0 %528
  %532 = vset.pattern.permute.xlu0 0
  %533 = vperm.xlu0 %532, %v71
  %v534 = vpop.permute.xlu0 %533
  %537 = vset.pattern.permute.xlu0 0
  %538 = vperm.xlu0 %537, %v72
  %v539 = vpop.permute.xlu0 %538
  %542 = vset.pattern.permute.xlu0 0
  %543 = vperm.xlu0 %542, %v73
  %v544 = vpop.permute.xlu0 %543
  %547 = vset.pattern.permute.xlu0 0
  %548 = vperm.xlu0 %547, %v74
  %v549 = vpop.permute.xlu0 %548
  %552 = vset.pattern.permute.xlu0 0
  %553 = vperm.xlu0 %552, %v75
  %v554 = vpop.permute.xlu0 %553
  %557 = vset.pattern.permute.xlu0 0
  %558 = vperm.xlu0 %557, %v76
  %v559 = vpop.permute.xlu0 %558
  %562 = vset.pattern.permute.xlu0 0
  %563 = vperm.xlu0 %562, %v77
  %v564 = vpop.permute.xlu0 %563
  %567 = vset.pattern.permute.xlu0 0
  %568 = vperm.xlu0 %567, %v78
  %v569 = vpop.permute.xlu0 %568
  %572 = vset.pattern.permute.xlu0 0
  %573 = vperm.xlu0 %572, %v79
  %v574 = vpop.permute.xlu0 %573
  %577 = vset.pattern.permute.xlu0 0
  %578 = vperm.xlu0 %577, %v80
  %v579 = vpop.permute.xlu0 %578
  %582 = vset.pattern.permute.xlu0 0
  %583 = vperm.xlu0 %582, %v81
  %v584 = vpop.permute.xlu0 %583
  %587 = vset.pattern.permute.xlu0 0
  %588 = vperm.xlu0 %587, %v82
  %v589 = vpop.permute.xlu0 %588
  %592 = vset.pattern.permute.xlu0 0
  %593 = vperm.xlu0 %592, %v83
  %v594 = vpop.permute.xlu0 %593
  %597 = vset.pattern.permute.xlu0 0
  %598 = vperm.xlu0 %597, %v84
  %v599 = vpop.permute.xlu0 %598
  %602 = vset.pattern.permute.xlu0 0
  %603 = vperm.xlu0 %602, %v85
  %v604 = vpop.permute.xlu0 %603
  %607 = vset.pattern.permute.xlu0 0
  %608 = vperm.xlu0 %607, %v86
  %v609 = vpop.permute.xlu0 %608
  %612 = vset.pattern.permute.xlu0 0
  %613 = vperm.xlu0 %612, %v87
  %v614 = vpop.permute.xlu0 %613
  %617 = vset.pattern.permute.xlu0 0
  %618 = vperm.xlu0 %617, %v88
  %v619 = vpop.permute.xlu0 %618
  %622 = vset.pattern.permute.xlu0 0
  %623 = vperm.xlu0 %622, %v89
  %v624 = vpop.permute.xlu0 %623
  %627 = vset.pattern.permute.xlu0 0
  %628 = vperm.xlu0 %627, %v90
  %v629 = vpop.permute.xlu0 %628
  %632 = vset.pattern.permute.xlu0 0
  %633 = vperm.xlu0 %632, %v91
  %v634 = vpop.permute.xlu0 %633
  %637 = vset.pattern.permute.xlu0 0
  %638 = vperm.xlu0 %637, %v92
  %v639 = vpop.permute.xlu0 %638
  %642 = vset.pattern.permute.xlu0 0
  %643 = vperm.xlu0 %642, %v93
  %v644 = vpop.permute.xlu0 %643
  %647 = vset.pattern.permute.xlu0 0
  %648 = vperm.xlu0 %647, %v94
  %v649 = vpop.permute.xlu0 %648
  %652 = vset.pattern.permute.xlu0 0
  %653 = vperm.xlu0 %652, %v95
  %v654 = vpop.permute.xlu0 %653
  %657 = vset.pattern.permute.xlu0 0
  %658 = vperm.xlu0 %657, %v96
  %v659 = vpop.permute.xlu0 %658
  %662 = vset.pattern.permute.xlu0 0
  %663 = vperm.xlu0 %662, %v97
  %v664 = vpop.permute.xlu0 %663
  %667 = vset.pattern.permute.xlu0 0
  %668 = vperm.xlu0 %667, %v98
  %v669 = vpop.permute.xlu0 %668
  %672 = vset.pattern.permute.xlu0 0
  %673 = vperm.xlu0 %672, %v99
  %v674 = vpop.permute.xlu0 %673
  %677 = vset.pattern.permute.xlu0 0
  %678 = vperm.xlu0 %677, %v100
  %v679 = vpop.permute.xlu0 %678
  %682 = vset.pattern.permute.xlu0 0
  %683 = vperm.xlu0 %682, %v101
  %v684 = vpop.permute.xlu0 %683
  %687 = vset.pattern.permute.xlu0 0
  %688 = vperm.xlu0 %687, %v102
  %v689 = vpop.permute.xlu0 %688
  %692 = vset.pattern.permute.xlu0 0
  %693 = vperm.xlu0 %692, %v103
  %v694 = vpop.permute.xlu0 %693
  %697 = vset.pattern.permute.xlu0 0
  %698 = vperm.xlu0 %697, %v104
  %v699 = vpop.permute.xlu0 %698
  %702 = vset.pattern.permute.xlu0 0
  %703 = vperm.xlu0 %702, %v105
  %v704 = vpop.permute.xlu0 %703
  %707 = vset.pattern.permute.xlu0 0
  %708 = vperm.xlu0 %707, %v106
  %v709 = vpop.permute.xlu0 %708
  %712 = vset.pattern.permute.xlu0 0
  %713 = vperm.xlu0 %712, %v107
  %v714 = vpop.permute.xlu0 %713
  %717 = vset.pattern.permute.xlu0 0
  %718 = vperm.xlu0 %717, %v108
  %v719 = vpop.permute.xlu0 %718
  %722 = vset.pattern.permute.xlu0 0
  %723 = vperm.xlu0 %722, %v109
  %v724 = vpop.permute.xlu0 %723
  %727 = vset.pattern.permute.xlu0 0
  %728 = vperm.xlu0 %727, %v110
  %v729 = vpop.permute.xlu0 %728
  %732 = vset.pattern.permute.xlu0 0
  %733 = vperm.xlu0 %732, %v111
  %v734 = vpop.permute.xlu0 %733
  %737 = vset.pattern.permute.xlu0 0
  %738 = vperm.xlu0 %737, %v112
  %v739 = vpop.permute.xlu0 %738
  %742 = vset.pattern.permute.xlu0 0
  %743 = vperm.xlu0 %742, %v113
  %v744 = vpop.permute.xlu0 %743
  %747 = vset.pattern.permute.xlu0 0
  %748 = vperm.xlu0 %747, %v114
  %v749 = vpop.permute.xlu0 %748
  %752 = vset.pattern.permute.xlu0 0
  %753 = vperm.xlu0 %752, %v115
  %v754 = vpop.permute.xlu0 %753
  %757 = vset.pattern.permute.xlu0 0
  %758 = vperm.xlu0 %757, %v116
  %v759 = vpop.permute.xlu0 %758
  %762 = vset.pattern.permute.xlu0 0
  %763 = vperm.xlu0 %762, %v117
  %v764 = vpop.permute.xlu0 %763
  %767 = vset.pattern.permute.xlu0 0
  %768 = vperm.xlu0 %767, %v118
  %v769 = vpop.permute.xlu0 %768
  %772 = vset.pattern.permute.xlu0 0
  %773 = vperm.xlu0 %772, %v119
  %v774 = vpop.permute.xlu0 %773
  %777 = vset.pattern.permute.xlu0 0
  %778 = vperm.xlu0 %777, %v120
  %v779 = vpop.permute.xlu0 %778
  %782 = vset.pattern.permute.xlu0 0
  %783 = vperm.xlu0 %782, %v121
  %v784 = vpop.permute.xlu0 %783
  %787 = vset.pattern.permute.xlu0 0
  %788 = vperm.xlu0 %787, %v122
  %v789 = vpop.permute.xlu0 %788
  %792 = vset.pattern.permute.xlu0 0
  %793 = vperm.xlu0 %792, %v123
  %v794 = vpop.permute.xlu0 %793
  %797 = vset.pattern.permute.xlu0 0
  %798 = vperm.xlu0 %797, %v124
  %v799 = vpop.permute.xlu0 %798
  %802 = vset.pattern.permute.xlu0 0
  %803 = vperm.xlu0 %802, %v125
  %v804 = vpop.permute.xlu0 %803
  %807 = vset.pattern.permute.xlu0 0
  %808 = vperm.xlu0 %807, %v126
  %v809 = vpop.permute.xlu0 %808
  %812 = vset.pattern.permute.xlu0 0
  %813 = vperm.xlu0 %812, %v127
  %v814 = vpop.permute.xlu0 %813
  %817 = vset.pattern.permute.xlu0 0
  %818 = vperm.xlu0 %817, %v128
  %v819 = vpop.permute.xlu0 %818
  %822 = vset.pattern.permute.xlu0 0
  %823 = vperm.xlu0 %822, %v129
  %v824 = vpop.permute.xlu0 %823
  %827 = vset.pattern.permute.xlu0 0
  %828 = vperm.xlu0 %827, %v130
  %v829 = vpop.permute.xlu0 %828
  %832 = vset.pattern.permute.xlu0 0
  %833 = vperm.xlu0 %832, %v131
  %v834 = vpop.permute.xlu0 %833
  %837 = vset.pattern.permute.xlu0 0
  %838 = vperm.xlu0 %837, %v132
  %v839 = vpop.permute.xlu0 %838
  %842 = vset.pattern.permute.xlu0 0
  %843 = vperm.xlu0 %842, %v133
  %v844 = vpop.permute.xlu0 %843
  %847 = vset.pattern.permute.xlu0 0
  %848 = vperm.xlu0 %847, %v134
  %v849 = vpop.permute.xlu0 %848
  %852 = vset.pattern.permute.xlu0 0
  %853 = vperm.xlu0 %852, %v135
  %v854 = vpop.permute.xlu0 %853
  %857 = vset.pattern.permute.xlu0 0
  %858 = vperm.xlu0 %857, %v136
  %v859 = vpop.permute.xlu0 %858
  %862 = vset.pattern.permute.xlu0 0
  %863 = vperm.xlu0 %862, %v137
  %v864 = vpop.permute.xlu0 %863
  %867 = vset.pattern.permute.xlu0 0
  %868 = vperm.xlu0 %867, %v138
  %v869 = vpop.permute.xlu0 %868
  %872 = vset.pattern.permute.xlu0 0
  %873 = vperm.xlu0 %872, %v139
  %v874 = vpop.permute.xlu0 %873
  %877 = vset.pattern.permute.xlu0 0
  %878 = vperm.xlu0 %877, %v140
  %v879 = vpop.permute.xlu0 %878
  %882 = vset.pattern.permute.xlu0 0
  %883 = vperm.xlu0 %882, %v141
  %v884 = vpop.permute.xlu0 %883
  %887 = vset.pattern.permute.xlu0 0
  %888 = vperm.xlu0 %887, %v142
  %v889 = vpop.permute.xlu0 %888
  %892 = vset.pattern.permute.xlu0 0
  %893 = vperm.xlu0 %892, %v143
  %v894 = vpop.permute.xlu0 %893
  %897 = vset.pattern.permute.xlu0 0
  %898 = vperm.xlu0 %897, %v144
  %v899 = vpop.permute.xlu0 %898
  %902 = vset.pattern.permute.xlu0 0
  %903 = vperm.xlu0 %902, %v145
  %v904 = vpop.permute.xlu0 %903
  %907 = vset.pattern.permute.xlu0 0
  %908 = vperm.xlu0 %907, %v146
  %v909 = vpop.permute.xlu0 %908
  %912 = vset.pattern.permute.xlu0 0
  %913 = vperm.xlu0 %912, %v147
  %v914 = vpop.permute.xlu0 %913
  %v916 = vmul.f32 %v279, %v148
  %v917 = vmul.f32 %v284, %v149
  %v918 = vmul.f32 %v289, %v150
  %v919 = vmul.f32 %v294, %v151
  %v920 = vmul.f32 %v299, %v152
  %v921 = vmul.f32 %v304, %v153
  %v922 = vmul.f32 %v309, %v154
  %v923 = vmul.f32 %v314, %v155
  %v924 = vmul.f32 %v319, %v156
  %v925 = vmul.f32 %v324, %v157
  %v926 = vmul.f32 %v329, %v158
  %v927 = vmul.f32 %v334, %v159
  %v928 = vmul.f32 %v339, %v160
  %v929 = vmul.f32 %v344, %v161
  %v930 = vmul.f32 %v349, %v162
  %v931 = vmul.f32 %v354, %v163
  %v932 = vmul.f32 %v359, %v164
  %v933 = vmul.f32 %v364, %v165
  %v934 = vmul.f32 %v369, %v166
  %v935 = vmul.f32 %v374, %v167
  %v936 = vmul.f32 %v379, %v168
  %v937 = vmul.f32 %v384, %v169
  %v938 = vmul.f32 %v389, %v170
  %v939 = vmul.f32 %v394, %v171
  %v940 = vmul.f32 %v399, %v172
  %v941 = vmul.f32 %v404, %v173
  %v942 = vmul.f32 %v409, %v174
  %v943 = vmul.f32 %v414, %v175
  %v944 = vmul.f32 %v419, %v176
  %v945 = vmul.f32 %v424, %v177
  %v946 = vmul.f32 %v429, %v178
  %v947 = vmul.f32 %v434, %v179
  %v948 = vmul.f32 %v439, %v180
  %v949 = vmul.f32 %v444, %v181
  %v950 = vmul.f32 %v449, %v182
  %v951 = vmul.f32 %v454, %v183
  %v952 = vmul.f32 %v459, %v184
  %v953 = vmul.f32 %v464, %v185
  %v954 = vmul.f32 %v469, %v186
  %v955 = vmul.f32 %v474, %v187
  %v956 = vmul.f32 %v479, %v188
  %v957 = vmul.f32 %v484, %v189
  %v958 = vmul.f32 %v489, %v190
  %v959 = vmul.f32 %v494, %v191
  %v960 = vmul.f32 %v499, %v192
  %v961 = vmul.f32 %v504, %v193
  %v962 = vmul.f32 %v509, %v194
  %v963 = vmul.f32 %v514, %v195
  %v964 = vmul.f32 %v519, %v196
  %v965 = vmul.f32 %v524, %v197
  %v966 = vmul.f32 %v529, %v198
  %v967 = vmul.f32 %v534, %v199
  %v968 = vmul.f32 %v539, %v200
  %v969 = vmul.f32 %v544, %v201
  %v970 = vmul.f32 %v549, %v202
  %v971 = vmul.f32 %v554, %v203
  %v972 = vmul.f32 %v559, %v204
  %v973 = vmul.f32 %v564, %v205
  %v974 = vmul.f32 %v569, %v206
  %v975 = vmul.f32 %v574, %v207
  %v976 = vmul.f32 %v579, %v208
  %v977 = vmul.f32 %v584, %v209
  %v978 = vmul.f32 %v589, %v210
  %v979 = vmul.f32 %v594, %v211
  %v980 = vmul.f32 %v599, %v212
  %v981 = vmul.f32 %v604, %v213
  %v982 = vmul.f32 %v609, %v214
  %v983 = vmul.f32 %v614, %v215
  %v984 = vmul.f32 %v619, %v216
  %v985 = vmul.f32 %v624, %v217
  %v986 = vmul.f32 %v629, %v218
  %v987 = vmul.f32 %v634, %v219
  %v988 = vmul.f32 %v639, %v220
  %v989 = vmul.f32 %v644, %v221
  %v990 = vmul.f32 %v649, %v222
  %v991 = vmul.f32 %v654, %v223
  %v992 = vmul.f32 %v659, %v224
  %v993 = vmul.f32 %v664, %v225
  %v994 = vmul.f32 %v669, %v226
  %v995 = vmul.f32 %v674, %v227
  %v996 = vmul.f32 %v679, %v228
  %v997 = vmul.f32 %v684, %v229
  %v998 = vmul.f32 %v689, %v230
  %v999 = vmul.f32 %v694, %v231
  %v1000 = vmul.f32 %v699, %v232
  %v1001 = vmul.f32 %v704, %v233
  %v1002 = vmul.f32 %v709, %v234
  %v1003 = vmul.f32 %v714, %v235
  %v1004 = vmul.f32 %v719, %v236
  %v1005 = vmul.f32 %v724, %v237
  %v1006 = vmul.f32 %v729, %v238
  %v1007 = vmul.f32 %v734, %v239
  %v1008 = vmul.f32 %v739, %v240
  %v1009 = vmul.f32 %v744, %v241
  %v1010 = vmul.f32 %v749, %v242
  %v1011 = vmul.f32 %v754, %v243
  %v1012 = vmul.f32 %v759, %v244
  %v1013 = vmul.f32 %v764, %v245
  %v1014 = vmul.f32 %v769, %v246
  %v1015 = vmul.f32 %v774, %v247
  %v1016 = vmul.f32 %v779, %v248
  %v1017 = vmul.f32 %v784, %v249
  %v1018 = vmul.f32 %v789, %v250
  %v1019 = vmul.f32 %v794, %v251
  %v1020 = vmul.f32 %v799, %v252
  %v1021 = vmul.f32 %v804, %v253
  %v1022 = vmul.f32 %v809, %v254
  %v1023 = vmul.f32 %v814, %v255
  %v1024 = vmul.f32 %v819, %v256
  %v1025 = vmul.f32 %v824, %v257
  %v1026 = vmul.f32 %v829, %v258
  %v1027 = vmul.f32 %v834, %v259
  %v1028 = vmul.f32 %v839, %v260
  %v1029 = vmul.f32 %v844, %v261
  %v1030 = vmul.f32 %v849, %v262
  %v1031 = vmul.f32 %v854, %v263
  %v1032 = vmul.f32 %v859, %v264
  %v1033 = vmul.f32 %v864, %v265
  %v1034 = vmul.f32 %v869, %v266
  %v1035 = vmul.f32 %v874, %v267
  %v1036 = vmul.f32 %v879, %v268
  %v1037 = vmul.f32 %v884, %v269
  %v1038 = vmul.f32 %v889, %v270
  %v1039 = vmul.f32 %v894, %v271
  %v1040 = vmul.f32 %v899, %v272
  %v1041 = vmul.f32 %v904, %v273
  %v1042 = vmul.f32 %v909, %v274
  %v1043 = vmul.f32 %v914, %v275
  %vm1044 = vcmask 130048
  %v1045 = vsel %vm1044, %v916, 0.0
  %v1046 = vsel %vm1044, %v917, 0.0
  %v1047 = vadd.f32 %v1045, %v1046
  %v1048 = vsel %vm1044, %v918, 0.0
  %v1049 = vadd.f32 %v1047, %v1048
  %v1050 = vsel %vm1044, %v919, 0.0
  %v1051 = vadd.f32 %v1049, %v1050
  %v1052 = vrot.slane %v1051, 4
  %v1053 = vadd.f32 %v1051, %v1052
  %v1054 = vrot.slane %v1053, 2
  %v1055 = vadd.f32 %v1053, %v1054
  %v1056 = vrot.slane %v1055, 1
  %v1057 = vadd.f32 %v1055, %v1056
  %v1058 = vsel %vm1044, %v920, 0.0
  %v1059 = vsel %vm1044, %v921, 0.0
  %v1060 = vadd.f32 %v1058, %v1059
  %v1061 = vsel %vm1044, %v922, 0.0
  %v1062 = vadd.f32 %v1060, %v1061
  %v1063 = vsel %vm1044, %v923, 0.0
  %v1064 = vadd.f32 %v1062, %v1063
  %v1065 = vrot.slane %v1064, 4
  %v1066 = vadd.f32 %v1064, %v1065
  %v1067 = vrot.slane %v1066, 2
  %v1068 = vadd.f32 %v1066, %v1067
  %v1069 = vrot.slane %v1068, 1
  %v1070 = vadd.f32 %v1068, %v1069
  %v1071 = vsel %vm1044, %v924, 0.0
  %v1072 = vsel %vm1044, %v925, 0.0
  %v1073 = vadd.f32 %v1071, %v1072
  %v1074 = vsel %vm1044, %v926, 0.0
  %v1075 = vadd.f32 %v1073, %v1074
  %v1076 = vsel %vm1044, %v927, 0.0
  %v1077 = vadd.f32 %v1075, %v1076
  %v1078 = vrot.slane %v1077, 4
  %v1079 = vadd.f32 %v1077, %v1078
  %v1080 = vrot.slane %v1079, 2
  %v1081 = vadd.f32 %v1079, %v1080
  %v1082 = vrot.slane %v1081, 1
  %v1083 = vadd.f32 %v1081, %v1082
  %v1084 = vsel %vm1044, %v928, 0.0
  %v1085 = vsel %vm1044, %v929, 0.0
  %v1086 = vadd.f32 %v1084, %v1085
  %v1087 = vsel %vm1044, %v930, 0.0
  %v1088 = vadd.f32 %v1086, %v1087
  %v1089 = vsel %vm1044, %v931, 0.0
  %v1090 = vadd.f32 %v1088, %v1089
  %v1091 = vrot.slane %v1090, 4
  %v1092 = vadd.f32 %v1090, %v1091
  %v1093 = vrot.slane %v1092, 2
  %v1094 = vadd.f32 %v1092, %v1093
  %v1095 = vrot.slane %v1094, 1
  %v1096 = vadd.f32 %v1094, %v1095
  %v1097 = vsel %vm1044, %v932, 0.0
  %v1098 = vsel %vm1044, %v933, 0.0
  %v1099 = vadd.f32 %v1097, %v1098
  %v1100 = vsel %vm1044, %v934, 0.0
  %v1101 = vadd.f32 %v1099, %v1100
  %v1102 = vsel %vm1044, %v935, 0.0
  %v1103 = vadd.f32 %v1101, %v1102
  %v1104 = vrot.slane %v1103, 4
  %v1105 = vadd.f32 %v1103, %v1104
  %v1106 = vrot.slane %v1105, 2
  %v1107 = vadd.f32 %v1105, %v1106
  %v1108 = vrot.slane %v1107, 1
  %v1109 = vadd.f32 %v1107, %v1108
  %v1110 = vsel %vm1044, %v936, 0.0
  %v1111 = vsel %vm1044, %v937, 0.0
  %v1112 = vadd.f32 %v1110, %v1111
  %v1113 = vsel %vm1044, %v938, 0.0
  %v1114 = vadd.f32 %v1112, %v1113
  %v1115 = vsel %vm1044, %v939, 0.0
  %v1116 = vadd.f32 %v1114, %v1115
  %v1117 = vrot.slane %v1116, 4
  %v1118 = vadd.f32 %v1116, %v1117
  %v1119 = vrot.slane %v1118, 2
  %v1120 = vadd.f32 %v1118, %v1119
  %v1121 = vrot.slane %v1120, 1
  %v1122 = vadd.f32 %v1120, %v1121
  %v1123 = vsel %vm1044, %v940, 0.0
  %v1124 = vsel %vm1044, %v941, 0.0
  %v1125 = vadd.f32 %v1123, %v1124
  %v1126 = vsel %vm1044, %v942, 0.0
  %v1127 = vadd.f32 %v1125, %v1126
  %v1128 = vsel %vm1044, %v943, 0.0
  %v1129 = vadd.f32 %v1127, %v1128
  %v1130 = vrot.slane %v1129, 4
  %v1131 = vadd.f32 %v1129, %v1130
  %v1132 = vrot.slane %v1131, 2
  %v1133 = vadd.f32 %v1131, %v1132
  %v1134 = vrot.slane %v1133, 1
  %v1135 = vadd.f32 %v1133, %v1134
  %v1136 = vsel %vm1044, %v944, 0.0
  %v1137 = vsel %vm1044, %v945, 0.0
  %v1138 = vadd.f32 %v1136, %v1137
  %v1139 = vsel %vm1044, %v946, 0.0
  %v1140 = vadd.f32 %v1138, %v1139
  %v1141 = vsel %vm1044, %v947, 0.0
  %v1142 = vadd.f32 %v1140, %v1141
  %v1143 = vrot.slane %v1142, 4
  %v1144 = vadd.f32 %v1142, %v1143
  %v1145 = vrot.slane %v1144, 2
  %v1146 = vadd.f32 %v1144, %v1145
  %v1147 = vrot.slane %v1146, 1
  %v1148 = vadd.f32 %v1146, %v1147
  %v1149 = vsel %vm1044, %v948, 0.0
  %v1150 = vsel %vm1044, %v949, 0.0
  %v1151 = vadd.f32 %v1149, %v1150
  %v1152 = vsel %vm1044, %v950, 0.0
  %v1153 = vadd.f32 %v1151, %v1152
  %v1154 = vsel %vm1044, %v951, 0.0
  %v1155 = vadd.f32 %v1153, %v1154
  %v1156 = vrot.slane %v1155, 4
  %v1157 = vadd.f32 %v1155, %v1156
  %v1158 = vrot.slane %v1157, 2
  %v1159 = vadd.f32 %v1157, %v1158
  %v1160 = vrot.slane %v1159, 1
  %v1161 = vadd.f32 %v1159, %v1160
  %v1162 = vsel %vm1044, %v952, 0.0
  %v1163 = vsel %vm1044, %v953, 0.0
  %v1164 = vadd.f32 %v1162, %v1163
  %v1165 = vsel %vm1044, %v954, 0.0
  %v1166 = vadd.f32 %v1164, %v1165
  %v1167 = vsel %vm1044, %v955, 0.0
  %v1168 = vadd.f32 %v1166, %v1167
  %v1169 = vrot.slane %v1168, 4
  %v1170 = vadd.f32 %v1168, %v1169
  %v1171 = vrot.slane %v1170, 2
  %v1172 = vadd.f32 %v1170, %v1171
  %v1173 = vrot.slane %v1172, 1
  %v1174 = vadd.f32 %v1172, %v1173
  %v1175 = vsel %vm1044, %v956, 0.0
  %v1176 = vsel %vm1044, %v957, 0.0
  %v1177 = vadd.f32 %v1175, %v1176
  %v1178 = vsel %vm1044, %v958, 0.0
  %v1179 = vadd.f32 %v1177, %v1178
  %v1180 = vsel %vm1044, %v959, 0.0
  %v1181 = vadd.f32 %v1179, %v1180
  %v1182 = vrot.slane %v1181, 4
  %v1183 = vadd.f32 %v1181, %v1182
  %v1184 = vrot.slane %v1183, 2
  %v1185 = vadd.f32 %v1183, %v1184
  %v1186 = vrot.slane %v1185, 1
  %v1187 = vadd.f32 %v1185, %v1186
  %v1188 = vsel %vm1044, %v960, 0.0
  %v1189 = vsel %vm1044, %v961, 0.0
  %v1190 = vadd.f32 %v1188, %v1189
  %v1191 = vsel %vm1044, %v962, 0.0
  %v1192 = vadd.f32 %v1190, %v1191
  %v1193 = vsel %vm1044, %v963, 0.0
  %v1194 = vadd.f32 %v1192, %v1193
  %v1195 = vrot.slane %v1194, 4
  %v1196 = vadd.f32 %v1194, %v1195
  %v1197 = vrot.slane %v1196, 2
  %v1198 = vadd.f32 %v1196, %v1197
  %v1199 = vrot.slane %v1198, 1
  %v1200 = vadd.f32 %v1198, %v1199
  %v1201 = vsel %vm1044, %v964, 0.0
  %v1202 = vsel %vm1044, %v965, 0.0
  %v1203 = vadd.f32 %v1201, %v1202
  %v1204 = vsel %vm1044, %v966, 0.0
  %v1205 = vadd.f32 %v1203, %v1204
  %v1206 = vsel %vm1044, %v967, 0.0
  %v1207 = vadd.f32 %v1205, %v1206
  %v1208 = vrot.slane %v1207, 4
  %v1209 = vadd.f32 %v1207, %v1208
  %v1210 = vrot.slane %v1209, 2
  %v1211 = vadd.f32 %v1209, %v1210
  %v1212 = vrot.slane %v1211, 1
  %v1213 = vadd.f32 %v1211, %v1212
  %v1214 = vsel %vm1044, %v968, 0.0
  %v1215 = vsel %vm1044, %v969, 0.0
  %v1216 = vadd.f32 %v1214, %v1215
  %v1217 = vsel %vm1044, %v970, 0.0
  %v1218 = vadd.f32 %v1216, %v1217
  %v1219 = vsel %vm1044, %v971, 0.0
  %v1220 = vadd.f32 %v1218, %v1219
  %v1221 = vrot.slane %v1220, 4
  %v1222 = vadd.f32 %v1220, %v1221
  %v1223 = vrot.slane %v1222, 2
  %v1224 = vadd.f32 %v1222, %v1223
  %v1225 = vrot.slane %v1224, 1
  %v1226 = vadd.f32 %v1224, %v1225
  %v1227 = vsel %vm1044, %v972, 0.0
  %v1228 = vsel %vm1044, %v973, 0.0
  %v1229 = vadd.f32 %v1227, %v1228
  %v1230 = vsel %vm1044, %v974, 0.0
  %v1231 = vadd.f32 %v1229, %v1230
  %v1232 = vsel %vm1044, %v975, 0.0
  %v1233 = vadd.f32 %v1231, %v1232
  %v1234 = vrot.slane %v1233, 4
  %v1235 = vadd.f32 %v1233, %v1234
  %v1236 = vrot.slane %v1235, 2
  %v1237 = vadd.f32 %v1235, %v1236
  %v1238 = vrot.slane %v1237, 1
  %v1239 = vadd.f32 %v1237, %v1238
  %v1240 = vsel %vm1044, %v976, 0.0
  %v1241 = vsel %vm1044, %v977, 0.0
  %v1242 = vadd.f32 %v1240, %v1241
  %v1243 = vsel %vm1044, %v978, 0.0
  %v1244 = vadd.f32 %v1242, %v1243
  %v1245 = vsel %vm1044, %v979, 0.0
  %v1246 = vadd.f32 %v1244, %v1245
  %v1247 = vrot.slane %v1246, 4
  %v1248 = vadd.f32 %v1246, %v1247
  %v1249 = vrot.slane %v1248, 2
  %v1250 = vadd.f32 %v1248, %v1249
  %v1251 = vrot.slane %v1250, 1
  %v1252 = vadd.f32 %v1250, %v1251
  %v1253 = vsel %vm1044, %v980, 0.0
  %v1254 = vsel %vm1044, %v981, 0.0
  %v1255 = vadd.f32 %v1253, %v1254
  %v1256 = vsel %vm1044, %v982, 0.0
  %v1257 = vadd.f32 %v1255, %v1256
  %v1258 = vsel %vm1044, %v983, 0.0
  %v1259 = vadd.f32 %v1257, %v1258
  %v1260 = vrot.slane %v1259, 4
  %v1261 = vadd.f32 %v1259, %v1260
  %v1262 = vrot.slane %v1261, 2
  %v1263 = vadd.f32 %v1261, %v1262
  %v1264 = vrot.slane %v1263, 1
  %v1265 = vadd.f32 %v1263, %v1264
  %v1266 = vsel %vm1044, %v984, 0.0
  %v1267 = vsel %vm1044, %v985, 0.0
  %v1268 = vadd.f32 %v1266, %v1267
  %v1269 = vsel %vm1044, %v986, 0.0
  %v1270 = vadd.f32 %v1268, %v1269
  %v1271 = vsel %vm1044, %v987, 0.0
  %v1272 = vadd.f32 %v1270, %v1271
  %v1273 = vrot.slane %v1272, 4
  %v1274 = vadd.f32 %v1272, %v1273
  %v1275 = vrot.slane %v1274, 2
  %v1276 = vadd.f32 %v1274, %v1275
  %v1277 = vrot.slane %v1276, 1
  %v1278 = vadd.f32 %v1276, %v1277
  %v1279 = vsel %vm1044, %v988, 0.0
  %v1280 = vsel %vm1044, %v989, 0.0
  %v1281 = vadd.f32 %v1279, %v1280
  %v1282 = vsel %vm1044, %v990, 0.0
  %v1283 = vadd.f32 %v1281, %v1282
  %v1284 = vsel %vm1044, %v991, 0.0
  %v1285 = vadd.f32 %v1283, %v1284
  %v1286 = vrot.slane %v1285, 4
  %v1287 = vadd.f32 %v1285, %v1286
  %v1288 = vrot.slane %v1287, 2
  %v1289 = vadd.f32 %v1287, %v1288
  %v1290 = vrot.slane %v1289, 1
  %v1291 = vadd.f32 %v1289, %v1290
  %v1292 = vsel %vm1044, %v992, 0.0
  %v1293 = vsel %vm1044, %v993, 0.0
  %v1294 = vadd.f32 %v1292, %v1293
  %v1295 = vsel %vm1044, %v994, 0.0
  %v1296 = vadd.f32 %v1294, %v1295
  %v1297 = vsel %vm1044, %v995, 0.0
  %v1298 = vadd.f32 %v1296, %v1297
  %v1299 = vrot.slane %v1298, 4
  %v1300 = vadd.f32 %v1298, %v1299
  %v1301 = vrot.slane %v1300, 2
  %v1302 = vadd.f32 %v1300, %v1301
  %v1303 = vrot.slane %v1302, 1
  %v1304 = vadd.f32 %v1302, %v1303
  %v1305 = vsel %vm1044, %v996, 0.0
  %v1306 = vsel %vm1044, %v997, 0.0
  %v1307 = vadd.f32 %v1305, %v1306
  %v1308 = vsel %vm1044, %v998, 0.0
  %v1309 = vadd.f32 %v1307, %v1308
  %v1310 = vsel %vm1044, %v999, 0.0
  %v1311 = vadd.f32 %v1309, %v1310
  %v1312 = vrot.slane %v1311, 4
  %v1313 = vadd.f32 %v1311, %v1312
  %v1314 = vrot.slane %v1313, 2
  %v1315 = vadd.f32 %v1313, %v1314
  %v1316 = vrot.slane %v1315, 1
  %v1317 = vadd.f32 %v1315, %v1316
  %v1318 = vsel %vm1044, %v1000, 0.0
  %v1319 = vsel %vm1044, %v1001, 0.0
  %v1320 = vadd.f32 %v1318, %v1319
  %v1321 = vsel %vm1044, %v1002, 0.0
  %v1322 = vadd.f32 %v1320, %v1321
  %v1323 = vsel %vm1044, %v1003, 0.0
  %v1324 = vadd.f32 %v1322, %v1323
  %v1325 = vrot.slane %v1324, 4
  %v1326 = vadd.f32 %v1324, %v1325
  %v1327 = vrot.slane %v1326, 2
  %v1328 = vadd.f32 %v1326, %v1327
  %v1329 = vrot.slane %v1328, 1
  %v1330 = vadd.f32 %v1328, %v1329
  %v1331 = vsel %vm1044, %v1004, 0.0
  %v1332 = vsel %vm1044, %v1005, 0.0
  %v1333 = vadd.f32 %v1331, %v1332
  %v1334 = vsel %vm1044, %v1006, 0.0
  %v1335 = vadd.f32 %v1333, %v1334
  %v1336 = vsel %vm1044, %v1007, 0.0
  %v1337 = vadd.f32 %v1335, %v1336
  %v1338 = vrot.slane %v1337, 4
  %v1339 = vadd.f32 %v1337, %v1338
  %v1340 = vrot.slane %v1339, 2
  %v1341 = vadd.f32 %v1339, %v1340
  %v1342 = vrot.slane %v1341, 1
  %v1343 = vadd.f32 %v1341, %v1342
  %v1344 = vsel %vm1044, %v1008, 0.0
  %v1345 = vsel %vm1044, %v1009, 0.0
  %v1346 = vadd.f32 %v1344, %v1345
  %v1347 = vsel %vm1044, %v1010, 0.0
  %v1348 = vadd.f32 %v1346, %v1347
  %v1349 = vsel %vm1044, %v1011, 0.0
  %v1350 = vadd.f32 %v1348, %v1349
  %v1351 = vrot.slane %v1350, 4
  %v1352 = vadd.f32 %v1350, %v1351
  %v1353 = vrot.slane %v1352, 2
  %v1354 = vadd.f32 %v1352, %v1353
  %v1355 = vrot.slane %v1354, 1
  %v1356 = vadd.f32 %v1354, %v1355
  %v1357 = vsel %vm1044, %v1012, 0.0
  %v1358 = vsel %vm1044, %v1013, 0.0
  %v1359 = vadd.f32 %v1357, %v1358
  %v1360 = vsel %vm1044, %v1014, 0.0
  %v1361 = vadd.f32 %v1359, %v1360
  %v1362 = vsel %vm1044, %v1015, 0.0
  %v1363 = vadd.f32 %v1361, %v1362
  %v1364 = vrot.slane %v1363, 4
  %v1365 = vadd.f32 %v1363, %v1364
  %v1366 = vrot.slane %v1365, 2
  %v1367 = vadd.f32 %v1365, %v1366
  %v1368 = vrot.slane %v1367, 1
  %v1369 = vadd.f32 %v1367, %v1368
  %v1370 = vsel %vm1044, %v1016, 0.0
  %v1371 = vsel %vm1044, %v1017, 0.0
  %v1372 = vadd.f32 %v1370, %v1371
  %v1373 = vsel %vm1044, %v1018, 0.0
  %v1374 = vadd.f32 %v1372, %v1373
  %v1375 = vsel %vm1044, %v1019, 0.0
  %v1376 = vadd.f32 %v1374, %v1375
  %v1377 = vrot.slane %v1376, 4
  %v1378 = vadd.f32 %v1376, %v1377
  %v1379 = vrot.slane %v1378, 2
  %v1380 = vadd.f32 %v1378, %v1379
  %v1381 = vrot.slane %v1380, 1
  %v1382 = vadd.f32 %v1380, %v1381
  %v1383 = vsel %vm1044, %v1020, 0.0
  %v1384 = vsel %vm1044, %v1021, 0.0
  %v1385 = vadd.f32 %v1383, %v1384
  %v1386 = vsel %vm1044, %v1022, 0.0
  %v1387 = vadd.f32 %v1385, %v1386
  %v1388 = vsel %vm1044, %v1023, 0.0
  %v1389 = vadd.f32 %v1387, %v1388
  %v1390 = vrot.slane %v1389, 4
  %v1391 = vadd.f32 %v1389, %v1390
  %v1392 = vrot.slane %v1391, 2
  %v1393 = vadd.f32 %v1391, %v1392
  %v1394 = vrot.slane %v1393, 1
  %v1395 = vadd.f32 %v1393, %v1394
  %v1396 = vsel %vm1044, %v1024, 0.0
  %v1397 = vsel %vm1044, %v1025, 0.0
  %v1398 = vadd.f32 %v1396, %v1397
  %v1399 = vsel %vm1044, %v1026, 0.0
  %v1400 = vadd.f32 %v1398, %v1399
  %v1401 = vsel %vm1044, %v1027, 0.0
  %v1402 = vadd.f32 %v1400, %v1401
  %v1403 = vrot.slane %v1402, 4
  %v1404 = vadd.f32 %v1402, %v1403
  %v1405 = vrot.slane %v1404, 2
  %v1406 = vadd.f32 %v1404, %v1405
  %v1407 = vrot.slane %v1406, 1
  %v1408 = vadd.f32 %v1406, %v1407
  %v1409 = vsel %vm1044, %v1028, 0.0
  %v1410 = vsel %vm1044, %v1029, 0.0
  %v1411 = vadd.f32 %v1409, %v1410
  %v1412 = vsel %vm1044, %v1030, 0.0
  %v1413 = vadd.f32 %v1411, %v1412
  %v1414 = vsel %vm1044, %v1031, 0.0
  %v1415 = vadd.f32 %v1413, %v1414
  %v1416 = vrot.slane %v1415, 4
  %v1417 = vadd.f32 %v1415, %v1416
  %v1418 = vrot.slane %v1417, 2
  %v1419 = vadd.f32 %v1417, %v1418
  %v1420 = vrot.slane %v1419, 1
  %v1421 = vadd.f32 %v1419, %v1420
  %v1422 = vsel %vm1044, %v1032, 0.0
  %v1423 = vsel %vm1044, %v1033, 0.0
  %v1424 = vadd.f32 %v1422, %v1423
  %v1425 = vsel %vm1044, %v1034, 0.0
  %v1426 = vadd.f32 %v1424, %v1425
  %v1427 = vsel %vm1044, %v1035, 0.0
  %v1428 = vadd.f32 %v1426, %v1427
  %v1429 = vrot.slane %v1428, 4
  %v1430 = vadd.f32 %v1428, %v1429
  %v1431 = vrot.slane %v1430, 2
  %v1432 = vadd.f32 %v1430, %v1431
  %v1433 = vrot.slane %v1432, 1
  %v1434 = vadd.f32 %v1432, %v1433
  %v1435 = vsel %vm1044, %v1036, 0.0
  %v1436 = vsel %vm1044, %v1037, 0.0
  %v1437 = vadd.f32 %v1435, %v1436
  %v1438 = vsel %vm1044, %v1038, 0.0
  %v1439 = vadd.f32 %v1437, %v1438
  %v1440 = vsel %vm1044, %v1039, 0.0
  %v1441 = vadd.f32 %v1439, %v1440
  %v1442 = vrot.slane %v1441, 4
  %v1443 = vadd.f32 %v1441, %v1442
  %v1444 = vrot.slane %v1443, 2
  %v1445 = vadd.f32 %v1443, %v1444
  %v1446 = vrot.slane %v1445, 1
  %v1447 = vadd.f32 %v1445, %v1446
  %v1448 = vsel %vm1044, %v1040, 0.0
  %v1449 = vsel %vm1044, %v1041, 0.0
  %v1450 = vadd.f32 %v1448, %v1449
  %v1451 = vsel %vm1044, %v1042, 0.0
  %v1452 = vadd.f32 %v1450, %v1451
  %v1453 = vsel %vm1044, %v1043, 0.0
  %v1454 = vadd.f32 %v1452, %v1453
  %v1455 = vrot.slane %v1454, 4
  %v1456 = vadd.f32 %v1454, %v1455
  %v1457 = vrot.slane %v1456, 2
  %v1458 = vadd.f32 %v1456, %v1457
  %v1459 = vrot.slane %v1458, 1
  %v1460 = vadd.f32 %v1458, %v1459
  %v1461 = vld [vmem:[%s2] sm:$0xff]
  %v1462 = vld [vmem:[%s2 + $0x8] sm:$0xff]
  %v1463 = vld [vmem:[%s2 + $0x10] sm:$0xff]
  %v1464 = vld [vmem:[%s2 + $0x18] sm:$0xff]
  %v1465 = vld [vmem:[%s2 + $0x20] sm:$0xff]
  %v1466 = vld [vmem:[%s2 + $0x28] sm:$0xff]
  %v1467 = vld [vmem:[%s2 + $0x30] sm:$0xff]
  %v1468 = vld [vmem:[%s2 + $0x38] sm:$0xff]
  %v1469 = vld [vmem:[%s3] sm:$0xff]
  %v1470 = vld [vmem:[%s3 + $0x8] sm:$0xff]
  %v1471 = vld [vmem:[%s3 + $0x10] sm:$0xff]
  %v1472 = vld [vmem:[%s3 + $0x18] sm:$0xff]
  %v1473 = vld [vmem:[%s3 + $0x20] sm:$0xff]
  %v1474 = vld [vmem:[%s3 + $0x28] sm:$0xff]
  %v1475 = vld [vmem:[%s3 + $0x30] sm:$0xff]
  %v1476 = vld [vmem:[%s3 + $0x38] sm:$0xff]
  %v1477 = vld [vmem:[%s3 + $0x40] sm:$0xff]
  %v1478 = vld [vmem:[%s3 + $0x48] sm:$0xff]
  %v1479 = vld [vmem:[%s3 + $0x50] sm:$0xff]
  %v1480 = vld [vmem:[%s3 + $0x58] sm:$0xff]
  %v1481 = vld [vmem:[%s3 + $0x60] sm:$0xff]
  %v1482 = vld [vmem:[%s3 + $0x68] sm:$0xff]
  %v1483 = vld [vmem:[%s3 + $0x70] sm:$0xff]
  %v1484 = vld [vmem:[%s3 + $0x78] sm:$0xff]
  %v1485 = vld [vmem:[%s3 + $0x80] sm:$0xff]
  %v1486 = vld [vmem:[%s3 + $0x88] sm:$0xff]
  %v1487 = vld [vmem:[%s3 + $0x90] sm:$0xff]
  %v1488 = vld [vmem:[%s3 + $0x98] sm:$0xff]
  %v1489 = vld [vmem:[%s4] sm:$0x1]
  %v1491 = vlaneseq
  %v1492 = vshrl.u32 %v1491, 7
  %v1493 = vsub.s32 0, %v1492
  %v1494 = vrot.slane %v1489, %v1493
  %vm1496 = vcmask 261120
  %v1498 = vsel %vm1496, %v1462, 0
  %v1501 = vsel %vm1496, %v1464, 0
  %v1504 = vsel %vm1496, %v1466, 0
  %v1507 = vsel %vm1496, %v1468, 0
  %1509 = vmatprep.subr.mxu0 0.0
  %1510 = vmatpush1.msra.mxu0 %v1484
  %1511 = vmatprep.subr.mxu0 0.0
  %1512 = vmatpush1.msra.mxu0 %v1483
  %1513 = vmatprep.subr.mxu0 0.0
  %1514 = vmatpush1.msra.mxu0 %v1482
  %1515 = vmatprep.subr.mxu0 0.0
  %1516 = vmatpush1.msra.mxu0 %v1481
  %1517 = vmatprep.subr.mxu0 0.0
  %1518 = vmatpush1.msra.mxu0 %v1480
  %1519 = vmatprep.subr.mxu0 0.0
  %1520 = vmatpush1.msra.mxu0 %v1479
  %1521 = vmatprep.subr.mxu0 0.0
  %1522 = vmatpush1.msra.mxu0 %v1478
  %1523 = vmatprep.subr.mxu0 0.0
  %1524 = vmatpush1.msra.mxu0 %v1477
  %1525 = vmatprep.subr.mxu0 0.0
  %1526 = vmatpush1.msra.mxu0 %v1476
  %1527 = vmatprep.subr.mxu0 0.0
  %1528 = vmatpush1.msra.mxu0 %v1475
  %1529 = vmatprep.subr.mxu0 0.0
  %1530 = vmatpush1.msra.mxu0 %v1474
  %1531 = vmatprep.subr.mxu0 0.0
  %1532 = vmatpush1.msra.mxu0 %v1473
  %1533 = vmatprep.subr.mxu0 0.0
  %1534 = vmatpush1.msra.mxu0 %v1472
  %1535 = vmatprep.subr.mxu0 0.0
  %1536 = vmatpush1.msra.mxu0 %v1471
  %1537 = vmatprep.subr.mxu0 0.0
  %1538 = vmatpush1.msra.mxu0 %v1470
  %1539 = vmatprep.subr.mxu0 0.0
  %1540 = vmatpush1.msra.mxu0 %v1469
  %1541 = vmatprep.subr.mxu0 0.0
  %1542 = vmatpush2.msra.mxu0 0.0
  %1543 = vmatprep.subr.mxu0 0.0
  %1544 = vmatpush2.msra.mxu0 0.0
  %1545 = vmatprep.subr.mxu0 0.0
  %1546 = vmatpush2.msra.mxu0 0.0
  %1547 = vmatprep.subr.mxu0 0.0
  %1548 = vmatpush2.msra.mxu0 0.0
  %1549 = vmatprep.subr.mxu0 0.0
  %1550 = vmatpush2.msra.mxu0 0.0
  %1551 = vmatprep.subr.mxu0 0.0
  %1552 = vmatpush2.msra.mxu0 0.0
  %1553 = vmatprep.subr.mxu0 0.0
  %1554 = vmatpush2.msra.mxu0 0.0
  %1555 = vmatprep.subr.mxu0 0.0
  %1556 = vmatpush2.msra.mxu0 0.0
  %1557 = vmatprep.subr.mxu0 0.0
  %1558 = vmatpush2.msra.mxu0 0.0
  %1559 = vmatprep.subr.mxu0 0.0
  %1560 = vmatpush2.msra.mxu0 0.0
  %1561 = vmatprep.subr.mxu0 0.0
  %1562 = vmatpush2.msra.mxu0 0.0
  %1563 = vmatprep.subr.mxu0 0.0
  %1564 = vmatpush2.msra.mxu0 0.0
  %1565 = vmatprep.subr.mxu0 0.0
  %1566 = vmatpush2.msra.mxu0 %v1488
  %1567 = vmatprep.subr.mxu0 0.0
  %1568 = vmatpush2.msra.mxu0 %v1487
  %1569 = vmatprep.subr.mxu0 0.0
  %1570 = vmatpush2.msra.mxu0 %v1486
  %1571 = vmatprep.subr.mxu0 0.0
  %1572 = vmatpush2.msra.mxu0 %v1485
  %1573 = vmatprep.mubr.f32.mxu0 %v1498
  %1574 = vmatmul.mubr.f32.gmra.mxu0 %v1461
  %v1575 = vpop.f32.mrf.mxu0
  %v1576 = vadd.f32 %v1494, %v1575
  %v1577 = vpop.f32.mrf.mxu0
  %1578 = vmatprep.mubr.f32.mxu0 %v1501
  %1579 = vmatmul.mubr.f32.gmra.mxu0 %v1463
  %v1580 = vpop.f32.mrf.mxu0
  %v1581 = vadd.f32 %v1494, %v1580
  %v1582 = vpop.f32.mrf.mxu0
  %1583 = vmatprep.mubr.f32.mxu0 %v1504
  %1584 = vmatmul.mubr.f32.gmra.mxu0 %v1465
  %v1585 = vpop.f32.mrf.mxu0
  %v1586 = vadd.f32 %v1494, %v1585
  %v1587 = vpop.f32.mrf.mxu0
  %1588 = vmatprep.mubr.f32.mxu0 %v1507
  %1589 = vmatmul.mubr.f32.gmra.mxu0 %v1467
  %v1590 = vpop.f32.mrf.mxu0
  %v1591 = vadd.f32 %v1494, %v1590
  %v1592 = vpop.f32.mrf.mxu0
  %1593 = vdwg.mxu0
  %v1598 = vrot.slane %v1576, 1
  %v1599 = vrot.slane %v1576, 2
  %v1600 = vrot.slane %v1576, 3
  %v1601 = vrot.slane %v1576, 4
  %v1602 = vrot.slane %v1576, 5
  %v1603 = vrot.slane %v1576, 6
  %v1604 = vrot.slane %v1576, 7
  %v1605 = vrot.slane %v1581, 1
  %v1606 = vrot.slane %v1581, 2
  %v1607 = vrot.slane %v1581, 3
  %v1608 = vrot.slane %v1581, 4
  %v1609 = vrot.slane %v1581, 5
  %v1610 = vrot.slane %v1581, 6
  %v1611 = vrot.slane %v1581, 7
  %v1612 = vrot.slane %v1586, 1
  %v1613 = vrot.slane %v1586, 2
  %v1614 = vrot.slane %v1586, 3
  %v1615 = vrot.slane %v1586, 4
  %v1616 = vrot.slane %v1586, 5
  %v1617 = vrot.slane %v1586, 6
  %v1618 = vrot.slane %v1586, 7
  %v1619 = vrot.slane %v1591, 1
  %v1620 = vrot.slane %v1591, 2
  %v1621 = vrot.slane %v1591, 3
  %v1622 = vrot.slane %v1591, 4
  %v1623 = vrot.slane %v1591, 5
  %v1624 = vrot.slane %v1591, 6
  %v1625 = vrot.slane %v1591, 7
  %v1658 = vadd.f32 %v1057, %v1576
  %v1659 = vadd.f32 %v1070, %v1598
  %v1660 = vadd.f32 %v1083, %v1599
  %v1661 = vadd.f32 %v1096, %v1600
  %v1662 = vadd.f32 %v1109, %v1601
  %v1663 = vadd.f32 %v1122, %v1602
  %v1664 = vadd.f32 %v1135, %v1603
  %v1665 = vadd.f32 %v1148, %v1604
  %v1666 = vadd.f32 %v1161, %v1581
  %v1667 = vadd.f32 %v1174, %v1605
  %v1668 = vadd.f32 %v1187, %v1606
  %v1669 = vadd.f32 %v1200, %v1607
  %v1670 = vadd.f32 %v1213, %v1608
  %v1671 = vadd.f32 %v1226, %v1609
  %v1672 = vadd.f32 %v1239, %v1610
  %v1673 = vadd.f32 %v1252, %v1611
  %v1674 = vadd.f32 %v1265, %v1586
  %v1675 = vadd.f32 %v1278, %v1612
  %v1676 = vadd.f32 %v1291, %v1613
  %v1677 = vadd.f32 %v1304, %v1614
  %v1678 = vadd.f32 %v1317, %v1615
  %v1679 = vadd.f32 %v1330, %v1616
  %v1680 = vadd.f32 %v1343, %v1617
  %v1681 = vadd.f32 %v1356, %v1618
  %v1682 = vadd.f32 %v1369, %v1591
  %v1683 = vadd.f32 %v1382, %v1619
  %v1684 = vadd.f32 %v1395, %v1620
  %v1685 = vadd.f32 %v1408, %v1621
  %v1686 = vadd.f32 %v1421, %v1622
  %v1687 = vadd.f32 %v1434, %v1623
  %v1688 = vadd.f32 %v1447, %v1624
  %v1689 = vadd.f32 %v1460, %v1625
  %v1722 = vrot.slane %v1659, 7
  %vm1723 = vcmask 1041409
  %v1724 = vsel %vm1723, %v1722, %v1658
  %v1725 = vrot.slane %v1660, 6
  %vm1726 = vcmask 1042434
  %v1727 = vsel %vm1726, %v1725, %v1724
  %v1728 = vrot.slane %v1661, 5
  %vm1729 = vcmask 1043459
  %v1730 = vsel %vm1729, %v1728, %v1727
  %v1731 = vrot.slane %v1662, 4
  %vm1732 = vcmask 1044484
  %v1733 = vsel %vm1732, %v1731, %v1730
  %v1734 = vrot.slane %v1663, 3
  %vm1735 = vcmask 1045509
  %v1736 = vsel %vm1735, %v1734, %v1733
  %v1737 = vrot.slane %v1664, 2
  %vm1738 = vcmask 1046534
  %v1739 = vsel %vm1738, %v1737, %v1736
  %v1740 = vrot.slane %v1665, 1
  %vm1741 = vcmask 1047559
  %v1742 = vsel %vm1741, %v1740, %v1739
  %v1743 = vrot.slane %v1667, 7
  %v1744 = vsel %vm1723, %v1743, %v1666
  %v1745 = vrot.slane %v1668, 6
  %v1746 = vsel %vm1726, %v1745, %v1744
  %v1747 = vrot.slane %v1669, 5
  %v1748 = vsel %vm1729, %v1747, %v1746
  %v1749 = vrot.slane %v1670, 4
  %v1750 = vsel %vm1732, %v1749, %v1748
  %v1751 = vrot.slane %v1671, 3
  %v1752 = vsel %vm1735, %v1751, %v1750
  %v1753 = vrot.slane %v1672, 2
  %v1754 = vsel %vm1738, %v1753, %v1752
  %v1755 = vrot.slane %v1673, 1
  %v1756 = vsel %vm1741, %v1755, %v1754
  %v1757 = vrot.slane %v1675, 7
  %v1758 = vsel %vm1723, %v1757, %v1674
  %v1759 = vrot.slane %v1676, 6
  %v1760 = vsel %vm1726, %v1759, %v1758
  %v1761 = vrot.slane %v1677, 5
  %v1762 = vsel %vm1729, %v1761, %v1760
  %v1763 = vrot.slane %v1678, 4
  %v1764 = vsel %vm1732, %v1763, %v1762
  %v1765 = vrot.slane %v1679, 3
  %v1766 = vsel %vm1735, %v1765, %v1764
  %v1767 = vrot.slane %v1680, 2
  %v1768 = vsel %vm1738, %v1767, %v1766
  %v1769 = vrot.slane %v1681, 1
  %v1770 = vsel %vm1741, %v1769, %v1768
  %v1771 = vrot.slane %v1683, 7
  %v1772 = vsel %vm1723, %v1771, %v1682
  %v1773 = vrot.slane %v1684, 6
  %v1774 = vsel %vm1726, %v1773, %v1772
  %v1775 = vrot.slane %v1685, 5
  %v1776 = vsel %vm1729, %v1775, %v1774
  %v1777 = vrot.slane %v1686, 4
  %v1778 = vsel %vm1732, %v1777, %v1776
  %v1779 = vrot.slane %v1687, 3
  %v1780 = vsel %vm1735, %v1779, %v1778
  %v1781 = vrot.slane %v1688, 2
  %v1782 = vsel %vm1738, %v1781, %v1780
  %v1783 = vrot.slane %v1689, 1
  %v1784 = vsel %vm1741, %v1783, %v1782
  %1789 = vst.msk [vmem:[%s5] sm:$0xff] %vm1044, %v1742
  %1790 = vst.msk [vmem:[%s5 + $0x8] sm:$0xff] %vm1044, %v1756
  %1791 = vst.msk [vmem:[%s5 + $0x10] sm:$0xff] %vm1044, %v1770
  %1792 = vst.msk [vmem:[%s5 + $0x18] sm:$0xff] %vm1044, %v1784
  // Predicated region
  $region22: #{hyper_network_fc_forward.7} parent=0 // pred_check
    _
  $region23: #{hyper_network_fc_forward.7} parent=0 // pred_check_branch
    %1794 = sbr.rel (0) target = $region25
  $region24: #{hyper_network_fc_forward.7} parent=0 // pred_region
    _
  $region25: #{hyper_network_fc_forward.7} parent=0 // pred_fallthru
    _
  // Predicated region
  $region26: #{hyper_network_fc_forward.7} parent=0 // pred_check
    _
  $region27: #{hyper_network_fc_forward.7} parent=0 // pred_check_branch
    %1796 = sbr.rel (0) target = $region29
  $region28: #{hyper_network_fc_forward.7} parent=0 // pred_region
    _
  $region29: #{hyper_network_fc_forward.7} parent=0 // pred_fallthru
    _

</llo_original>
